<compile_context>
chip_gen: v7x
topology: tpu7x:2x2x1
jax: 0.10.0
libtpu: 0.0.40
codegen_flags: <defaults>
</compile_context>

<pallas_src>
import functools

import jax
import jax.numpy as jnp
from jax import lax
from jax.experimental import pallas as pl
from jax.experimental.pallas import tpu as pltpu


def cfn_cell_kernel(xw_ref, wfT_ref, bf_ref, gamma_ref, beta_ref, out_ref,
                    *, kernel_size, eps, mxu_dtype):
    """One CFN update for one (batch, row-tile) grid cell, channel-major.

    xw_ref    : (1, 1, C, tile_h+2p, W+2p)  replicate-padded state window (incl. halo)
    wfT_ref   : (2C, K*K*C)                 fused conv weights, rows = [cand | gate]
    bf_ref    : (2C, 1)                     fused conv bias
    gamma_ref : (2C, 1)                     fused LayerNorm gamma
    beta_ref  : (2C, 1)                     fused LayerNorm beta
    out_ref   : (1, C, tile_h*W)            next state block (channel-major, lane-dense)
    """
    K = kernel_size
    p = K // 2
    _, _, C, Hp, Wp = xw_ref.shape
    th = Hp - 2 * p          # output rows produced by this tile
    W = Wp - 2 * p           # output width
    N = th * W               # pixels in this tile (lane dim; multiple of 128 by construction)

    # Load the padded window once (f32 elementwise path).
    xw = xw_ref[0, 0].astype(jnp.float32)                      # (C, Hp, Wp)

    # im2col built once: K*K shifted (C, th, W) taps stacked along sublanes,
    # flattened to (K*K*C, N), cast to the MXU dtype in a single cast.
    taps = [xw[:, kh:kh + th, kw:kw + W]
            for kh in range(K) for kw in range(K)]             # K*K x (C, th, W)
    patches = jnp.concatenate(taps, axis=0)                    # (K*K*C, th, W)
    patches = patches.reshape(K * K * C, N).astype(mxu_dtype)  # (K*K*C, N)

    # Single fused MXU matmul for candidate + gate branches, f32 accumulation.
    acc = jnp.dot(wfT_ref[...], patches,
                  preferred_element_type=jnp.float32)          # (2C, N)
    acc = acc + bf_ref[...].astype(jnp.float32)                # (2C, 1) broadcast over lanes

    gamma = gamma_ref[...].astype(jnp.float32)                 # (2C, 1)
    beta = beta_ref[...].astype(jnp.float32)                   # (2C, 1)

    def pixel_ln(y, g, b):
        # LayerNorm over channels, per pixel: channels on sublanes -> sublane reduce.
        mu = jnp.mean(y, axis=0, keepdims=True)                # (1, N)
        yc = y - mu
        var = jnp.mean(yc * yc, axis=0, keepdims=True)
        return yc * lax.rsqrt(var + eps) * g + b

    cand = jnp.tanh(pixel_ln(acc[:C, :], gamma[:C], beta[:C]))         # (C, N)
    gate = jax.nn.sigmoid(pixel_ln(acc[C:, :], gamma[C:], beta[C:]))   # (C, N)

    # Current state = centre tap of the same window (no second HBM read).
    h = xw[:, p:p + th, p:p + W].reshape(C, N)                 # (C, N)

    # Lane-dense store, already channel-major: no transpose needed.
    out_ref[0] = (gate * h + (1.0 - gate) * cand).astype(out_ref.dtype)


def _estimate_vmem_bytes(tile_h, W, C, K, p, state_bytes, mxu_bytes):
    """Rough per-grid-step VMEM working set (double-buffered blocks + scratch)."""
    Hp, Wp = tile_h + 2 * p, W + 2 * p
    N = tile_h * W
    window = C * Hp * Wp * state_bytes               # input block
    outblk = C * N * state_bytes                     # output block
    im2col = K * K * C * N * (4 + mxu_bytes)         # f32 build + mxu-dtype cast
    interm = (2 * C * 4 + 6 * C * 4) * N             # acc + LN/blend temporaries (f32)
    return 2 * (window + outblk) + im2col + interm   # in/out blocks are double-buffered


def _pick_tile_rows(H, W, C, K, p, state_bytes, mxu_bytes, budget, min_row_tiles):
    """Largest Mosaic-legal row tile that fits the VMEM budget.

    Legal output blocks have last dim tile_h*W either a multiple of 128 (lane-dense,
    unmasked stores) or the full H*W extent.  min_row_tiles > 1 is only used when the
    batch dimension alone cannot feed both v7x TensorCores.
    """
    divisors = [d for d in range(1, H + 1) if H % d == 0]
    legal = [d for d in divisors if (d * W) % 128 == 0 or d == H]
    fits = [d for d in legal
            if _estimate_vmem_bytes(d, W, C, K, p, state_bytes, mxu_bytes) <= budget]
    if fits:
        split = [d for d in fits if H // d >= min_row_tiles]
        return max(split) if split else max(fits)
    # Nothing fits the budget: take the smallest legal tile (correctness first;
    # vmem_limit_bytes below is sized from the actual pick).
    return min(legal)


def cfn_cell_forward(H_nchw, params, *, kernel_size=3, eps=1e-5,
                     mxu_dtype=jnp.bfloat16,
                     vmem_budget_bytes=20 * 1024 * 1024,
                     tile_rows=None):
    """CFNCell forward: NCHW in / NCHW out, matching the PyTorch module.

    vmem_budget_bytes caps the per-grid-step working set.  The default (~20 MiB)
    is sized conservatively for v7x (64 MiB VMEM/TC); on v5e/v6e (128 MiB) it can
    be raised to amortize per-step overhead further.  mxu_dtype=bf16 is the fast
    path on v6e/v7x (f32 accumulation); pass jnp.float32 for bit-faithful math.
    tile_rows (optional) overrides the automatic row-tile choice.
    """
    B, C, Hh, Ww = H_nchw.shape
    K = kernel_size
    p = K // 2
    state_bytes = jnp.dtype(H_nchw.dtype).itemsize
    mxu_bytes = jnp.dtype(mxu_dtype).itemsize

    if tile_rows is None:
        min_row_tiles = 1 if B >= 2 else 2     # keep >=2 parallel grid steps for v7x
        tile_h = _pick_tile_rows(Hh, Ww, C, K, p, state_bytes, mxu_bytes,
                                 vmem_budget_bytes, min_row_tiles)
    else:
        tile_h = int(tile_rows)
        assert Hh % tile_h == 0 and ((tile_h * Ww) % 128 == 0 or tile_h == Hh), \
            "tile_rows must divide H and give a lane-dense (or full) output block"
    T = Hh // tile_h
    Hp, Wp = tile_h + 2 * p, Ww + 2 * p

    # Replicate ('edge') spatial padding, kept channel-major (NCHW): no transposes.
    xpad = jnp.pad(H_nchw, ((0, 0), (0, 0), (p, p), (p, p)), mode='edge')  # (B,C,H+2p,W+2p)

    if T == 1:
        # Common path: the kernel block is the whole padded image — free reshape,
        # no HBM window duplication.
        xwin = xpad.reshape(B, 1, C, Hp, Wp)
    else:
        # Large-image fallback: overlapping row windows duplicate only 2p halo rows
        # per tile (negligible for the large tile_h this path implies).
        xwin = jnp.stack(
            [lax.dynamic_slice_in_dim(xpad, t * tile_h, Hp, axis=2) for t in range(T)],
            axis=1)                                                        # (B,T,C,Hp,Wp)

    # Torch conv weights (Cout, Cin, K, K) -> (Cout, K*K*Cin), fused [cand | gate] rows.
    def flatten_taps(w):
        return jnp.transpose(w, (0, 2, 3, 1)).reshape(C, K * K * C)

    wfT = jnp.concatenate([flatten_taps(params['conv_u_w']),
                           flatten_taps(params['conv_g_w'])], axis=0)      # (2C, K*K*C)
    wfT = wfT.astype(mxu_dtype)
    bf = jnp.concatenate([params['conv_u_b'], params['conv_g_b']]
                         ).reshape(2 * C, 1).astype(jnp.float32)
    gamma = jnp.concatenate([params['ln_u_gamma'], params['ln_g_gamma']]
                            ).reshape(2 * C, 1).astype(jnp.float32)
    beta = jnp.concatenate([params['ln_u_beta'], params['ln_g_beta']]
                           ).reshape(2 * C, 1).astype(jnp.float32)

    kernel = functools.partial(cfn_cell_kernel, kernel_size=K, eps=eps,
                               mxu_dtype=mxu_dtype)

    # VMEM limit: headroom over the estimated working set, capped at 48 MiB so the
    # same setting is safe on v7x (64 MiB/TC).  On v6e this could go up to ~100 MiB
    # together with a larger vmem_budget_bytes.
    est = _estimate_vmem_bytes(tile_h, Ww, C, K, p, state_bytes, mxu_bytes)
    vmem_limit = int(min(48 * 1024 * 1024, max(32 * 1024 * 1024, 2 * est)))

    out_flat = pl.pallas_call(
        kernel,
        out_shape=jax.ShapeDtypeStruct((B, C, Hh * Ww), H_nchw.dtype),
        grid=(B, T),
        in_specs=[
            pl.BlockSpec((1, 1, C, Hp, Wp), lambda b, t: (b, t, 0, 0, 0)),
            pl.BlockSpec((2 * C, K * K * C), lambda b, t: (0, 0)),
            pl.BlockSpec((2 * C, 1), lambda b, t: (0, 0)),
            pl.BlockSpec((2 * C, 1), lambda b, t: (0, 0)),
            pl.BlockSpec((2 * C, 1), lambda b, t: (0, 0)),
        ],
        out_specs=pl.BlockSpec((1, C, tile_h * Ww), lambda b, t: (b, 0, t)),
        compiler_params=pltpu.CompilerParams(
            dimension_semantics=("parallel", "parallel"),
            vmem_limit_bytes=vmem_limit),
    )(xwin, wfT, bf, gamma, beta)

    # (B, C, H*W) -> (B, C, H, W): free reshape (contiguous split of the last dim).
    return out_flat.reshape(B, C, Hh, Ww)


def make_params(key, channels, kernel_size):
    """Deterministic parameter init mirroring CFNCell._reset_parameters()."""
    C, K = channels, kernel_size
    k_u, k_g = jax.random.split(key)
    fan_in = C * K * K
    std_u = (5.0 / 3.0) / jnp.sqrt(fan_in)   # kaiming_normal, nonlinearity='tanh'
    std_g = 1.0 / jnp.sqrt(fan_in)           # kaiming_normal, nonlinearity='sigmoid'
    return {
        'conv_u_w': (jax.random.normal(k_u, (C, C, K, K), jnp.float32) * std_u),
        'conv_u_b': jnp.zeros((C,), jnp.float32),
        'conv_g_w': (jax.random.normal(k_g, (C, C, K, K), jnp.float32) * std_g),
        'conv_g_b': jnp.full((C,), 2.0, jnp.float32),   # gate_bias_init = 2.0
        'ln_u_gamma': jnp.ones((C,), jnp.float32),
        'ln_u_beta': jnp.zeros((C,), jnp.float32),
        'ln_g_gamma': jnp.ones((C,), jnp.float32),
        'ln_g_beta': jnp.zeros((C,), jnp.float32),
    }


def cfn_cell_reference(H_nchw, params, *, kernel_size=3, eps=1e-5):
    """Pure-JAX reference (lax.conv) for correctness checking."""
    B, C, Hh, Ww = H_nchw.shape
    K = kernel_size
    p = K // 2
    x = jnp.transpose(H_nchw, (0, 2, 3, 1))
    xpad = jnp.pad(x, ((0, 0), (p, p), (p, p), (0, 0)), mode='edge')

    def conv(w, b):
        w_hwio = jnp.transpose(w, (2, 3, 1, 0))
        y = lax.conv_general_dilated(
            xpad, w_hwio, window_strides=(1, 1), padding='VALID',
            dimension_numbers=('NHWC', 'HWIO', 'NHWC'))
        return y + b

    def ln(y, gamma, beta):
        mu = jnp.mean(y, axis=-1, keepdims=True)
        var = jnp.mean((y - mu) ** 2, axis=-1, keepdims=True)
        return (y - mu) * lax.rsqrt(var + eps) * gamma + beta

    cand = jnp.tanh(ln(conv(params['conv_u_w'], params['conv_u_b']),
                       params['ln_u_gamma'], params['ln_u_beta']))
    gate = jax.nn.sigmoid(ln(conv(params['conv_g_w'], params['conv_g_b']),
                             params['ln_g_gamma'], params['ln_g_beta']))
    out = gate * x + (1.0 - gate) * cand
    return jnp.transpose(out, (0, 3, 1, 2))


if __name__ == "__main__":
    B, C, HH, WW, K = 2, 8, 16, 16, 3
    key = jax.random.PRNGKey(0)
    k_h, k_p = jax.random.split(key)

    H_state = jax.random.normal(k_h, (B, C, HH, WW), jnp.float32)
    params = make_params(k_p, C, K)

    ref = jax.block_until_ready(cfn_cell_reference(H_state, params, kernel_size=K))

    # Exact-precision path (f32 MXU operands), whole-image tiles: grid = (B, 1).
    out_f32 = jax.block_until_ready(
        cfn_cell_forward(H_state, params, kernel_size=K, mxu_dtype=jnp.float32))
    assert out_f32.shape == (B, C, HH, WW)
    err_f32 = float(jnp.max(jnp.abs(out_f32 - ref)))
    if err_f32 > 1e-4:
        raise AssertionError(f"f32-MXU path mismatch vs reference: max abs err = {err_f32}")

    # Forced row tiling (grid = (B, 2)) to exercise the halo-window fallback path.
    out_tiled = jax.block_until_ready(
        cfn_cell_forward(H_state, params, kernel_size=K, mxu_dtype=jnp.float32,
                         tile_rows=8))
    err_tiled = float(jnp.max(jnp.abs(out_tiled - ref)))
    if err_tiled > 1e-4:
        raise AssertionError(f"tiled f32 path mismatch vs reference: max abs err = {err_tiled}")

    # Fast path (bf16 MXU operands, f32 accumulation) — recommended on v6e/v7x.
    out_bf16 = jax.block_until_ready(
        cfn_cell_forward(H_state, params, kernel_size=K, mxu_dtype=jnp.bfloat16))
    err_bf16 = float(jnp.max(jnp.abs(out_bf16 - ref)))
    if err_bf16 > 1e-1:
        raise AssertionError(f"bf16-MXU path mismatch vs reference: max abs err = {err_bf16}")

    print("KERNEL_OK")
</pallas_src>

<mosaic_0001>
module attributes {stable_mosaic.version = 11 : i64} {
  func.func @cfn_cell_kernel(%arg0: i32, %arg1: i32, %arg2: memref<1x1x8x18x18xf32, #tpu.memory_space<vmem>>, %arg3: memref<16x72xf32, #tpu.memory_space<vmem>>, %arg4: memref<16x1xf32, #tpu.memory_space<vmem>>, %arg5: memref<16x1xf32, #tpu.memory_space<vmem>>, %arg6: memref<16x1xf32, #tpu.memory_space<vmem>>, %arg7: memref<1x8x256xf32, #tpu.memory_space<vmem>>) attributes {dimension_semantics = [#tpu.dimension_semantics<parallel>, #tpu.dimension_semantics<parallel>], iteration_bounds = array<i64: 2, 1>, scalar_prefetch = 0 : i64, scratch_operands = 0 : i64, tpu.core_type = #tpu.core_type<tc>, window_params = [{transform_indices = @transform_0, window_bounds = array<i64: 1, 1, 8, 18, 18>}, {pipeline_mode = #tpu.pipeline_mode<synchronous>, transform_indices = @transform_1, window_bounds = array<i64: 16, 72>}, {pipeline_mode = #tpu.pipeline_mode<synchronous>, transform_indices = @transform_2, window_bounds = array<i64: 16, 1>}, {pipeline_mode = #tpu.pipeline_mode<synchronous>, transform_indices = @transform_3, window_bounds = array<i64: 16, 1>}, {pipeline_mode = #tpu.pipeline_mode<synchronous>, transform_indices = @transform_4, window_bounds = array<i64: 16, 1>}, {transform_indices = @transform_5, window_bounds = array<i64: 1, 8, 256>}]} {
    %c0 = arith.constant 0 : index
    %c0_0 = arith.constant 0 : index
    %c0_1 = arith.constant 0 : index
    %c0_2 = arith.constant 0 : index
    %c0_3 = arith.constant 0 : index
    %0 = vector.load %arg2[%c0, %c0_0, %c0_1, %c0_2, %c0_3] : memref<1x1x8x18x18xf32, #tpu.memory_space<vmem>>, vector<1x1x8x18x18xf32>
    %1 = vector.shape_cast %0 : vector<1x1x8x18x18xf32> to vector<8x18x18xf32>
    %2 = vector.extract_strided_slice %1 {offsets = [0, 0, 0], sizes = [8, 16, 16], strides = [1, 1, 1]} : vector<8x18x18xf32> to vector<8x16x16xf32>
    %3 = vector.extract_strided_slice %1 {offsets = [0, 0, 1], sizes = [8, 16, 16], strides = [1, 1, 1]} : vector<8x18x18xf32> to vector<8x16x16xf32>
    %4 = vector.extract_strided_slice %1 {offsets = [0, 0, 2], sizes = [8, 16, 16], strides = [1, 1, 1]} : vector<8x18x18xf32> to vector<8x16x16xf32>
    %5 = vector.extract_strided_slice %1 {offsets = [0, 1, 0], sizes = [8, 16, 16], strides = [1, 1, 1]} : vector<8x18x18xf32> to vector<8x16x16xf32>
    %6 = vector.extract_strided_slice %1 {offsets = [0, 1, 1], sizes = [8, 16, 16], strides = [1, 1, 1]} : vector<8x18x18xf32> to vector<8x16x16xf32>
    %7 = vector.extract_strided_slice %1 {offsets = [0, 1, 2], sizes = [8, 16, 16], strides = [1, 1, 1]} : vector<8x18x18xf32> to vector<8x16x16xf32>
    %8 = vector.extract_strided_slice %1 {offsets = [0, 2, 0], sizes = [8, 16, 16], strides = [1, 1, 1]} : vector<8x18x18xf32> to vector<8x16x16xf32>
    %9 = vector.extract_strided_slice %1 {offsets = [0, 2, 1], sizes = [8, 16, 16], strides = [1, 1, 1]} : vector<8x18x18xf32> to vector<8x16x16xf32>
    %10 = vector.extract_strided_slice %1 {offsets = [0, 2, 2], sizes = [8, 16, 16], strides = [1, 1, 1]} : vector<8x18x18xf32> to vector<8x16x16xf32>
    %11 = tpu.concatenate %2, %3, %4, %5, %6, %7, %8, %9, %10 in 0 : vector<8x16x16xf32>, vector<8x16x16xf32>, vector<8x16x16xf32>, vector<8x16x16xf32>, vector<8x16x16xf32>, vector<8x16x16xf32>, vector<8x16x16xf32>, vector<8x16x16xf32>, vector<8x16x16xf32> -> vector<72x16x16xf32>
    %12 = vector.shape_cast %11 : vector<72x16x16xf32> to vector<72x256xf32>
    %c0_4 = arith.constant 0 : index
    %c0_5 = arith.constant 0 : index
    %13 = vector.load %arg3[%c0_4, %c0_5] : memref<16x72xf32, #tpu.memory_space<vmem>>, vector<16x72xf32>
    %cst = arith.constant dense<0.000000e+00> : vector<16x256xf32>
    %14 = tpu.matmul %13, %12, %cst {dimension_numbers = #tpu.dot_dimension_numbers<[1], [0], [0], [1], [0, 0, 1, 1], [], []>} : vector<16x72xf32>, vector<72x256xf32>, vector<16x256xf32> -> vector<16x256xf32>
    %c0_6 = arith.constant 0 : index
    %c0_7 = arith.constant 0 : index
    %15 = vector.load %arg4[%c0_6, %c0_7] : memref<16x1xf32, #tpu.memory_space<vmem>>, vector<16x1xf32>
    %16 = vector.broadcast %15 : vector<16x1xf32> to vector<16x256xf32>
    %17 = arith.addf %14, %16 : vector<16x256xf32>
    %c0_8 = arith.constant 0 : index
    %c0_9 = arith.constant 0 : index
    %18 = vector.load %arg5[%c0_8, %c0_9] : memref<16x1xf32, #tpu.memory_space<vmem>>, vector<16x1xf32>
    %c0_10 = arith.constant 0 : index
    %c0_11 = arith.constant 0 : index
    %19 = vector.load %arg6[%c0_10, %c0_11] : memref<16x1xf32, #tpu.memory_space<vmem>>, vector<16x1xf32>
    %20 = vector.extract_strided_slice %17 {offsets = [0, 0], sizes = [8, 256], strides = [1, 1]} : vector<16x256xf32> to vector<8x256xf32>
    %21 = vector.extract_strided_slice %18 {offsets = [0, 0], sizes = [8, 1], strides = [1, 1]} : vector<16x1xf32> to vector<8x1xf32>
    %22 = vector.extract_strided_slice %19 {offsets = [0, 0], sizes = [8, 1], strides = [1, 1]} : vector<16x1xf32> to vector<8x1xf32>
    %cst_12 = arith.constant dense<0.000000e+00> : vector<256xf32>
    %23 = vector.multi_reduction <add>, %20, %cst_12 [0] : vector<8x256xf32> to vector<256xf32>
    %24 = vector.shape_cast %23 : vector<256xf32> to vector<1x256xf32>
    %cst_13 = arith.constant 8.000000e+00 : f32
    %25 = vector.broadcast %cst_13 : f32 to vector<1x256xf32>
    %26 = arith.divf %24, %25 : vector<1x256xf32>
    %27 = vector.broadcast %26 : vector<1x256xf32> to vector<8x256xf32>
    %28 = arith.subf %20, %27 : vector<8x256xf32>
    %29 = arith.mulf %28, %28 : vector<8x256xf32>
    %cst_14 = arith.constant dense<0.000000e+00> : vector<256xf32>
    %30 = vector.multi_reduction <add>, %29, %cst_14 [0] : vector<8x256xf32> to vector<256xf32>
    %31 = vector.shape_cast %30 : vector<256xf32> to vector<1x256xf32>
    %cst_15 = arith.constant 8.000000e+00 : f32
    %32 = vector.broadcast %cst_15 : f32 to vector<1x256xf32>
    %33 = arith.divf %31, %32 : vector<1x256xf32>
    %cst_16 = arith.constant 9.99999974E-6 : f32
    %34 = vector.broadcast %cst_16 : f32 to vector<1x256xf32>
    %35 = arith.addf %33, %34 : vector<1x256xf32>
    %36 = math.rsqrt %35 : vector<1x256xf32>
    %37 = vector.broadcast %36 : vector<1x256xf32> to vector<8x256xf32>
    %38 = arith.mulf %28, %37 : vector<8x256xf32>
    %39 = vector.broadcast %21 : vector<8x1xf32> to vector<8x256xf32>
    %40 = arith.mulf %38, %39 : vector<8x256xf32>
    %41 = vector.broadcast %22 : vector<8x1xf32> to vector<8x256xf32>
    %42 = arith.addf %40, %41 : vector<8x256xf32>
    %43 = math.tanh %42 : vector<8x256xf32>
    %44 = vector.extract_strided_slice %17 {offsets = [8, 0], sizes = [8, 256], strides = [1, 1]} : vector<16x256xf32> to vector<8x256xf32>
    %45 = vector.extract_strided_slice %18 {offsets = [8, 0], sizes = [8, 1], strides = [1, 1]} : vector<16x1xf32> to vector<8x1xf32>
    %46 = vector.extract_strided_slice %19 {offsets = [8, 0], sizes = [8, 1], strides = [1, 1]} : vector<16x1xf32> to vector<8x1xf32>
    %cst_17 = arith.constant dense<0.000000e+00> : vector<256xf32>
    %47 = vector.multi_reduction <add>, %44, %cst_17 [0] : vector<8x256xf32> to vector<256xf32>
    %48 = vector.shape_cast %47 : vector<256xf32> to vector<1x256xf32>
    %cst_18 = arith.constant 8.000000e+00 : f32
    %49 = vector.broadcast %cst_18 : f32 to vector<1x256xf32>
    %50 = arith.divf %48, %49 : vector<1x256xf32>
    %51 = vector.broadcast %50 : vector<1x256xf32> to vector<8x256xf32>
    %52 = arith.subf %44, %51 : vector<8x256xf32>
    %53 = arith.mulf %52, %52 : vector<8x256xf32>
    %cst_19 = arith.constant dense<0.000000e+00> : vector<256xf32>
    %54 = vector.multi_reduction <add>, %53, %cst_19 [0] : vector<8x256xf32> to vector<256xf32>
    %55 = vector.shape_cast %54 : vector<256xf32> to vector<1x256xf32>
    %cst_20 = arith.constant 8.000000e+00 : f32
    %56 = vector.broadcast %cst_20 : f32 to vector<1x256xf32>
    %57 = arith.divf %55, %56 : vector<1x256xf32>
    %cst_21 = arith.constant 9.99999974E-6 : f32
    %58 = vector.broadcast %cst_21 : f32 to vector<1x256xf32>
    %59 = arith.addf %57, %58 : vector<1x256xf32>
    %60 = math.rsqrt %59 : vector<1x256xf32>
    %61 = vector.broadcast %60 : vector<1x256xf32> to vector<8x256xf32>
    %62 = arith.mulf %52, %61 : vector<8x256xf32>
    %63 = vector.broadcast %45 : vector<8x1xf32> to vector<8x256xf32>
    %64 = arith.mulf %62, %63 : vector<8x256xf32>
    %65 = vector.broadcast %46 : vector<8x1xf32> to vector<8x256xf32>
    %66 = arith.addf %64, %65 : vector<8x256xf32>
    %67 = arith.negf %66 : vector<8x256xf32>
    %68 = math.exp %67 : vector<8x256xf32>
    %cst_22 = arith.constant 1.000000e+00 : f32
    %69 = vector.broadcast %cst_22 : f32 to vector<8x256xf32>
    %70 = arith.addf %69, %68 : vector<8x256xf32>
    %71 = arith.divf %69, %70 : vector<8x256xf32>
    %72 = vector.extract_strided_slice %1 {offsets = [0, 1, 1], sizes = [8, 16, 16], strides = [1, 1, 1]} : vector<8x18x18xf32> to vector<8x16x16xf32>
    %73 = vector.shape_cast %72 : vector<8x16x16xf32> to vector<8x256xf32>
    %74 = arith.mulf %71, %73 : vector<8x256xf32>
    %cst_23 = arith.constant 1.000000e+00 : f32
    %75 = vector.broadcast %cst_23 : f32 to vector<8x256xf32>
    %76 = arith.subf %75, %71 : vector<8x256xf32>
    %77 = arith.mulf %76, %43 : vector<8x256xf32>
    %78 = arith.addf %74, %77 : vector<8x256xf32>
    %c0_24 = arith.constant 0 : index
    %c0_25 = arith.constant 0 : index
    %c0_26 = arith.constant 0 : index
    %79 = vector.load %arg7[%c0_24, %c0_25, %c0_26] : memref<1x8x256xf32, #tpu.memory_space<vmem>>, vector<1x8x256xf32>
    %80 = vector.shape_cast %79 : vector<1x8x256xf32> to vector<8x256xf32>
    %81 = vector.shape_cast %78 : vector<8x256xf32> to vector<1x8x256xf32>
    tpu.vector_store %arg7[%c0_24, %c0_25, %c0_26], %81 {strides = array<i32>} : memref<1x8x256xf32, #tpu.memory_space<vmem>>, vector<1x8x256xf32>,
    return
  }
  func.func @transform_0(%arg0: i32, %arg1: i32) -> (i32, i32, i32, i32, i32) {
    %c0_i32 = arith.constant 0 : i32
    %c0_i32_0 = arith.constant 0 : i32
    %c0_i32_1 = arith.constant 0 : i32
    %c0_i32_2 = arith.constant 0 : i32
    return %arg0, %arg1, %c0_i32, %c0_i32_0, %c0_i32_1 : i32, i32, i32, i32, i32
  }
  func.func @transform_1(%arg0: i32, %arg1: i32) -> (i32, i32) {
    %c0_i32 = arith.constant 0 : i32
    %c0_i32_0 = arith.constant 0 : i32
    %c0_i32_1 = arith.constant 0 : i32
    return %c0_i32, %c0_i32_0 : i32, i32
  }
  func.func @transform_2(%arg0: i32, %arg1: i32) -> (i32, i32) {
    %c0_i32 = arith.constant 0 : i32
    %c0_i32_0 = arith.constant 0 : i32
    %c0_i32_1 = arith.constant 0 : i32
    return %c0_i32, %c0_i32_0 : i32, i32
  }
  func.func @transform_3(%arg0: i32, %arg1: i32) -> (i32, i32) {
    %c0_i32 = arith.constant 0 : i32
    %c0_i32_0 = arith.constant 0 : i32
    %c0_i32_1 = arith.constant 0 : i32
    return %c0_i32, %c0_i32_0 : i32, i32
  }
  func.func @transform_4(%arg0: i32, %arg1: i32) -> (i32, i32) {
    %c0_i32 = arith.constant 0 : i32
    %c0_i32_0 = arith.constant 0 : i32
    %c0_i32_1 = arith.constant 0 : i32
    return %c0_i32, %c0_i32_0 : i32, i32
  }
  func.func @transform_5(%arg0: i32, %arg1: i32) -> (i32, i32, i32) {
    %c0_i32 = arith.constant 0 : i32
    %c0_i32_0 = arith.constant 0 : i32
    return %arg0, %c0_i32, %arg1 : i32, i32, i32
  }
}

</mosaic_0001>

<llo_original>
// kernel: tpu_custom_call.1
$region0: #{tpu_custom_call.1}
  #allocation0 [shape = 'u32[]', space=smem, size = 0x4, offset = 0x4, fixed_abs, tag = 'smem constant byte address 0x4 - core index']
  #allocation1 [shape = 'u32[144,128]{1,0:T(1,128)}', space=vmem, size = 0x12000, scoped, tag = 'internal scratch']
  %s0 = inlined_call_operand.vmem [shape: f32[2,1,8,18,18], index: 0, kind: input, shape index: {}]
  %s1 = inlined_call_operand.vmem [shape: f32[16,72], index: 1, kind: input, shape index: {}]
  %s2 = inlined_call_operand.vmem [shape: f32[16,1], index: 2, kind: input, shape index: {}]
  %s3 = inlined_call_operand.vmem [shape: f32[16,1], index: 3, kind: input, shape index: {}]
  %s4 = inlined_call_operand.vmem [shape: f32[16,1], index: 4, kind: input, shape index: {}]
  %s5 = inlined_call_operand.hbm [shape: f32[2,8,256], index: 5, kind: output, shape index: {}]
  %s6 = sld [smem:[#allocation0]]
  $region53: #{tpu_custom_call.1} parent=0
    _
  %s8 = ssub.s32 1, %s6
  %s9 = scalar_select 0, %s8, %s6
  $region1: #{tpu_custom_call.1} parent=0
    #allocation2 [shape = 'u8[16384]{0}', space=vmem, size = 0x4000, scoped, tag = 'output window, operand 0']
    #allocation3 [shape = 's32[2]{0}', space=sflag, size = 0x8, scoped, tag = 'scoped memory for tpu_custom_call.1']
    %10 = vsyncpa [#allocation3], 0
    %s11 = scalar_lea.sflag [#allocation3], 1
    %12 = vsyncpa %s11, 0
    loop: start=0, step=1, limit=4
    $region2: #{tpu_custom_call.1} parent=1 // loop_pre_header
      _
    $region3: #{tpu_custom_call.1} parent=1 // loop_header
      %s14 = sphi 0, %s18
      %p15 = scmp.ge.s32.totalorder %s14, 4
      %s21 = sphi 0, %s33
      %s22 = sphi 0, %s29
      %s23 = sphi 0, %s21
      %s24 = sphi 0, %s22
      %s25 = sphi 0, %s23
      %s26 = sphi 0, %s24
      %s38 = sphi 0, %s40
      %s41 = sphi 0, %s38
      %s42 = sphi 0, %s41
      %s58 = sphi 0, %s42
      %s62 = sphi 0, %s62
      %s64 = sphi 0, %s62
      %s65 = sphi 0, %s64
      %s79 = sphi 0, %s65
      %s83 = sphi 0, %s83
      %s85 = sphi 0, %s83
      %s86 = sphi 0, %s85
      %s100 = sphi 0, %s86
      %s104 = sphi 0, %s104
      %s106 = sphi 0, %s104
      %s107 = sphi 0, %s106
      %s121 = sphi 0, %s107
      %s125 = sphi 0, %s125
      %s127 = sphi 0, %s125
      %s128 = sphi 0, %s127
      %s142 = sphi 0, %s128
      %s150 = sphi 0, %s152
      %s153 = sphi 0, %s150
      %s154 = sphi 0, %s153
      %s170 = sphi 0, %s154
    $region4: #{tpu_custom_call.1} parent=1 // loop_header_branch
      %17 = sbr.rel (%p15) target = $region8
    $region5: #{tpu_custom_call.1} parent=1 // loop_body
      %s19 = ssub.s32 %s14, 1
      %s20 = ssub.s32 %s14, 2
      %s27 = sadd.s32 1, %s22
      %p28 = scmp.ge.s32.totalorder %s27, 1
      %s29 = scalar_select %p28, 0, %s27
      %s30 = sadd.s32 1, %s21
      %s31 = scalar_select %p28, %s30, %s21
      %p32 = scmp.ge.s32.totalorder %s31, 2
      %s33 = scalar_select %p32, 0, %s31
      %s34 = ssub.s32 %s21, %s33
      %s35 = ssub.s32 %s22, %s29
      %s36 = sor.u32 %s34, %s35
      %p37 = scmp.eq.s32.totalorder %s36, 0
      %s39 = sadd.s32 %s38, 1
      %s40 = scalar_select %p37, %s38, %s39
      %p43 = pneg %p37
      %p44 = scmp.eq.s32.totalorder %s14, 1
      %p45 = por %p43, %p44
      %p46 = scmp.ne.s32.totalorder %s38, %s41
      %p47 = scmp.eq.s32.totalorder %s14, 0
      %p48 = por %p46, %p47
      %p49 = scmp.ne.s32.totalorder %s38, %s41
      %p50 = scmp.eq.s32.totalorder %s19, 1
      %p51 = por %p49, %p50
      %p52 = scmp.ne.s32.totalorder %s41, %s42
      %p53 = scmp.eq.s32.totalorder %s19, 0
      %p54 = por %p52, %p53
      %p55 = scmp.ne.s32.totalorder %s41, %s42
      %p56 = scmp.eq.s32.totalorder %s20, 1
      %p57 = por %p55, %p56
      %p59 = scmp.ne.s32.totalorder %s42, %s58
      %p60 = scmp.eq.s32.totalorder %s20, 0
      %p61 = por %p59, %p60
      %s63 = sadd.s32 %s62, 1
      %p66 = scmp.eq.s32.totalorder %s14, 1
      %p67 = scmp.ne.s32.totalorder %s62, %s64
      %p68 = scmp.eq.s32.totalorder %s14, 0
      %p69 = por %p67, %p68
      %p70 = scmp.ne.s32.totalorder %s62, %s64
      %p71 = scmp.eq.s32.totalorder %s19, 1
      %p72 = por %p70, %p71
      %p73 = scmp.ne.s32.totalorder %s64, %s65
      %p74 = scmp.eq.s32.totalorder %s19, 0
      %p75 = por %p73, %p74
      %p76 = scmp.ne.s32.totalorder %s64, %s65
      %p77 = scmp.eq.s32.totalorder %s20, 1
      %p78 = por %p76, %p77
      %p80 = scmp.ne.s32.totalorder %s65, %s79
      %p81 = scmp.eq.s32.totalorder %s20, 0
      %p82 = por %p80, %p81
      %s84 = sadd.s32 %s83, 1
      %p87 = scmp.eq.s32.totalorder %s14, 1
      %p88 = scmp.ne.s32.totalorder %s83, %s85
      %p89 = scmp.eq.s32.totalorder %s14, 0
      %p90 = por %p88, %p89
      %p91 = scmp.ne.s32.totalorder %s83, %s85
      %p92 = scmp.eq.s32.totalorder %s19, 1
      %p93 = por %p91, %p92
      %p94 = scmp.ne.s32.totalorder %s85, %s86
      %p95 = scmp.eq.s32.totalorder %s19, 0
      %p96 = por %p94, %p95
      %p97 = scmp.ne.s32.totalorder %s85, %s86
      %p98 = scmp.eq.s32.totalorder %s20, 1
      %p99 = por %p97, %p98
      %p101 = scmp.ne.s32.totalorder %s86, %s100
      %p102 = scmp.eq.s32.totalorder %s20, 0
      %p103 = por %p101, %p102
      %s105 = sadd.s32 %s104, 1
      %p108 = scmp.eq.s32.totalorder %s14, 1
      %p109 = scmp.ne.s32.totalorder %s104, %s106
      %p110 = scmp.eq.s32.totalorder %s14, 0
      %p111 = por %p109, %p110
      %p112 = scmp.ne.s32.totalorder %s104, %s106
      %p113 = scmp.eq.s32.totalorder %s19, 1
      %p114 = por %p112, %p113
      %p115 = scmp.ne.s32.totalorder %s106, %s107
      %p116 = scmp.eq.s32.totalorder %s19, 0
      %p117 = por %p115, %p116
      %p118 = scmp.ne.s32.totalorder %s106, %s107
      %p119 = scmp.eq.s32.totalorder %s20, 1
      %p120 = por %p118, %p119
      %p122 = scmp.ne.s32.totalorder %s107, %s121
      %p123 = scmp.eq.s32.totalorder %s20, 0
      %p124 = por %p122, %p123
      %s126 = sadd.s32 %s125, 1
      %p129 = scmp.eq.s32.totalorder %s14, 1
      %p130 = scmp.ne.s32.totalorder %s125, %s127
      %p131 = scmp.eq.s32.totalorder %s14, 0
      %p132 = por %p130, %p131
      %p133 = scmp.ne.s32.totalorder %s125, %s127
      %p134 = scmp.eq.s32.totalorder %s19, 1
      %p135 = por %p133, %p134
      %p136 = scmp.ne.s32.totalorder %s127, %s128
      %p137 = scmp.eq.s32.totalorder %s19, 0
      %p138 = por %p136, %p137
      %p139 = scmp.ne.s32.totalorder %s127, %s128
      %p140 = scmp.eq.s32.totalorder %s20, 1
      %p141 = por %p139, %p140
      %p143 = scmp.ne.s32.totalorder %s128, %s142
      %p144 = scmp.eq.s32.totalorder %s20, 0
      %p145 = por %p143, %p144
      %s146 = ssub.s32 %s21, %s33
      %s147 = ssub.s32 %s22, %s29
      %s148 = sor.u32 %s146, %s147
      %p149 = scmp.eq.s32.totalorder %s148, 0
      %s151 = sadd.s32 %s150, 1
      %s152 = scalar_select %p149, %s150, %s151
      %p155 = pneg %p149
      %p156 = scmp.eq.s32.totalorder %s14, 1
      %p157 = por %p155, %p156
      %p158 = scmp.ne.s32.totalorder %s150, %s153
      %p159 = scmp.eq.s32.totalorder %s14, 0
      %p160 = por %p158, %p159
      %p161 = scmp.ne.s32.totalorder %s150, %s153
      %p162 = scmp.eq.s32.totalorder %s19, 1
      %p163 = por %p161, %p162
      %p164 = scmp.ne.s32.totalorder %s153, %s154
      %p165 = scmp.eq.s32.totalorder %s19, 0
      %p166 = por %p164, %p165
      %p167 = scmp.ne.s32.totalorder %s153, %s154
      %p168 = scmp.eq.s32.totalorder %s20, 1
      %p169 = por %p167, %p168
      %p171 = scmp.ne.s32.totalorder %s154, %s170
      %p172 = scmp.eq.s32.totalorder %s20, 0
      %p173 = por %p171, %p172
      %p174 = scmp.le.s32.totalorder 1, %s14
      %p175 = scmp.lt.s32.totalorder %s14, 3
      %p176 = pnand %p174, %p175
      %p177 = pneg %p176
      // Predicated region
      $region9: #{tpu_custom_call.1} parent=5 // pred_check
        _
      $region10: #{tpu_custom_call.1} parent=5 // pred_check_branch
        %179 = sbr.rel (%p176) target = $region12
      $region11: #{tpu_custom_call.1} parent=5 // pred_region
        %s180 = ssub.s32 %s14, 1
        // Predicated region
        $region13: #{tpu_custom_call.1} parent=11 // pred_check
          %p181 = pneg %p75
        $region14: #{tpu_custom_call.1} parent=11 // pred_check_branch
          %183 = sbr.rel (%p181) target = $region16
        $region15: #{tpu_custom_call.1} parent=11 // pred_region
          _
        $region16: #{tpu_custom_call.1} parent=11 // pred_fallthru
          _
        // Predicated region
        $region17: #{tpu_custom_call.1} parent=11 // pred_check
          %p184 = pneg %p96
        $region18: #{tpu_custom_call.1} parent=11 // pred_check_branch
          %186 = sbr.rel (%p184) target = $region20
        $region19: #{tpu_custom_call.1} parent=11 // pred_region
          _
        $region20: #{tpu_custom_call.1} parent=11 // pred_fallthru
          _
        // Predicated region
        $region21: #{tpu_custom_call.1} parent=11 // pred_check
          %p187 = pneg %p117
        $region22: #{tpu_custom_call.1} parent=11 // pred_check_branch
          %189 = sbr.rel (%p187) target = $region24
        $region23: #{tpu_custom_call.1} parent=11 // pred_region
          _
        $region24: #{tpu_custom_call.1} parent=11 // pred_fallthru
          _
        // Predicated region
        $region25: #{tpu_custom_call.1} parent=11 // pred_check
          %p190 = pneg %p138
        $region26: #{tpu_custom_call.1} parent=11 // pred_check_branch
          %192 = sbr.rel (%p190) target = $region28
        $region27: #{tpu_custom_call.1} parent=11 // pred_region
          _
        $region28: #{tpu_custom_call.1} parent=11 // pred_fallthru
          _
      $region12: #{tpu_custom_call.1} parent=5 // pred_fallthru
        _
      %p193 = scmp.lt.s32.totalorder %s14, 2
      // Predicated region
      $region29: #{tpu_custom_call.1} parent=5 // pred_check
        %p194 = pneg %p193
      $region30: #{tpu_custom_call.1} parent=5 // pred_check_branch
        %196 = sbr.rel (%p194) target = $region32
      $region31: #{tpu_custom_call.1} parent=5 // pred_region
        // Predicated region
        $region33: #{tpu_custom_call.1} parent=31 // pred_check
          %p197 = pneg %p48
        $region34: #{tpu_custom_call.1} parent=31 // pred_check_branch
          %199 = sbr.rel (%p197) target = $region36
        $region35: #{tpu_custom_call.1} parent=31 // pred_region
          %p200 = scmp.lt.s32.totalorder %s21, 1
          %s201 = scalar_select %p200, %s21, 1
          %p202 = scmp.lt.s32.totalorder %s22, 0
          %s203 = scalar_select %p202, %s22, 0
          %s204 = smul.addr %s203, 24
          %s205 = smul.addr %s201, 24
          %s206 = sadd.s32 %s204, %s205
          %s207 = smul.addr %s206, 8
          %s208 = scalar_lea.vmem %s0, %s207
        $region36: #{tpu_custom_call.1} parent=31 // pred_fallthru
          _
      $region32: #{tpu_custom_call.1} parent=5 // pred_fallthru
        _
      %p209 = scmp.le.s32.totalorder 1, %s14
      %p210 = scmp.lt.s32.totalorder %s14, 3
      %p211 = pnand %p209, %p210
      %p212 = pneg %p211
      // Predicated region
      $region37: #{tpu_custom_call.1} parent=5 // pred_check
        _
      $region38: #{tpu_custom_call.1} parent=5 // pred_check_branch
        %214 = sbr.rel (%p211) target = $region40
      $region39: #{tpu_custom_call.1} parent=5 // pred_region
        %s215 = ssub.s32 %s14, 1
        %p216 = scmp.lt.s32.totalorder %s23, 1
        %s217 = scalar_select %p216, %s23, 1
        %p218 = scmp.lt.s32.totalorder %s24, 0
        %s219 = scalar_select %p218, %s24, 0
        %s220 = smul.addr %s219, 24
        %s221 = smul.addr %s217, 24
        %s222 = sadd.s32 %s220, %s221
        %s223 = smul.addr %s222, 8
        %s224 = scalar_lea.vmem %s0, %s223
        %p225 = pneg %p54
        %p226 = pneg %p51
        %p227 = pneg %p75
        %p228 = pneg %p72
        %p229 = pneg %p96
        %p230 = pneg %p93
        %p231 = pneg %p117
        %p232 = pneg %p114
        %p233 = pneg %p138
        %p234 = pneg %p135
        %p235 = pneg %p166
        %p236 = pneg %p163
        %s237 = sand.u32 %s153, 1
        %s238 = scalar_lea.sflag [#allocation3], %s237
        %s239 = sand.u32 %s153, 1
        %s240 = smul.addr %s239, 16
        %s241 = scalar_lea.vmem [#allocation2], %s240
        %p242 = scmp.lt.s32.totalorder %s23, 1
        %s243 = scalar_select %p242, %s23, 1
        %p244 = scmp.lt.s32.totalorder %s24, 0
        %s245 = scalar_select %p244, %s24, 0
        %s246 = smul.addr %s245, 24
        %s247 = smul.addr %s243, 24
        %s248 = sadd.s32 %s246, %s247
        %s249 = smul.addr %s248, 8
        %s250 = scalar_lea.vmem %s0, %s249
        %s251 = smul.u32 2, %s24
        %v252 = vld [vmem:[%s250] sm:$0xff]
        %v253 = vld [vmem:[%s250 + $0x8] sm:$0xff]
        %v254 = vld [vmem:[%s250 + $0x10] sm:$0x3]
        %v255 = vld [vmem:[%s250 + $0x18] sm:$0xff]
        %v256 = vld [vmem:[%s250 + $0x20] sm:$0xff]
        %v257 = vld [vmem:[%s250 + $0x28] sm:$0x3]
        %v258 = vld [vmem:[%s250 + $0x30] sm:$0xff]
        %v259 = vld [vmem:[%s250 + $0x38] sm:$0xff]
        %v260 = vld [vmem:[%s250 + $0x40] sm:$0x3]
        %v261 = vld [vmem:[%s250 + $0x48] sm:$0xff]
        %v262 = vld [vmem:[%s250 + $0x50] sm:$0xff]
        %v263 = vld [vmem:[%s250 + $0x58] sm:$0x3]
        %v264 = vld [vmem:[%s250 + $0x60] sm:$0xff]
        %v265 = vld [vmem:[%s250 + $0x68] sm:$0xff]
        %v266 = vld [vmem:[%s250 + $0x70] sm:$0x3]
        %v267 = vld [vmem:[%s250 + $0x78] sm:$0xff]
        %v268 = vld [vmem:[%s250 + $0x80] sm:$0xff]
        %v269 = vld [vmem:[%s250 + $0x88] sm:$0x3]
        %v270 = vld [vmem:[%s250 + $0x90] sm:$0xff]
        %v271 = vld [vmem:[%s250 + $0x98] sm:$0xff]
        %v272 = vld [vmem:[%s250 + $0xa0] sm:$0x3]
        %v273 = vld [vmem:[%s250 + $0xa8] sm:$0xff]
        %v274 = vld [vmem:[%s250 + $0xb0] sm:$0xff]
        %v275 = vld [vmem:[%s250 + $0xb8] sm:$0x3]
        %292 = vrot.lane.b32.xlu0 %v252, 127
        %v293 = vpop.permute.xlu0 %292
        %294 = vrot.lane.b32.xlu0 %v253, 127
        %v295 = vpop.permute.xlu0 %294
        %296 = vrot.lane.b32.xlu0 %v255, 127
        %v297 = vpop.permute.xlu0 %296
        %298 = vrot.lane.b32.xlu0 %v256, 127
        %v299 = vpop.permute.xlu0 %298
        %300 = vrot.lane.b32.xlu0 %v258, 127
        %v301 = vpop.permute.xlu0 %300
        %302 = vrot.lane.b32.xlu0 %v259, 127
        %v303 = vpop.permute.xlu0 %302
        %304 = vrot.lane.b32.xlu0 %v261, 127
        %v305 = vpop.permute.xlu0 %304
        %306 = vrot.lane.b32.xlu0 %v262, 127
        %v307 = vpop.permute.xlu0 %306
        %308 = vrot.lane.b32.xlu0 %v264, 127
        %v309 = vpop.permute.xlu0 %308
        %310 = vrot.lane.b32.xlu0 %v265, 127
        %v311 = vpop.permute.xlu0 %310
        %312 = vrot.lane.b32.xlu0 %v267, 127
        %v313 = vpop.permute.xlu0 %312
        %314 = vrot.lane.b32.xlu0 %v268, 127
        %v315 = vpop.permute.xlu0 %314
        %316 = vrot.lane.b32.xlu0 %v270, 127
        %v317 = vpop.permute.xlu0 %316
        %318 = vrot.lane.b32.xlu0 %v271, 127
        %v319 = vpop.permute.xlu0 %318
        %320 = vrot.lane.b32.xlu0 %v273, 127
        %v321 = vpop.permute.xlu0 %320
        %322 = vrot.lane.b32.xlu0 %v274, 127
        %v323 = vpop.permute.xlu0 %322
        %340 = vrot.lane.b32.xlu0 %v252, 126
        %v341 = vpop.permute.xlu0 %340
        %342 = vrot.lane.b32.xlu0 %v253, 126
        %v343 = vpop.permute.xlu0 %342
        %344 = vrot.lane.b32.xlu0 %v255, 126
        %v345 = vpop.permute.xlu0 %344
        %346 = vrot.lane.b32.xlu0 %v256, 126
        %v347 = vpop.permute.xlu0 %346
        %348 = vrot.lane.b32.xlu0 %v258, 126
        %v349 = vpop.permute.xlu0 %348
        %350 = vrot.lane.b32.xlu0 %v259, 126
        %v351 = vpop.permute.xlu0 %350
        %352 = vrot.lane.b32.xlu0 %v261, 126
        %v353 = vpop.permute.xlu0 %352
        %354 = vrot.lane.b32.xlu0 %v262, 126
        %v355 = vpop.permute.xlu0 %354
        %356 = vrot.lane.b32.xlu0 %v264, 126
        %v357 = vpop.permute.xlu0 %356
        %358 = vrot.lane.b32.xlu0 %v265, 126
        %v359 = vpop.permute.xlu0 %358
        %360 = vrot.lane.b32.xlu0 %v267, 126
        %v361 = vpop.permute.xlu0 %360
        %362 = vrot.lane.b32.xlu0 %v268, 126
        %v363 = vpop.permute.xlu0 %362
        %364 = vrot.lane.b32.xlu0 %v270, 126
        %v365 = vpop.permute.xlu0 %364
        %366 = vrot.lane.b32.xlu0 %v271, 126
        %v367 = vpop.permute.xlu0 %366
        %368 = vrot.lane.b32.xlu0 %v273, 126
        %v369 = vpop.permute.xlu0 %368
        %370 = vrot.lane.b32.xlu0 %v274, 126
        %v371 = vpop.permute.xlu0 %370
        %vm396 = vcmask 1046528
        %v397 = vrot.slane %v252, 1
        %v398 = vrot.slane %v253, 1
        %v399 = vsel %vm396, %v397, %v398
        %v400 = vrot.slane %v254, 1
        %v401 = vsel %vm396, %v398, %v400
        %v402 = vrot.slane %v255, 1
        %v403 = vrot.slane %v256, 1
        %v404 = vsel %vm396, %v402, %v403
        %v405 = vrot.slane %v257, 1
        %v406 = vsel %vm396, %v403, %v405
        %v407 = vrot.slane %v258, 1
        %v408 = vrot.slane %v259, 1
        %v409 = vsel %vm396, %v407, %v408
        %v410 = vrot.slane %v260, 1
        %v411 = vsel %vm396, %v408, %v410
        %v412 = vrot.slane %v261, 1
        %v413 = vrot.slane %v262, 1
        %v414 = vsel %vm396, %v412, %v413
        %v415 = vrot.slane %v263, 1
        %v416 = vsel %vm396, %v413, %v415
        %v417 = vrot.slane %v264, 1
        %v418 = vrot.slane %v265, 1
        %v419 = vsel %vm396, %v417, %v418
        %v420 = vrot.slane %v266, 1
        %v421 = vsel %vm396, %v418, %v420
        %v422 = vrot.slane %v267, 1
        %v423 = vrot.slane %v268, 1
        %v424 = vsel %vm396, %v422, %v423
        %v425 = vrot.slane %v269, 1
        %v426 = vsel %vm396, %v423, %v425
        %v427 = vrot.slane %v270, 1
        %v428 = vrot.slane %v271, 1
        %v429 = vsel %vm396, %v427, %v428
        %v430 = vrot.slane %v272, 1
        %v431 = vsel %vm396, %v428, %v430
        %v432 = vrot.slane %v273, 1
        %v433 = vrot.slane %v274, 1
        %v434 = vsel %vm396, %v432, %v433
        %v435 = vrot.slane %v275, 1
        %v436 = vsel %vm396, %v433, %v435
        %453 = vrot.lane.b32.xlu0 %v399, 127
        %v454 = vpop.permute.xlu0 %453
        %455 = vrot.lane.b32.xlu0 %v401, 127
        %v456 = vpop.permute.xlu0 %455
        %457 = vrot.lane.b32.xlu0 %v404, 127
        %v458 = vpop.permute.xlu0 %457
        %459 = vrot.lane.b32.xlu0 %v406, 127
        %v460 = vpop.permute.xlu0 %459
        %461 = vrot.lane.b32.xlu0 %v409, 127
        %v462 = vpop.permute.xlu0 %461
        %463 = vrot.lane.b32.xlu0 %v411, 127
        %v464 = vpop.permute.xlu0 %463
        %465 = vrot.lane.b32.xlu0 %v414, 127
        %v466 = vpop.permute.xlu0 %465
        %467 = vrot.lane.b32.xlu0 %v416, 127
        %v468 = vpop.permute.xlu0 %467
        %469 = vrot.lane.b32.xlu0 %v419, 127
        %v470 = vpop.permute.xlu0 %469
        %471 = vrot.lane.b32.xlu0 %v421, 127
        %v472 = vpop.permute.xlu0 %471
        %473 = vrot.lane.b32.xlu0 %v424, 127
        %v474 = vpop.permute.xlu0 %473
        %475 = vrot.lane.b32.xlu0 %v426, 127
        %v476 = vpop.permute.xlu0 %475
        %477 = vrot.lane.b32.xlu0 %v429, 127
        %v478 = vpop.permute.xlu0 %477
        %479 = vrot.lane.b32.xlu0 %v431, 127
        %v480 = vpop.permute.xlu0 %479
        %481 = vrot.lane.b32.xlu0 %v434, 127
        %v482 = vpop.permute.xlu0 %481
        %483 = vrot.lane.b32.xlu0 %v436, 127
        %v484 = vpop.permute.xlu0 %483
        %501 = vrot.lane.b32.xlu0 %v399, 126
        %v502 = vpop.permute.xlu0 %501
        %503 = vrot.lane.b32.xlu0 %v401, 126
        %v504 = vpop.permute.xlu0 %503
        %505 = vrot.lane.b32.xlu0 %v404, 126
        %v506 = vpop.permute.xlu0 %505
        %507 = vrot.lane.b32.xlu0 %v406, 126
        %v508 = vpop.permute.xlu0 %507
        %509 = vrot.lane.b32.xlu0 %v409, 126
        %v510 = vpop.permute.xlu0 %509
        %511 = vrot.lane.b32.xlu0 %v411, 126
        %v512 = vpop.permute.xlu0 %511
        %513 = vrot.lane.b32.xlu0 %v414, 126
        %v514 = vpop.permute.xlu0 %513
        %515 = vrot.lane.b32.xlu0 %v416, 126
        %v516 = vpop.permute.xlu0 %515
        %517 = vrot.lane.b32.xlu0 %v419, 126
        %v518 = vpop.permute.xlu0 %517
        %519 = vrot.lane.b32.xlu0 %v421, 126
        %v520 = vpop.permute.xlu0 %519
        %521 = vrot.lane.b32.xlu0 %v424, 126
        %v522 = vpop.permute.xlu0 %521
        %523 = vrot.lane.b32.xlu0 %v426, 126
        %v524 = vpop.permute.xlu0 %523
        %525 = vrot.lane.b32.xlu0 %v429, 126
        %v526 = vpop.permute.xlu0 %525
        %527 = vrot.lane.b32.xlu0 %v431, 126
        %v528 = vpop.permute.xlu0 %527
        %529 = vrot.lane.b32.xlu0 %v434, 126
        %v530 = vpop.permute.xlu0 %529
        %531 = vrot.lane.b32.xlu0 %v436, 126
        %v532 = vpop.permute.xlu0 %531
        %vm549 = vcmask 1045504
        %v550 = vrot.slane %v252, 2
        %v551 = vrot.slane %v253, 2
        %v552 = vsel %vm549, %v550, %v551
        %v553 = vrot.slane %v254, 2
        %v554 = vsel %vm549, %v551, %v553
        %v555 = vrot.slane %v255, 2
        %v556 = vrot.slane %v256, 2
        %v557 = vsel %vm549, %v555, %v556
        %v558 = vrot.slane %v257, 2
        %v559 = vsel %vm549, %v556, %v558
        %v560 = vrot.slane %v258, 2
        %v561 = vrot.slane %v259, 2
        %v562 = vsel %vm549, %v560, %v561
        %v563 = vrot.slane %v260, 2
        %v564 = vsel %vm549, %v561, %v563
        %v565 = vrot.slane %v261, 2
        %v566 = vrot.slane %v262, 2
        %v567 = vsel %vm549, %v565, %v566
        %v568 = vrot.slane %v263, 2
        %v569 = vsel %vm549, %v566, %v568
        %v570 = vrot.slane %v264, 2
        %v571 = vrot.slane %v265, 2
        %v572 = vsel %vm549, %v570, %v571
        %v573 = vrot.slane %v266, 2
        %v574 = vsel %vm549, %v571, %v573
        %v575 = vrot.slane %v267, 2
        %v576 = vrot.slane %v268, 2
        %v577 = vsel %vm549, %v575, %v576
        %v578 = vrot.slane %v269, 2
        %v579 = vsel %vm549, %v576, %v578
        %v580 = vrot.slane %v270, 2
        %v581 = vrot.slane %v271, 2
        %v582 = vsel %vm549, %v580, %v581
        %v583 = vrot.slane %v272, 2
        %v584 = vsel %vm549, %v581, %v583
        %v585 = vrot.slane %v273, 2
        %v586 = vrot.slane %v274, 2
        %v587 = vsel %vm549, %v585, %v586
        %v588 = vrot.slane %v275, 2
        %v589 = vsel %vm549, %v586, %v588
        %606 = vrot.lane.b32.xlu0 %v552, 127
        %v607 = vpop.permute.xlu0 %606
        %608 = vrot.lane.b32.xlu0 %v554, 127
        %v609 = vpop.permute.xlu0 %608
        %610 = vrot.lane.b32.xlu0 %v557, 127
        %v611 = vpop.permute.xlu0 %610
        %612 = vrot.lane.b32.xlu0 %v559, 127
        %v613 = vpop.permute.xlu0 %612
        %614 = vrot.lane.b32.xlu0 %v562, 127
        %v615 = vpop.permute.xlu0 %614
        %616 = vrot.lane.b32.xlu0 %v564, 127
        %v617 = vpop.permute.xlu0 %616
        %618 = vrot.lane.b32.xlu0 %v567, 127
        %v619 = vpop.permute.xlu0 %618
        %620 = vrot.lane.b32.xlu0 %v569, 127
        %v621 = vpop.permute.xlu0 %620
        %622 = vrot.lane.b32.xlu0 %v572, 127
        %v623 = vpop.permute.xlu0 %622
        %624 = vrot.lane.b32.xlu0 %v574, 127
        %v625 = vpop.permute.xlu0 %624
        %626 = vrot.lane.b32.xlu0 %v577, 127
        %v627 = vpop.permute.xlu0 %626
        %628 = vrot.lane.b32.xlu0 %v579, 127
        %v629 = vpop.permute.xlu0 %628
        %630 = vrot.lane.b32.xlu0 %v582, 127
        %v631 = vpop.permute.xlu0 %630
        %632 = vrot.lane.b32.xlu0 %v584, 127
        %v633 = vpop.permute.xlu0 %632
        %634 = vrot.lane.b32.xlu0 %v587, 127
        %v635 = vpop.permute.xlu0 %634
        %636 = vrot.lane.b32.xlu0 %v589, 127
        %v637 = vpop.permute.xlu0 %636
        %654 = vrot.lane.b32.xlu0 %v552, 126
        %v655 = vpop.permute.xlu0 %654
        %656 = vrot.lane.b32.xlu0 %v554, 126
        %v657 = vpop.permute.xlu0 %656
        %658 = vrot.lane.b32.xlu0 %v557, 126
        %v659 = vpop.permute.xlu0 %658
        %660 = vrot.lane.b32.xlu0 %v559, 126
        %v661 = vpop.permute.xlu0 %660
        %662 = vrot.lane.b32.xlu0 %v562, 126
        %v663 = vpop.permute.xlu0 %662
        %664 = vrot.lane.b32.xlu0 %v564, 126
        %v665 = vpop.permute.xlu0 %664
        %666 = vrot.lane.b32.xlu0 %v567, 126
        %v667 = vpop.permute.xlu0 %666
        %668 = vrot.lane.b32.xlu0 %v569, 126
        %v669 = vpop.permute.xlu0 %668
        %670 = vrot.lane.b32.xlu0 %v572, 126
        %v671 = vpop.permute.xlu0 %670
        %672 = vrot.lane.b32.xlu0 %v574, 126
        %v673 = vpop.permute.xlu0 %672
        %674 = vrot.lane.b32.xlu0 %v577, 126
        %v675 = vpop.permute.xlu0 %674
        %676 = vrot.lane.b32.xlu0 %v579, 126
        %v677 = vpop.permute.xlu0 %676
        %678 = vrot.lane.b32.xlu0 %v582, 126
        %v679 = vpop.permute.xlu0 %678
        %680 = vrot.lane.b32.xlu0 %v584, 126
        %v681 = vpop.permute.xlu0 %680
        %682 = vrot.lane.b32.xlu0 %v587, 126
        %v683 = vpop.permute.xlu0 %682
        %684 = vrot.lane.b32.xlu0 %v589, 126
        %v685 = vpop.permute.xlu0 %684
        %v702 = vcombine.low %v252, %v258
        %v703 = vcombine.high %v252, %v258
        %v705 = vunpack.c.l.s4 1983009808
        %v706 = vunpack.c.0.s8 %v705
        %v707 = vlaneseq
        %v708 = vshrl.u32 %v707, 7
        %v709 = vsub.s32 %v706, %v708
        %v710 = vrot.slane %v702, %v709
        %v712 = vunpack.c.l.s4 1983009808
        %v713 = vunpack.c.0.s8 %v712
        %v714 = vlaneseq
        %v715 = vshrl.u32 %v714, 7
        %v716 = vsub.s32 %v713, %v715
        %v717 = vrot.slane %v703, %v716
        %v718 = vcombine.low %v255, %v261
        %v719 = vcombine.high %v255, %v261
        %v721 = vunpack.c.l.s4 1983009808
        %v722 = vunpack.c.0.s8 %v721
        %v723 = vlaneseq
        %v724 = vshrl.u32 %v723, 7
        %v725 = vsub.s32 %v722, %v724
        %v726 = vrot.slane %v718, %v725
        %v728 = vunpack.c.l.s4 1983009808
        %v729 = vunpack.c.0.s8 %v728
        %v730 = vlaneseq
        %v731 = vshrl.u32 %v730, 7
        %v732 = vsub.s32 %v729, %v731
        %v733 = vrot.slane %v719, %v732
        %v734 = vcombine.low %v264, %v270
        %v735 = vcombine.high %v264, %v270
        %v737 = vunpack.c.l.s4 1983009808
        %v738 = vunpack.c.0.s8 %v737
        %v739 = vlaneseq
        %v740 = vshrl.u32 %v739, 7
        %v741 = vsub.s32 %v738, %v740
        %v742 = vrot.slane %v734, %v741
        %v744 = vunpack.c.l.s4 1983009808
        %v745 = vunpack.c.0.s8 %v744
        %v746 = vlaneseq
        %v747 = vshrl.u32 %v746, 7
        %v748 = vsub.s32 %v745, %v747
        %v749 = vrot.slane %v735, %v748
        %v750 = vcombine.low %v267, %v273
        %v751 = vcombine.high %v267, %v273
        %v753 = vunpack.c.l.s4 1983009808
        %v754 = vunpack.c.0.s8 %v753
        %v755 = vlaneseq
        %v756 = vshrl.u32 %v755, 7
        %v757 = vsub.s32 %v754, %v756
        %v758 = vrot.slane %v750, %v757
        %v760 = vunpack.c.l.s4 1983009808
        %v761 = vunpack.c.0.s8 %v760
        %v762 = vlaneseq
        %v763 = vshrl.u32 %v762, 7
        %v764 = vsub.s32 %v761, %v763
        %v765 = vrot.slane %v751, %v764
        %v766 = vcombine.low %v710, %v726
        %v767 = vcombine.high %v710, %v726
        %v769 = vunpack.c.l.s4 1934713408
        %v770 = vunpack.c.0.s8 %v769
        %v771 = vlaneseq
        %v772 = vshrl.u32 %v771, 7
        %v773 = vsub.s32 %v770, %v772
        %v774 = vrot.slane %v766, %v773
        %v776 = vunpack.c.l.s4 1934713408
        %v777 = vunpack.c.0.s8 %v776
        %v778 = vlaneseq
        %v779 = vshrl.u32 %v778, 7
        %v780 = vsub.s32 %v777, %v779
        %v781 = vrot.slane %v767, %v780
        %v782 = vcombine.low %v717, %v733
        %v783 = vcombine.high %v717, %v733
        %v785 = vunpack.c.l.s4 1934713408
        %v786 = vunpack.c.0.s8 %v785
        %v787 = vlaneseq
        %v788 = vshrl.u32 %v787, 7
        %v789 = vsub.s32 %v786, %v788
        %v790 = vrot.slane %v782, %v789
        %v792 = vunpack.c.l.s4 1934713408
        %v793 = vunpack.c.0.s8 %v792
        %v794 = vlaneseq
        %v795 = vshrl.u32 %v794, 7
        %v796 = vsub.s32 %v793, %v795
        %v797 = vrot.slane %v783, %v796
        %v798 = vcombine.low %v742, %v758
        %v799 = vcombine.high %v742, %v758
        %v801 = vunpack.c.l.s4 1934713408
        %v802 = vunpack.c.0.s8 %v801
        %v803 = vlaneseq
        %v804 = vshrl.u32 %v803, 7
        %v805 = vsub.s32 %v802, %v804
        %v806 = vrot.slane %v798, %v805
        %v808 = vunpack.c.l.s4 1934713408
        %v809 = vunpack.c.0.s8 %v808
        %v810 = vlaneseq
        %v811 = vshrl.u32 %v810, 7
        %v812 = vsub.s32 %v809, %v811
        %v813 = vrot.slane %v799, %v812
        %v814 = vcombine.low %v749, %v765
        %v815 = vcombine.high %v749, %v765
        %v817 = vunpack.c.l.s4 1934713408
        %v818 = vunpack.c.0.s8 %v817
        %v819 = vlaneseq
        %v820 = vshrl.u32 %v819, 7
        %v821 = vsub.s32 %v818, %v820
        %v822 = vrot.slane %v814, %v821
        %v824 = vunpack.c.l.s4 1934713408
        %v825 = vunpack.c.0.s8 %v824
        %v826 = vlaneseq
        %v827 = vshrl.u32 %v826, 7
        %v828 = vsub.s32 %v825, %v827
        %v829 = vrot.slane %v815, %v828
        %v830 = vcombine.low %v774, %v806
        %v831 = vcombine.high %v774, %v806
        %v832 = vcombine.low %v781, %v813
        %v833 = vcombine.high %v781, %v813
        %v834 = vcombine.low %v790, %v822
        %v835 = vcombine.high %v790, %v822
        %v836 = vcombine.low %v797, %v829
        %v837 = vcombine.high %v797, %v829
        %v838 = vcombine.low %v293, %v301
        %v839 = vcombine.high %v293, %v301
        %v841 = vunpack.c.l.s4 1983009808
        %v842 = vunpack.c.0.s8 %v841
        %v843 = vlaneseq
        %v844 = vshrl.u32 %v843, 7
        %v845 = vsub.s32 %v842, %v844
        %v846 = vrot.slane %v838, %v845
        %v848 = vunpack.c.l.s4 1983009808
        %v849 = vunpack.c.0.s8 %v848
        %v850 = vlaneseq
        %v851 = vshrl.u32 %v850, 7
        %v852 = vsub.s32 %v849, %v851
        %v853 = vrot.slane %v839, %v852
        %v854 = vcombine.low %v297, %v305
        %v855 = vcombine.high %v297, %v305
        %v857 = vunpack.c.l.s4 1983009808
        %v858 = vunpack.c.0.s8 %v857
        %v859 = vlaneseq
        %v860 = vshrl.u32 %v859, 7
        %v861 = vsub.s32 %v858, %v860
        %v862 = vrot.slane %v854, %v861
        %v864 = vunpack.c.l.s4 1983009808
        %v865 = vunpack.c.0.s8 %v864
        %v866 = vlaneseq
        %v867 = vshrl.u32 %v866, 7
        %v868 = vsub.s32 %v865, %v867
        %v869 = vrot.slane %v855, %v868
        %v870 = vcombine.low %v309, %v317
        %v871 = vcombine.high %v309, %v317
        %v873 = vunpack.c.l.s4 1983009808
        %v874 = vunpack.c.0.s8 %v873
        %v875 = vlaneseq
        %v876 = vshrl.u32 %v875, 7
        %v877 = vsub.s32 %v874, %v876
        %v878 = vrot.slane %v870, %v877
        %v880 = vunpack.c.l.s4 1983009808
        %v881 = vunpack.c.0.s8 %v880
        %v882 = vlaneseq
        %v883 = vshrl.u32 %v882, 7
        %v884 = vsub.s32 %v881, %v883
        %v885 = vrot.slane %v871, %v884
        %v886 = vcombine.low %v313, %v321
        %v887 = vcombine.high %v313, %v321
        %v889 = vunpack.c.l.s4 1983009808
        %v890 = vunpack.c.0.s8 %v889
        %v891 = vlaneseq
        %v892 = vshrl.u32 %v891, 7
        %v893 = vsub.s32 %v890, %v892
        %v894 = vrot.slane %v886, %v893
        %v896 = vunpack.c.l.s4 1983009808
        %v897 = vunpack.c.0.s8 %v896
        %v898 = vlaneseq
        %v899 = vshrl.u32 %v898, 7
        %v900 = vsub.s32 %v897, %v899
        %v901 = vrot.slane %v887, %v900
        %v902 = vcombine.low %v846, %v862
        %v903 = vcombine.high %v846, %v862
        %v905 = vunpack.c.l.s4 1934713408
        %v906 = vunpack.c.0.s8 %v905
        %v907 = vlaneseq
        %v908 = vshrl.u32 %v907, 7
        %v909 = vsub.s32 %v906, %v908
        %v910 = vrot.slane %v902, %v909
        %v912 = vunpack.c.l.s4 1934713408
        %v913 = vunpack.c.0.s8 %v912
        %v914 = vlaneseq
        %v915 = vshrl.u32 %v914, 7
        %v916 = vsub.s32 %v913, %v915
        %v917 = vrot.slane %v903, %v916
        %v918 = vcombine.low %v853, %v869
        %v919 = vcombine.high %v853, %v869
        %v921 = vunpack.c.l.s4 1934713408
        %v922 = vunpack.c.0.s8 %v921
        %v923 = vlaneseq
        %v924 = vshrl.u32 %v923, 7
        %v925 = vsub.s32 %v922, %v924
        %v926 = vrot.slane %v918, %v925
        %v928 = vunpack.c.l.s4 1934713408
        %v929 = vunpack.c.0.s8 %v928
        %v930 = vlaneseq
        %v931 = vshrl.u32 %v930, 7
        %v932 = vsub.s32 %v929, %v931
        %v933 = vrot.slane %v919, %v932
        %v934 = vcombine.low %v878, %v894
        %v935 = vcombine.high %v878, %v894
        %v937 = vunpack.c.l.s4 1934713408
        %v938 = vunpack.c.0.s8 %v937
        %v939 = vlaneseq
        %v940 = vshrl.u32 %v939, 7
        %v941 = vsub.s32 %v938, %v940
        %v942 = vrot.slane %v934, %v941
        %v944 = vunpack.c.l.s4 1934713408
        %v945 = vunpack.c.0.s8 %v944
        %v946 = vlaneseq
        %v947 = vshrl.u32 %v946, 7
        %v948 = vsub.s32 %v945, %v947
        %v949 = vrot.slane %v935, %v948
        %v950 = vcombine.low %v885, %v901
        %v951 = vcombine.high %v885, %v901
        %v953 = vunpack.c.l.s4 1934713408
        %v954 = vunpack.c.0.s8 %v953
        %v955 = vlaneseq
        %v956 = vshrl.u32 %v955, 7
        %v957 = vsub.s32 %v954, %v956
        %v958 = vrot.slane %v950, %v957
        %v960 = vunpack.c.l.s4 1934713408
        %v961 = vunpack.c.0.s8 %v960
        %v962 = vlaneseq
        %v963 = vshrl.u32 %v962, 7
        %v964 = vsub.s32 %v961, %v963
        %v965 = vrot.slane %v951, %v964
        %v966 = vcombine.low %v910, %v942
        %v967 = vcombine.high %v910, %v942
        %v968 = vcombine.low %v917, %v949
        %v969 = vcombine.high %v917, %v949
        %v970 = vcombine.low %v926, %v958
        %v971 = vcombine.high %v926, %v958
        %v972 = vcombine.low %v933, %v965
        %v973 = vcombine.high %v933, %v965
        %v974 = vcombine.low %v341, %v349
        %v975 = vcombine.high %v341, %v349
        %v977 = vunpack.c.l.s4 1983009808
        %v978 = vunpack.c.0.s8 %v977
        %v979 = vlaneseq
        %v980 = vshrl.u32 %v979, 7
        %v981 = vsub.s32 %v978, %v980
        %v982 = vrot.slane %v974, %v981
        %v984 = vunpack.c.l.s4 1983009808
        %v985 = vunpack.c.0.s8 %v984
        %v986 = vlaneseq
        %v987 = vshrl.u32 %v986, 7
        %v988 = vsub.s32 %v985, %v987
        %v989 = vrot.slane %v975, %v988
        %v990 = vcombine.low %v345, %v353
        %v991 = vcombine.high %v345, %v353
        %v993 = vunpack.c.l.s4 1983009808
        %v994 = vunpack.c.0.s8 %v993
        %v995 = vlaneseq
        %v996 = vshrl.u32 %v995, 7
        %v997 = vsub.s32 %v994, %v996
        %v998 = vrot.slane %v990, %v997
        %v1000 = vunpack.c.l.s4 1983009808
        %v1001 = vunpack.c.0.s8 %v1000
        %v1002 = vlaneseq
        %v1003 = vshrl.u32 %v1002, 7
        %v1004 = vsub.s32 %v1001, %v1003
        %v1005 = vrot.slane %v991, %v1004
        %v1006 = vcombine.low %v357, %v365
        %v1007 = vcombine.high %v357, %v365
        %v1009 = vunpack.c.l.s4 1983009808
        %v1010 = vunpack.c.0.s8 %v1009
        %v1011 = vlaneseq
        %v1012 = vshrl.u32 %v1011, 7
        %v1013 = vsub.s32 %v1010, %v1012
        %v1014 = vrot.slane %v1006, %v1013
        %v1016 = vunpack.c.l.s4 1983009808
        %v1017 = vunpack.c.0.s8 %v1016
        %v1018 = vlaneseq
        %v1019 = vshrl.u32 %v1018, 7
        %v1020 = vsub.s32 %v1017, %v1019
        %v1021 = vrot.slane %v1007, %v1020
        %v1022 = vcombine.low %v361, %v369
        %v1023 = vcombine.high %v361, %v369
        %v1025 = vunpack.c.l.s4 1983009808
        %v1026 = vunpack.c.0.s8 %v1025
        %v1027 = vlaneseq
        %v1028 = vshrl.u32 %v1027, 7
        %v1029 = vsub.s32 %v1026, %v1028
        %v1030 = vrot.slane %v1022, %v1029
        %v1032 = vunpack.c.l.s4 1983009808
        %v1033 = vunpack.c.0.s8 %v1032
        %v1034 = vlaneseq
        %v1035 = vshrl.u32 %v1034, 7
        %v1036 = vsub.s32 %v1033, %v1035
        %v1037 = vrot.slane %v1023, %v1036
        %v1038 = vcombine.low %v982, %v998
        %v1039 = vcombine.high %v982, %v998
        %v1041 = vunpack.c.l.s4 1934713408
        %v1042 = vunpack.c.0.s8 %v1041
        %v1043 = vlaneseq
        %v1044 = vshrl.u32 %v1043, 7
        %v1045 = vsub.s32 %v1042, %v1044
        %v1046 = vrot.slane %v1038, %v1045
        %v1048 = vunpack.c.l.s4 1934713408
        %v1049 = vunpack.c.0.s8 %v1048
        %v1050 = vlaneseq
        %v1051 = vshrl.u32 %v1050, 7
        %v1052 = vsub.s32 %v1049, %v1051
        %v1053 = vrot.slane %v1039, %v1052
        %v1054 = vcombine.low %v989, %v1005
        %v1055 = vcombine.high %v989, %v1005
        %v1057 = vunpack.c.l.s4 1934713408
        %v1058 = vunpack.c.0.s8 %v1057
        %v1059 = vlaneseq
        %v1060 = vshrl.u32 %v1059, 7
        %v1061 = vsub.s32 %v1058, %v1060
        %v1062 = vrot.slane %v1054, %v1061
        %v1064 = vunpack.c.l.s4 1934713408
        %v1065 = vunpack.c.0.s8 %v1064
        %v1066 = vlaneseq
        %v1067 = vshrl.u32 %v1066, 7
        %v1068 = vsub.s32 %v1065, %v1067
        %v1069 = vrot.slane %v1055, %v1068
        %v1070 = vcombine.low %v1014, %v1030
        %v1071 = vcombine.high %v1014, %v1030
        %v1073 = vunpack.c.l.s4 1934713408
        %v1074 = vunpack.c.0.s8 %v1073
        %v1075 = vlaneseq
        %v1076 = vshrl.u32 %v1075, 7
        %v1077 = vsub.s32 %v1074, %v1076
        %v1078 = vrot.slane %v1070, %v1077
        %v1080 = vunpack.c.l.s4 1934713408
        %v1081 = vunpack.c.0.s8 %v1080
        %v1082 = vlaneseq
        %v1083 = vshrl.u32 %v1082, 7
        %v1084 = vsub.s32 %v1081, %v1083
        %v1085 = vrot.slane %v1071, %v1084
        %v1086 = vcombine.low %v1021, %v1037
        %v1087 = vcombine.high %v1021, %v1037
        %v1089 = vunpack.c.l.s4 1934713408
        %v1090 = vunpack.c.0.s8 %v1089
        %v1091 = vlaneseq
        %v1092 = vshrl.u32 %v1091, 7
        %v1093 = vsub.s32 %v1090, %v1092
        %v1094 = vrot.slane %v1086, %v1093
        %v1096 = vunpack.c.l.s4 1934713408
        %v1097 = vunpack.c.0.s8 %v1096
        %v1098 = vlaneseq
        %v1099 = vshrl.u32 %v1098, 7
        %v1100 = vsub.s32 %v1097, %v1099
        %v1101 = vrot.slane %v1087, %v1100
        %v1102 = vcombine.low %v1046, %v1078
        %v1103 = vcombine.high %v1046, %v1078
        %v1104 = vcombine.low %v1053, %v1085
        %v1105 = vcombine.high %v1053, %v1085
        %v1106 = vcombine.low %v1062, %v1094
        %v1107 = vcombine.high %v1062, %v1094
        %v1108 = vcombine.low %v1069, %v1101
        %v1109 = vcombine.high %v1069, %v1101
        %v1110 = vcombine.low %v399, %v409
        %v1111 = vcombine.high %v399, %v409
        %v1113 = vunpack.c.l.s4 1983009808
        %v1114 = vunpack.c.0.s8 %v1113
        %v1115 = vlaneseq
        %v1116 = vshrl.u32 %v1115, 7
        %v1117 = vsub.s32 %v1114, %v1116
        %v1118 = vrot.slane %v1110, %v1117
        %v1120 = vunpack.c.l.s4 1983009808
        %v1121 = vunpack.c.0.s8 %v1120
        %v1122 = vlaneseq
        %v1123 = vshrl.u32 %v1122, 7
        %v1124 = vsub.s32 %v1121, %v1123
        %v1125 = vrot.slane %v1111, %v1124
        %v1126 = vcombine.low %v404, %v414
        %v1127 = vcombine.high %v404, %v414
        %v1129 = vunpack.c.l.s4 1983009808
        %v1130 = vunpack.c.0.s8 %v1129
        %v1131 = vlaneseq
        %v1132 = vshrl.u32 %v1131, 7
        %v1133 = vsub.s32 %v1130, %v1132
        %v1134 = vrot.slane %v1126, %v1133
        %v1136 = vunpack.c.l.s4 1983009808
        %v1137 = vunpack.c.0.s8 %v1136
        %v1138 = vlaneseq
        %v1139 = vshrl.u32 %v1138, 7
        %v1140 = vsub.s32 %v1137, %v1139
        %v1141 = vrot.slane %v1127, %v1140
        %v1142 = vcombine.low %v419, %v429
        %v1143 = vcombine.high %v419, %v429
        %v1145 = vunpack.c.l.s4 1983009808
        %v1146 = vunpack.c.0.s8 %v1145
        %v1147 = vlaneseq
        %v1148 = vshrl.u32 %v1147, 7
        %v1149 = vsub.s32 %v1146, %v1148
        %v1150 = vrot.slane %v1142, %v1149
        %v1152 = vunpack.c.l.s4 1983009808
        %v1153 = vunpack.c.0.s8 %v1152
        %v1154 = vlaneseq
        %v1155 = vshrl.u32 %v1154, 7
        %v1156 = vsub.s32 %v1153, %v1155
        %v1157 = vrot.slane %v1143, %v1156
        %v1158 = vcombine.low %v424, %v434
        %v1159 = vcombine.high %v424, %v434
        %v1161 = vunpack.c.l.s4 1983009808
        %v1162 = vunpack.c.0.s8 %v1161
        %v1163 = vlaneseq
        %v1164 = vshrl.u32 %v1163, 7
        %v1165 = vsub.s32 %v1162, %v1164
        %v1166 = vrot.slane %v1158, %v1165
        %v1168 = vunpack.c.l.s4 1983009808
        %v1169 = vunpack.c.0.s8 %v1168
        %v1170 = vlaneseq
        %v1171 = vshrl.u32 %v1170, 7
        %v1172 = vsub.s32 %v1169, %v1171
        %v1173 = vrot.slane %v1159, %v1172
        %v1174 = vcombine.low %v1118, %v1134
        %v1175 = vcombine.high %v1118, %v1134
        %v1177 = vunpack.c.l.s4 1934713408
        %v1178 = vunpack.c.0.s8 %v1177
        %v1179 = vlaneseq
        %v1180 = vshrl.u32 %v1179, 7
        %v1181 = vsub.s32 %v1178, %v1180
        %v1182 = vrot.slane %v1174, %v1181
        %v1184 = vunpack.c.l.s4 1934713408
        %v1185 = vunpack.c.0.s8 %v1184
        %v1186 = vlaneseq
        %v1187 = vshrl.u32 %v1186, 7
        %v1188 = vsub.s32 %v1185, %v1187
        %v1189 = vrot.slane %v1175, %v1188
        %v1190 = vcombine.low %v1125, %v1141
        %v1191 = vcombine.high %v1125, %v1141
        %v1193 = vunpack.c.l.s4 1934713408
        %v1194 = vunpack.c.0.s8 %v1193
        %v1195 = vlaneseq
        %v1196 = vshrl.u32 %v1195, 7
        %v1197 = vsub.s32 %v1194, %v1196
        %v1198 = vrot.slane %v1190, %v1197
        %v1200 = vunpack.c.l.s4 1934713408
        %v1201 = vunpack.c.0.s8 %v1200
        %v1202 = vlaneseq
        %v1203 = vshrl.u32 %v1202, 7
        %v1204 = vsub.s32 %v1201, %v1203
        %v1205 = vrot.slane %v1191, %v1204
        %v1206 = vcombine.low %v1150, %v1166
        %v1207 = vcombine.high %v1150, %v1166
        %v1209 = vunpack.c.l.s4 1934713408
        %v1210 = vunpack.c.0.s8 %v1209
        %v1211 = vlaneseq
        %v1212 = vshrl.u32 %v1211, 7
        %v1213 = vsub.s32 %v1210, %v1212
        %v1214 = vrot.slane %v1206, %v1213
        %v1216 = vunpack.c.l.s4 1934713408
        %v1217 = vunpack.c.0.s8 %v1216
        %v1218 = vlaneseq
        %v1219 = vshrl.u32 %v1218, 7
        %v1220 = vsub.s32 %v1217, %v1219
        %v1221 = vrot.slane %v1207, %v1220
        %v1222 = vcombine.low %v1157, %v1173
        %v1223 = vcombine.high %v1157, %v1173
        %v1225 = vunpack.c.l.s4 1934713408
        %v1226 = vunpack.c.0.s8 %v1225
        %v1227 = vlaneseq
        %v1228 = vshrl.u32 %v1227, 7
        %v1229 = vsub.s32 %v1226, %v1228
        %v1230 = vrot.slane %v1222, %v1229
        %v1232 = vunpack.c.l.s4 1934713408
        %v1233 = vunpack.c.0.s8 %v1232
        %v1234 = vlaneseq
        %v1235 = vshrl.u32 %v1234, 7
        %v1236 = vsub.s32 %v1233, %v1235
        %v1237 = vrot.slane %v1223, %v1236
        %v1238 = vcombine.low %v1182, %v1214
        %v1239 = vcombine.high %v1182, %v1214
        %v1240 = vcombine.low %v1189, %v1221
        %v1241 = vcombine.high %v1189, %v1221
        %v1242 = vcombine.low %v1198, %v1230
        %v1243 = vcombine.high %v1198, %v1230
        %v1244 = vcombine.low %v1205, %v1237
        %v1245 = vcombine.high %v1205, %v1237
        %v1246 = vcombine.low %v454, %v462
        %v1247 = vcombine.high %v454, %v462
        %v1249 = vunpack.c.l.s4 1983009808
        %v1250 = vunpack.c.0.s8 %v1249
        %v1251 = vlaneseq
        %v1252 = vshrl.u32 %v1251, 7
        %v1253 = vsub.s32 %v1250, %v1252
        %v1254 = vrot.slane %v1246, %v1253
        %v1256 = vunpack.c.l.s4 1983009808
        %v1257 = vunpack.c.0.s8 %v1256
        %v1258 = vlaneseq
        %v1259 = vshrl.u32 %v1258, 7
        %v1260 = vsub.s32 %v1257, %v1259
        %v1261 = vrot.slane %v1247, %v1260
        %v1262 = vcombine.low %v458, %v466
        %v1263 = vcombine.high %v458, %v466
        %v1265 = vunpack.c.l.s4 1983009808
        %v1266 = vunpack.c.0.s8 %v1265
        %v1267 = vlaneseq
        %v1268 = vshrl.u32 %v1267, 7
        %v1269 = vsub.s32 %v1266, %v1268
        %v1270 = vrot.slane %v1262, %v1269
        %v1272 = vunpack.c.l.s4 1983009808
        %v1273 = vunpack.c.0.s8 %v1272
        %v1274 = vlaneseq
        %v1275 = vshrl.u32 %v1274, 7
        %v1276 = vsub.s32 %v1273, %v1275
        %v1277 = vrot.slane %v1263, %v1276
        %v1278 = vcombine.low %v470, %v478
        %v1279 = vcombine.high %v470, %v478
        %v1281 = vunpack.c.l.s4 1983009808
        %v1282 = vunpack.c.0.s8 %v1281
        %v1283 = vlaneseq
        %v1284 = vshrl.u32 %v1283, 7
        %v1285 = vsub.s32 %v1282, %v1284
        %v1286 = vrot.slane %v1278, %v1285
        %v1288 = vunpack.c.l.s4 1983009808
        %v1289 = vunpack.c.0.s8 %v1288
        %v1290 = vlaneseq
        %v1291 = vshrl.u32 %v1290, 7
        %v1292 = vsub.s32 %v1289, %v1291
        %v1293 = vrot.slane %v1279, %v1292
        %v1294 = vcombine.low %v474, %v482
        %v1295 = vcombine.high %v474, %v482
        %v1297 = vunpack.c.l.s4 1983009808
        %v1298 = vunpack.c.0.s8 %v1297
        %v1299 = vlaneseq
        %v1300 = vshrl.u32 %v1299, 7
        %v1301 = vsub.s32 %v1298, %v1300
        %v1302 = vrot.slane %v1294, %v1301
        %v1304 = vunpack.c.l.s4 1983009808
        %v1305 = vunpack.c.0.s8 %v1304
        %v1306 = vlaneseq
        %v1307 = vshrl.u32 %v1306, 7
        %v1308 = vsub.s32 %v1305, %v1307
        %v1309 = vrot.slane %v1295, %v1308
        %v1310 = vcombine.low %v1254, %v1270
        %v1311 = vcombine.high %v1254, %v1270
        %v1313 = vunpack.c.l.s4 1934713408
        %v1314 = vunpack.c.0.s8 %v1313
        %v1315 = vlaneseq
        %v1316 = vshrl.u32 %v1315, 7
        %v1317 = vsub.s32 %v1314, %v1316
        %v1318 = vrot.slane %v1310, %v1317
        %v1320 = vunpack.c.l.s4 1934713408
        %v1321 = vunpack.c.0.s8 %v1320
        %v1322 = vlaneseq
        %v1323 = vshrl.u32 %v1322, 7
        %v1324 = vsub.s32 %v1321, %v1323
        %v1325 = vrot.slane %v1311, %v1324
        %v1326 = vcombine.low %v1261, %v1277
        %v1327 = vcombine.high %v1261, %v1277
        %v1329 = vunpack.c.l.s4 1934713408
        %v1330 = vunpack.c.0.s8 %v1329
        %v1331 = vlaneseq
        %v1332 = vshrl.u32 %v1331, 7
        %v1333 = vsub.s32 %v1330, %v1332
        %v1334 = vrot.slane %v1326, %v1333
        %v1336 = vunpack.c.l.s4 1934713408
        %v1337 = vunpack.c.0.s8 %v1336
        %v1338 = vlaneseq
        %v1339 = vshrl.u32 %v1338, 7
        %v1340 = vsub.s32 %v1337, %v1339
        %v1341 = vrot.slane %v1327, %v1340
        %v1342 = vcombine.low %v1286, %v1302
        %v1343 = vcombine.high %v1286, %v1302
        %v1345 = vunpack.c.l.s4 1934713408
        %v1346 = vunpack.c.0.s8 %v1345
        %v1347 = vlaneseq
        %v1348 = vshrl.u32 %v1347, 7
        %v1349 = vsub.s32 %v1346, %v1348
        %v1350 = vrot.slane %v1342, %v1349
        %v1352 = vunpack.c.l.s4 1934713408
        %v1353 = vunpack.c.0.s8 %v1352
        %v1354 = vlaneseq
        %v1355 = vshrl.u32 %v1354, 7
        %v1356 = vsub.s32 %v1353, %v1355
        %v1357 = vrot.slane %v1343, %v1356
        %v1358 = vcombine.low %v1293, %v1309
        %v1359 = vcombine.high %v1293, %v1309
        %v1361 = vunpack.c.l.s4 1934713408
        %v1362 = vunpack.c.0.s8 %v1361
        %v1363 = vlaneseq
        %v1364 = vshrl.u32 %v1363, 7
        %v1365 = vsub.s32 %v1362, %v1364
        %v1366 = vrot.slane %v1358, %v1365
        %v1368 = vunpack.c.l.s4 1934713408
        %v1369 = vunpack.c.0.s8 %v1368
        %v1370 = vlaneseq
        %v1371 = vshrl.u32 %v1370, 7
        %v1372 = vsub.s32 %v1369, %v1371
        %v1373 = vrot.slane %v1359, %v1372
        %v1374 = vcombine.low %v1318, %v1350
        %v1375 = vcombine.high %v1318, %v1350
        %v1376 = vcombine.low %v1325, %v1357
        %v1377 = vcombine.high %v1325, %v1357
        %v1378 = vcombine.low %v1334, %v1366
        %v1379 = vcombine.high %v1334, %v1366
        %v1380 = vcombine.low %v1341, %v1373
        %v1381 = vcombine.high %v1341, %v1373
        %v1382 = vcombine.low %v502, %v510
        %v1383 = vcombine.high %v502, %v510
        %v1385 = vunpack.c.l.s4 1983009808
        %v1386 = vunpack.c.0.s8 %v1385
        %v1387 = vlaneseq
        %v1388 = vshrl.u32 %v1387, 7
        %v1389 = vsub.s32 %v1386, %v1388
        %v1390 = vrot.slane %v1382, %v1389
        %v1392 = vunpack.c.l.s4 1983009808
        %v1393 = vunpack.c.0.s8 %v1392
        %v1394 = vlaneseq
        %v1395 = vshrl.u32 %v1394, 7
        %v1396 = vsub.s32 %v1393, %v1395
        %v1397 = vrot.slane %v1383, %v1396
        %v1398 = vcombine.low %v506, %v514
        %v1399 = vcombine.high %v506, %v514
        %v1401 = vunpack.c.l.s4 1983009808
        %v1402 = vunpack.c.0.s8 %v1401
        %v1403 = vlaneseq
        %v1404 = vshrl.u32 %v1403, 7
        %v1405 = vsub.s32 %v1402, %v1404
        %v1406 = vrot.slane %v1398, %v1405
        %v1408 = vunpack.c.l.s4 1983009808
        %v1409 = vunpack.c.0.s8 %v1408
        %v1410 = vlaneseq
        %v1411 = vshrl.u32 %v1410, 7
        %v1412 = vsub.s32 %v1409, %v1411
        %v1413 = vrot.slane %v1399, %v1412
        %v1414 = vcombine.low %v518, %v526
        %v1415 = vcombine.high %v518, %v526
        %v1417 = vunpack.c.l.s4 1983009808
        %v1418 = vunpack.c.0.s8 %v1417
        %v1419 = vlaneseq
        %v1420 = vshrl.u32 %v1419, 7
        %v1421 = vsub.s32 %v1418, %v1420
        %v1422 = vrot.slane %v1414, %v1421
        %v1424 = vunpack.c.l.s4 1983009808
        %v1425 = vunpack.c.0.s8 %v1424
        %v1426 = vlaneseq
        %v1427 = vshrl.u32 %v1426, 7
        %v1428 = vsub.s32 %v1425, %v1427
        %v1429 = vrot.slane %v1415, %v1428
        %v1430 = vcombine.low %v522, %v530
        %v1431 = vcombine.high %v522, %v530
        %v1433 = vunpack.c.l.s4 1983009808
        %v1434 = vunpack.c.0.s8 %v1433
        %v1435 = vlaneseq
        %v1436 = vshrl.u32 %v1435, 7
        %v1437 = vsub.s32 %v1434, %v1436
        %v1438 = vrot.slane %v1430, %v1437
        %v1440 = vunpack.c.l.s4 1983009808
        %v1441 = vunpack.c.0.s8 %v1440
        %v1442 = vlaneseq
        %v1443 = vshrl.u32 %v1442, 7
        %v1444 = vsub.s32 %v1441, %v1443
        %v1445 = vrot.slane %v1431, %v1444
        %v1446 = vcombine.low %v1390, %v1406
        %v1447 = vcombine.high %v1390, %v1406
        %v1449 = vunpack.c.l.s4 1934713408
        %v1450 = vunpack.c.0.s8 %v1449
        %v1451 = vlaneseq
        %v1452 = vshrl.u32 %v1451, 7
        %v1453 = vsub.s32 %v1450, %v1452
        %v1454 = vrot.slane %v1446, %v1453
        %v1456 = vunpack.c.l.s4 1934713408
        %v1457 = vunpack.c.0.s8 %v1456
        %v1458 = vlaneseq
        %v1459 = vshrl.u32 %v1458, 7
        %v1460 = vsub.s32 %v1457, %v1459
        %v1461 = vrot.slane %v1447, %v1460
        %v1462 = vcombine.low %v1397, %v1413
        %v1463 = vcombine.high %v1397, %v1413
        %v1465 = vunpack.c.l.s4 1934713408
        %v1466 = vunpack.c.0.s8 %v1465
        %v1467 = vlaneseq
        %v1468 = vshrl.u32 %v1467, 7
        %v1469 = vsub.s32 %v1466, %v1468
        %v1470 = vrot.slane %v1462, %v1469
        %v1472 = vunpack.c.l.s4 1934713408
        %v1473 = vunpack.c.0.s8 %v1472
        %v1474 = vlaneseq
        %v1475 = vshrl.u32 %v1474, 7
        %v1476 = vsub.s32 %v1473, %v1475
        %v1477 = vrot.slane %v1463, %v1476
        %v1478 = vcombine.low %v1422, %v1438
        %v1479 = vcombine.high %v1422, %v1438
        %v1481 = vunpack.c.l.s4 1934713408
        %v1482 = vunpack.c.0.s8 %v1481
        %v1483 = vlaneseq
        %v1484 = vshrl.u32 %v1483, 7
        %v1485 = vsub.s32 %v1482, %v1484
        %v1486 = vrot.slane %v1478, %v1485
        %v1488 = vunpack.c.l.s4 1934713408
        %v1489 = vunpack.c.0.s8 %v1488
        %v1490 = vlaneseq
        %v1491 = vshrl.u32 %v1490, 7
        %v1492 = vsub.s32 %v1489, %v1491
        %v1493 = vrot.slane %v1479, %v1492
        %v1494 = vcombine.low %v1429, %v1445
        %v1495 = vcombine.high %v1429, %v1445
        %v1497 = vunpack.c.l.s4 1934713408
        %v1498 = vunpack.c.0.s8 %v1497
        %v1499 = vlaneseq
        %v1500 = vshrl.u32 %v1499, 7
        %v1501 = vsub.s32 %v1498, %v1500
        %v1502 = vrot.slane %v1494, %v1501
        %v1504 = vunpack.c.l.s4 1934713408
        %v1505 = vunpack.c.0.s8 %v1504
        %v1506 = vlaneseq
        %v1507 = vshrl.u32 %v1506, 7
        %v1508 = vsub.s32 %v1505, %v1507
        %v1509 = vrot.slane %v1495, %v1508
        %v1510 = vcombine.low %v1454, %v1486
        %v1511 = vcombine.high %v1454, %v1486
        %v1512 = vcombine.low %v1461, %v1493
        %v1513 = vcombine.high %v1461, %v1493
        %v1514 = vcombine.low %v1470, %v1502
        %v1515 = vcombine.high %v1470, %v1502
        %v1516 = vcombine.low %v1477, %v1509
        %v1517 = vcombine.high %v1477, %v1509
        %v1518 = vcombine.low %v552, %v562
        %v1519 = vcombine.high %v552, %v562
        %v1521 = vunpack.c.l.s4 1983009808
        %v1522 = vunpack.c.0.s8 %v1521
        %v1523 = vlaneseq
        %v1524 = vshrl.u32 %v1523, 7
        %v1525 = vsub.s32 %v1522, %v1524
        %v1526 = vrot.slane %v1518, %v1525
        %v1528 = vunpack.c.l.s4 1983009808
        %v1529 = vunpack.c.0.s8 %v1528
        %v1530 = vlaneseq
        %v1531 = vshrl.u32 %v1530, 7
        %v1532 = vsub.s32 %v1529, %v1531
        %v1533 = vrot.slane %v1519, %v1532
        %v1534 = vcombine.low %v557, %v567
        %v1535 = vcombine.high %v557, %v567
        %v1537 = vunpack.c.l.s4 1983009808
        %v1538 = vunpack.c.0.s8 %v1537
        %v1539 = vlaneseq
        %v1540 = vshrl.u32 %v1539, 7
        %v1541 = vsub.s32 %v1538, %v1540
        %v1542 = vrot.slane %v1534, %v1541
        %v1544 = vunpack.c.l.s4 1983009808
        %v1545 = vunpack.c.0.s8 %v1544
        %v1546 = vlaneseq
        %v1547 = vshrl.u32 %v1546, 7
        %v1548 = vsub.s32 %v1545, %v1547
        %v1549 = vrot.slane %v1535, %v1548
        %v1550 = vcombine.low %v572, %v582
        %v1551 = vcombine.high %v572, %v582
        %v1553 = vunpack.c.l.s4 1983009808
        %v1554 = vunpack.c.0.s8 %v1553
        %v1555 = vlaneseq
        %v1556 = vshrl.u32 %v1555, 7
        %v1557 = vsub.s32 %v1554, %v1556
        %v1558 = vrot.slane %v1550, %v1557
        %v1560 = vunpack.c.l.s4 1983009808
        %v1561 = vunpack.c.0.s8 %v1560
        %v1562 = vlaneseq
        %v1563 = vshrl.u32 %v1562, 7
        %v1564 = vsub.s32 %v1561, %v1563
        %v1565 = vrot.slane %v1551, %v1564
        %v1566 = vcombine.low %v577, %v587
        %v1567 = vcombine.high %v577, %v587
        %v1569 = vunpack.c.l.s4 1983009808
        %v1570 = vunpack.c.0.s8 %v1569
        %v1571 = vlaneseq
        %v1572 = vshrl.u32 %v1571, 7
        %v1573 = vsub.s32 %v1570, %v1572
        %v1574 = vrot.slane %v1566, %v1573
        %v1576 = vunpack.c.l.s4 1983009808
        %v1577 = vunpack.c.0.s8 %v1576
        %v1578 = vlaneseq
        %v1579 = vshrl.u32 %v1578, 7
        %v1580 = vsub.s32 %v1577, %v1579
        %v1581 = vrot.slane %v1567, %v1580
        %v1582 = vcombine.low %v1526, %v1542
        %v1583 = vcombine.high %v1526, %v1542
        %v1585 = vunpack.c.l.s4 1934713408
        %v1586 = vunpack.c.0.s8 %v1585
        %v1587 = vlaneseq
        %v1588 = vshrl.u32 %v1587, 7
        %v1589 = vsub.s32 %v1586, %v1588
        %v1590 = vrot.slane %v1582, %v1589
        %v1592 = vunpack.c.l.s4 1934713408
        %v1593 = vunpack.c.0.s8 %v1592
        %v1594 = vlaneseq
        %v1595 = vshrl.u32 %v1594, 7
        %v1596 = vsub.s32 %v1593, %v1595
        %v1597 = vrot.slane %v1583, %v1596
        %v1598 = vcombine.low %v1533, %v1549
        %v1599 = vcombine.high %v1533, %v1549
        %v1601 = vunpack.c.l.s4 1934713408
        %v1602 = vunpack.c.0.s8 %v1601
        %v1603 = vlaneseq
        %v1604 = vshrl.u32 %v1603, 7
        %v1605 = vsub.s32 %v1602, %v1604
        %v1606 = vrot.slane %v1598, %v1605
        %v1608 = vunpack.c.l.s4 1934713408
        %v1609 = vunpack.c.0.s8 %v1608
        %v1610 = vlaneseq
        %v1611 = vshrl.u32 %v1610, 7
        %v1612 = vsub.s32 %v1609, %v1611
        %v1613 = vrot.slane %v1599, %v1612
        %v1614 = vcombine.low %v1558, %v1574
        %v1615 = vcombine.high %v1558, %v1574
        %v1617 = vunpack.c.l.s4 1934713408
        %v1618 = vunpack.c.0.s8 %v1617
        %v1619 = vlaneseq
        %v1620 = vshrl.u32 %v1619, 7
        %v1621 = vsub.s32 %v1618, %v1620
        %v1622 = vrot.slane %v1614, %v1621
        %v1624 = vunpack.c.l.s4 1934713408
        %v1625 = vunpack.c.0.s8 %v1624
        %v1626 = vlaneseq
        %v1627 = vshrl.u32 %v1626, 7
        %v1628 = vsub.s32 %v1625, %v1627
        %v1629 = vrot.slane %v1615, %v1628
        %v1630 = vcombine.low %v1565, %v1581
        %v1631 = vcombine.high %v1565, %v1581
        %v1633 = vunpack.c.l.s4 1934713408
        %v1634 = vunpack.c.0.s8 %v1633
        %v1635 = vlaneseq
        %v1636 = vshrl.u32 %v1635, 7
        %v1637 = vsub.s32 %v1634, %v1636
        %v1638 = vrot.slane %v1630, %v1637
        %v1640 = vunpack.c.l.s4 1934713408
        %v1641 = vunpack.c.0.s8 %v1640
        %v1642 = vlaneseq
        %v1643 = vshrl.u32 %v1642, 7
        %v1644 = vsub.s32 %v1641, %v1643
        %v1645 = vrot.slane %v1631, %v1644
        %v1646 = vcombine.low %v1590, %v1622
        %v1647 = vcombine.high %v1590, %v1622
        %v1648 = vcombine.low %v1597, %v1629
        %v1649 = vcombine.high %v1597, %v1629
        %v1650 = vcombine.low %v1606, %v1638
        %v1651 = vcombine.high %v1606, %v1638
        %v1652 = vcombine.low %v1613, %v1645
        %v1653 = vcombine.high %v1613, %v1645
        %v1654 = vcombine.low %v607, %v615
        %v1655 = vcombine.high %v607, %v615
        %v1657 = vunpack.c.l.s4 1983009808
        %v1658 = vunpack.c.0.s8 %v1657
        %v1659 = vlaneseq
        %v1660 = vshrl.u32 %v1659, 7
        %v1661 = vsub.s32 %v1658, %v1660
        %v1662 = vrot.slane %v1654, %v1661
        %v1664 = vunpack.c.l.s4 1983009808
        %v1665 = vunpack.c.0.s8 %v1664
        %v1666 = vlaneseq
        %v1667 = vshrl.u32 %v1666, 7
        %v1668 = vsub.s32 %v1665, %v1667
        %v1669 = vrot.slane %v1655, %v1668
        %v1670 = vcombine.low %v611, %v619
        %v1671 = vcombine.high %v611, %v619
        %v1673 = vunpack.c.l.s4 1983009808
        %v1674 = vunpack.c.0.s8 %v1673
        %v1675 = vlaneseq
        %v1676 = vshrl.u32 %v1675, 7
        %v1677 = vsub.s32 %v1674, %v1676
        %v1678 = vrot.slane %v1670, %v1677
        %v1680 = vunpack.c.l.s4 1983009808
        %v1681 = vunpack.c.0.s8 %v1680
        %v1682 = vlaneseq
        %v1683 = vshrl.u32 %v1682, 7
        %v1684 = vsub.s32 %v1681, %v1683
        %v1685 = vrot.slane %v1671, %v1684
        %v1686 = vcombine.low %v623, %v631
        %v1687 = vcombine.high %v623, %v631
        %v1689 = vunpack.c.l.s4 1983009808
        %v1690 = vunpack.c.0.s8 %v1689
        %v1691 = vlaneseq
        %v1692 = vshrl.u32 %v1691, 7
        %v1693 = vsub.s32 %v1690, %v1692
        %v1694 = vrot.slane %v1686, %v1693
        %v1696 = vunpack.c.l.s4 1983009808
        %v1697 = vunpack.c.0.s8 %v1696
        %v1698 = vlaneseq
        %v1699 = vshrl.u32 %v1698, 7
        %v1700 = vsub.s32 %v1697, %v1699
        %v1701 = vrot.slane %v1687, %v1700
        %v1702 = vcombine.low %v627, %v635
        %v1703 = vcombine.high %v627, %v635
        %v1705 = vunpack.c.l.s4 1983009808
        %v1706 = vunpack.c.0.s8 %v1705
        %v1707 = vlaneseq
        %v1708 = vshrl.u32 %v1707, 7
        %v1709 = vsub.s32 %v1706, %v1708
        %v1710 = vrot.slane %v1702, %v1709
        %v1712 = vunpack.c.l.s4 1983009808
        %v1713 = vunpack.c.0.s8 %v1712
        %v1714 = vlaneseq
        %v1715 = vshrl.u32 %v1714, 7
        %v1716 = vsub.s32 %v1713, %v1715
        %v1717 = vrot.slane %v1703, %v1716
        %v1718 = vcombine.low %v1662, %v1678
        %v1719 = vcombine.high %v1662, %v1678
        %v1721 = vunpack.c.l.s4 1934713408
        %v1722 = vunpack.c.0.s8 %v1721
        %v1723 = vlaneseq
        %v1724 = vshrl.u32 %v1723, 7
        %v1725 = vsub.s32 %v1722, %v1724
        %v1726 = vrot.slane %v1718, %v1725
        %v1728 = vunpack.c.l.s4 1934713408
        %v1729 = vunpack.c.0.s8 %v1728
        %v1730 = vlaneseq
        %v1731 = vshrl.u32 %v1730, 7
        %v1732 = vsub.s32 %v1729, %v1731
        %v1733 = vrot.slane %v1719, %v1732
        %v1734 = vcombine.low %v1669, %v1685
        %v1735 = vcombine.high %v1669, %v1685
        %v1737 = vunpack.c.l.s4 1934713408
        %v1738 = vunpack.c.0.s8 %v1737
        %v1739 = vlaneseq
        %v1740 = vshrl.u32 %v1739, 7
        %v1741 = vsub.s32 %v1738, %v1740
        %v1742 = vrot.slane %v1734, %v1741
        %v1744 = vunpack.c.l.s4 1934713408
        %v1745 = vunpack.c.0.s8 %v1744
        %v1746 = vlaneseq
        %v1747 = vshrl.u32 %v1746, 7
        %v1748 = vsub.s32 %v1745, %v1747
        %v1749 = vrot.slane %v1735, %v1748
        %v1750 = vcombine.low %v1694, %v1710
        %v1751 = vcombine.high %v1694, %v1710
        %v1753 = vunpack.c.l.s4 1934713408
        %v1754 = vunpack.c.0.s8 %v1753
        %v1755 = vlaneseq
        %v1756 = vshrl.u32 %v1755, 7
        %v1757 = vsub.s32 %v1754, %v1756
        %v1758 = vrot.slane %v1750, %v1757
        %v1760 = vunpack.c.l.s4 1934713408
        %v1761 = vunpack.c.0.s8 %v1760
        %v1762 = vlaneseq
        %v1763 = vshrl.u32 %v1762, 7
        %v1764 = vsub.s32 %v1761, %v1763
        %v1765 = vrot.slane %v1751, %v1764
        %v1766 = vcombine.low %v1701, %v1717
        %v1767 = vcombine.high %v1701, %v1717
        %v1769 = vunpack.c.l.s4 1934713408
        %v1770 = vunpack.c.0.s8 %v1769
        %v1771 = vlaneseq
        %v1772 = vshrl.u32 %v1771, 7
        %v1773 = vsub.s32 %v1770, %v1772
        %v1774 = vrot.slane %v1766, %v1773
        %v1776 = vunpack.c.l.s4 1934713408
        %v1777 = vunpack.c.0.s8 %v1776
        %v1778 = vlaneseq
        %v1779 = vshrl.u32 %v1778, 7
        %v1780 = vsub.s32 %v1777, %v1779
        %v1781 = vrot.slane %v1767, %v1780
        %v1782 = vcombine.low %v1726, %v1758
        %v1783 = vcombine.high %v1726, %v1758
        %v1784 = vcombine.low %v1733, %v1765
        %v1785 = vcombine.high %v1733, %v1765
        %v1786 = vcombine.low %v1742, %v1774
        %v1787 = vcombine.high %v1742, %v1774
        %v1788 = vcombine.low %v1749, %v1781
        %v1789 = vcombine.high %v1749, %v1781
        %v1790 = vcombine.low %v655, %v663
        %v1791 = vcombine.high %v655, %v663
        %v1793 = vunpack.c.l.s4 1983009808
        %v1794 = vunpack.c.0.s8 %v1793
        %v1795 = vlaneseq
        %v1796 = vshrl.u32 %v1795, 7
        %v1797 = vsub.s32 %v1794, %v1796
        %v1798 = vrot.slane %v1790, %v1797
        %v1800 = vunpack.c.l.s4 1983009808
        %v1801 = vunpack.c.0.s8 %v1800
        %v1802 = vlaneseq
        %v1803 = vshrl.u32 %v1802, 7
        %v1804 = vsub.s32 %v1801, %v1803
        %v1805 = vrot.slane %v1791, %v1804
        %v1806 = vcombine.low %v659, %v667
        %v1807 = vcombine.high %v659, %v667
        %v1809 = vunpack.c.l.s4 1983009808
        %v1810 = vunpack.c.0.s8 %v1809
        %v1811 = vlaneseq
        %v1812 = vshrl.u32 %v1811, 7
        %v1813 = vsub.s32 %v1810, %v1812
        %v1814 = vrot.slane %v1806, %v1813
        %v1816 = vunpack.c.l.s4 1983009808
        %v1817 = vunpack.c.0.s8 %v1816
        %v1818 = vlaneseq
        %v1819 = vshrl.u32 %v1818, 7
        %v1820 = vsub.s32 %v1817, %v1819
        %v1821 = vrot.slane %v1807, %v1820
        %v1822 = vcombine.low %v671, %v679
        %v1823 = vcombine.high %v671, %v679
        %v1825 = vunpack.c.l.s4 1983009808
        %v1826 = vunpack.c.0.s8 %v1825
        %v1827 = vlaneseq
        %v1828 = vshrl.u32 %v1827, 7
        %v1829 = vsub.s32 %v1826, %v1828
        %v1830 = vrot.slane %v1822, %v1829
        %v1832 = vunpack.c.l.s4 1983009808
        %v1833 = vunpack.c.0.s8 %v1832
        %v1834 = vlaneseq
        %v1835 = vshrl.u32 %v1834, 7
        %v1836 = vsub.s32 %v1833, %v1835
        %v1837 = vrot.slane %v1823, %v1836
        %v1838 = vcombine.low %v675, %v683
        %v1839 = vcombine.high %v675, %v683
        %v1841 = vunpack.c.l.s4 1983009808
        %v1842 = vunpack.c.0.s8 %v1841
        %v1843 = vlaneseq
        %v1844 = vshrl.u32 %v1843, 7
        %v1845 = vsub.s32 %v1842, %v1844
        %v1846 = vrot.slane %v1838, %v1845
        %v1848 = vunpack.c.l.s4 1983009808
        %v1849 = vunpack.c.0.s8 %v1848
        %v1850 = vlaneseq
        %v1851 = vshrl.u32 %v1850, 7
        %v1852 = vsub.s32 %v1849, %v1851
        %v1853 = vrot.slane %v1839, %v1852
        %v1854 = vcombine.low %v1798, %v1814
        %v1855 = vcombine.high %v1798, %v1814
        %v1857 = vunpack.c.l.s4 1934713408
        %v1858 = vunpack.c.0.s8 %v1857
        %v1859 = vlaneseq
        %v1860 = vshrl.u32 %v1859, 7
        %v1861 = vsub.s32 %v1858, %v1860
        %v1862 = vrot.slane %v1854, %v1861
        %v1864 = vunpack.c.l.s4 1934713408
        %v1865 = vunpack.c.0.s8 %v1864
        %v1866 = vlaneseq
        %v1867 = vshrl.u32 %v1866, 7
        %v1868 = vsub.s32 %v1865, %v1867
        %v1869 = vrot.slane %v1855, %v1868
        %v1870 = vcombine.low %v1805, %v1821
        %v1871 = vcombine.high %v1805, %v1821
        %v1873 = vunpack.c.l.s4 1934713408
        %v1874 = vunpack.c.0.s8 %v1873
        %v1875 = vlaneseq
        %v1876 = vshrl.u32 %v1875, 7
        %v1877 = vsub.s32 %v1874, %v1876
        %v1878 = vrot.slane %v1870, %v1877
        %v1880 = vunpack.c.l.s4 1934713408
        %v1881 = vunpack.c.0.s8 %v1880
        %v1882 = vlaneseq
        %v1883 = vshrl.u32 %v1882, 7
        %v1884 = vsub.s32 %v1881, %v1883
        %v1885 = vrot.slane %v1871, %v1884
        %v1886 = vcombine.low %v1830, %v1846
        %v1887 = vcombine.high %v1830, %v1846
        %v1889 = vunpack.c.l.s4 1934713408
        %v1890 = vunpack.c.0.s8 %v1889
        %v1891 = vlaneseq
        %v1892 = vshrl.u32 %v1891, 7
        %v1893 = vsub.s32 %v1890, %v1892
        %v1894 = vrot.slane %v1886, %v1893
        %v1896 = vunpack.c.l.s4 1934713408
        %v1897 = vunpack.c.0.s8 %v1896
        %v1898 = vlaneseq
        %v1899 = vshrl.u32 %v1898, 7
        %v1900 = vsub.s32 %v1897, %v1899
        %v1901 = vrot.slane %v1887, %v1900
        %v1902 = vcombine.low %v1837, %v1853
        %v1903 = vcombine.high %v1837, %v1853
        %v1905 = vunpack.c.l.s4 1934713408
        %v1906 = vunpack.c.0.s8 %v1905
        %v1907 = vlaneseq
        %v1908 = vshrl.u32 %v1907, 7
        %v1909 = vsub.s32 %v1906, %v1908
        %v1910 = vrot.slane %v1902, %v1909
        %v1912 = vunpack.c.l.s4 1934713408
        %v1913 = vunpack.c.0.s8 %v1912
        %v1914 = vlaneseq
        %v1915 = vshrl.u32 %v1914, 7
        %v1916 = vsub.s32 %v1913, %v1915
        %v1917 = vrot.slane %v1903, %v1916
        %v1918 = vcombine.low %v1862, %v1894
        %v1919 = vcombine.high %v1862, %v1894
        %v1920 = vcombine.low %v1869, %v1901
        %v1921 = vcombine.high %v1869, %v1901
        %v1922 = vcombine.low %v1878, %v1910
        %v1923 = vcombine.high %v1878, %v1910
        %v1924 = vcombine.low %v1885, %v1917
        %v1925 = vcombine.high %v1885, %v1917
        %v1926 = vcombine.low %v253, %v259
        %v1927 = vcombine.high %v253, %v259
        %v1929 = vunpack.c.l.s4 1983009808
        %v1930 = vunpack.c.0.s8 %v1929
        %v1931 = vlaneseq
        %v1932 = vshrl.u32 %v1931, 7
        %v1933 = vsub.s32 %v1930, %v1932
        %v1934 = vrot.slane %v1926, %v1933
        %v1936 = vunpack.c.l.s4 1983009808
        %v1937 = vunpack.c.0.s8 %v1936
        %v1938 = vlaneseq
        %v1939 = vshrl.u32 %v1938, 7
        %v1940 = vsub.s32 %v1937, %v1939
        %v1941 = vrot.slane %v1927, %v1940
        %v1942 = vcombine.low %v256, %v262
        %v1943 = vcombine.high %v256, %v262
        %v1945 = vunpack.c.l.s4 1983009808
        %v1946 = vunpack.c.0.s8 %v1945
        %v1947 = vlaneseq
        %v1948 = vshrl.u32 %v1947, 7
        %v1949 = vsub.s32 %v1946, %v1948
        %v1950 = vrot.slane %v1942, %v1949
        %v1952 = vunpack.c.l.s4 1983009808
        %v1953 = vunpack.c.0.s8 %v1952
        %v1954 = vlaneseq
        %v1955 = vshrl.u32 %v1954, 7
        %v1956 = vsub.s32 %v1953, %v1955
        %v1957 = vrot.slane %v1943, %v1956
        %v1958 = vcombine.low %v265, %v271
        %v1959 = vcombine.high %v265, %v271
        %v1961 = vunpack.c.l.s4 1983009808
        %v1962 = vunpack.c.0.s8 %v1961
        %v1963 = vlaneseq
        %v1964 = vshrl.u32 %v1963, 7
        %v1965 = vsub.s32 %v1962, %v1964
        %v1966 = vrot.slane %v1958, %v1965
        %v1968 = vunpack.c.l.s4 1983009808
        %v1969 = vunpack.c.0.s8 %v1968
        %v1970 = vlaneseq
        %v1971 = vshrl.u32 %v1970, 7
        %v1972 = vsub.s32 %v1969, %v1971
        %v1973 = vrot.slane %v1959, %v1972
        %v1974 = vcombine.low %v268, %v274
        %v1975 = vcombine.high %v268, %v274
        %v1977 = vunpack.c.l.s4 1983009808
        %v1978 = vunpack.c.0.s8 %v1977
        %v1979 = vlaneseq
        %v1980 = vshrl.u32 %v1979, 7
        %v1981 = vsub.s32 %v1978, %v1980
        %v1982 = vrot.slane %v1974, %v1981
        %v1984 = vunpack.c.l.s4 1983009808
        %v1985 = vunpack.c.0.s8 %v1984
        %v1986 = vlaneseq
        %v1987 = vshrl.u32 %v1986, 7
        %v1988 = vsub.s32 %v1985, %v1987
        %v1989 = vrot.slane %v1975, %v1988
        %v1990 = vcombine.low %v1934, %v1950
        %v1991 = vcombine.high %v1934, %v1950
        %v1993 = vunpack.c.l.s4 1934713408
        %v1994 = vunpack.c.0.s8 %v1993
        %v1995 = vlaneseq
        %v1996 = vshrl.u32 %v1995, 7
        %v1997 = vsub.s32 %v1994, %v1996
        %v1998 = vrot.slane %v1990, %v1997
        %v2000 = vunpack.c.l.s4 1934713408
        %v2001 = vunpack.c.0.s8 %v2000
        %v2002 = vlaneseq
        %v2003 = vshrl.u32 %v2002, 7
        %v2004 = vsub.s32 %v2001, %v2003
        %v2005 = vrot.slane %v1991, %v2004
        %v2006 = vcombine.low %v1941, %v1957
        %v2007 = vcombine.high %v1941, %v1957
        %v2009 = vunpack.c.l.s4 1934713408
        %v2010 = vunpack.c.0.s8 %v2009
        %v2011 = vlaneseq
        %v2012 = vshrl.u32 %v2011, 7
        %v2013 = vsub.s32 %v2010, %v2012
        %v2014 = vrot.slane %v2006, %v2013
        %v2016 = vunpack.c.l.s4 1934713408
        %v2017 = vunpack.c.0.s8 %v2016
        %v2018 = vlaneseq
        %v2019 = vshrl.u32 %v2018, 7
        %v2020 = vsub.s32 %v2017, %v2019
        %v2021 = vrot.slane %v2007, %v2020
        %v2022 = vcombine.low %v1966, %v1982
        %v2023 = vcombine.high %v1966, %v1982
        %v2025 = vunpack.c.l.s4 1934713408
        %v2026 = vunpack.c.0.s8 %v2025
        %v2027 = vlaneseq
        %v2028 = vshrl.u32 %v2027, 7
        %v2029 = vsub.s32 %v2026, %v2028
        %v2030 = vrot.slane %v2022, %v2029
        %v2032 = vunpack.c.l.s4 1934713408
        %v2033 = vunpack.c.0.s8 %v2032
        %v2034 = vlaneseq
        %v2035 = vshrl.u32 %v2034, 7
        %v2036 = vsub.s32 %v2033, %v2035
        %v2037 = vrot.slane %v2023, %v2036
        %v2038 = vcombine.low %v1973, %v1989
        %v2039 = vcombine.high %v1973, %v1989
        %v2041 = vunpack.c.l.s4 1934713408
        %v2042 = vunpack.c.0.s8 %v2041
        %v2043 = vlaneseq
        %v2044 = vshrl.u32 %v2043, 7
        %v2045 = vsub.s32 %v2042, %v2044
        %v2046 = vrot.slane %v2038, %v2045
        %v2048 = vunpack.c.l.s4 1934713408
        %v2049 = vunpack.c.0.s8 %v2048
        %v2050 = vlaneseq
        %v2051 = vshrl.u32 %v2050, 7
        %v2052 = vsub.s32 %v2049, %v2051
        %v2053 = vrot.slane %v2039, %v2052
        %v2054 = vcombine.low %v1998, %v2030
        %v2055 = vcombine.high %v1998, %v2030
        %v2056 = vcombine.low %v2005, %v2037
        %v2057 = vcombine.high %v2005, %v2037
        %v2058 = vcombine.low %v2014, %v2046
        %v2059 = vcombine.high %v2014, %v2046
        %v2060 = vcombine.low %v2021, %v2053
        %v2061 = vcombine.high %v2021, %v2053
        %v2062 = vcombine.low %v295, %v303
        %v2063 = vcombine.high %v295, %v303
        %v2065 = vunpack.c.l.s4 1983009808
        %v2066 = vunpack.c.0.s8 %v2065
        %v2067 = vlaneseq
        %v2068 = vshrl.u32 %v2067, 7
        %v2069 = vsub.s32 %v2066, %v2068
        %v2070 = vrot.slane %v2062, %v2069
        %v2072 = vunpack.c.l.s4 1983009808
        %v2073 = vunpack.c.0.s8 %v2072
        %v2074 = vlaneseq
        %v2075 = vshrl.u32 %v2074, 7
        %v2076 = vsub.s32 %v2073, %v2075
        %v2077 = vrot.slane %v2063, %v2076
        %v2078 = vcombine.low %v299, %v307
        %v2079 = vcombine.high %v299, %v307
        %v2081 = vunpack.c.l.s4 1983009808
        %v2082 = vunpack.c.0.s8 %v2081
        %v2083 = vlaneseq
        %v2084 = vshrl.u32 %v2083, 7
        %v2085 = vsub.s32 %v2082, %v2084
        %v2086 = vrot.slane %v2078, %v2085
        %v2088 = vunpack.c.l.s4 1983009808
        %v2089 = vunpack.c.0.s8 %v2088
        %v2090 = vlaneseq
        %v2091 = vshrl.u32 %v2090, 7
        %v2092 = vsub.s32 %v2089, %v2091
        %v2093 = vrot.slane %v2079, %v2092
        %v2094 = vcombine.low %v311, %v319
        %v2095 = vcombine.high %v311, %v319
        %v2097 = vunpack.c.l.s4 1983009808
        %v2098 = vunpack.c.0.s8 %v2097
        %v2099 = vlaneseq
        %v2100 = vshrl.u32 %v2099, 7
        %v2101 = vsub.s32 %v2098, %v2100
        %v2102 = vrot.slane %v2094, %v2101
        %v2104 = vunpack.c.l.s4 1983009808
        %v2105 = vunpack.c.0.s8 %v2104
        %v2106 = vlaneseq
        %v2107 = vshrl.u32 %v2106, 7
        %v2108 = vsub.s32 %v2105, %v2107
        %v2109 = vrot.slane %v2095, %v2108
        %v2110 = vcombine.low %v315, %v323
        %v2111 = vcombine.high %v315, %v323
        %v2113 = vunpack.c.l.s4 1983009808
        %v2114 = vunpack.c.0.s8 %v2113
        %v2115 = vlaneseq
        %v2116 = vshrl.u32 %v2115, 7
        %v2117 = vsub.s32 %v2114, %v2116
        %v2118 = vrot.slane %v2110, %v2117
        %v2120 = vunpack.c.l.s4 1983009808
        %v2121 = vunpack.c.0.s8 %v2120
        %v2122 = vlaneseq
        %v2123 = vshrl.u32 %v2122, 7
        %v2124 = vsub.s32 %v2121, %v2123
        %v2125 = vrot.slane %v2111, %v2124
        %v2126 = vcombine.low %v2070, %v2086
        %v2127 = vcombine.high %v2070, %v2086
        %v2129 = vunpack.c.l.s4 1934713408
        %v2130 = vunpack.c.0.s8 %v2129
        %v2131 = vlaneseq
        %v2132 = vshrl.u32 %v2131, 7
        %v2133 = vsub.s32 %v2130, %v2132
        %v2134 = vrot.slane %v2126, %v2133
        %v2136 = vunpack.c.l.s4 1934713408
        %v2137 = vunpack.c.0.s8 %v2136
        %v2138 = vlaneseq
        %v2139 = vshrl.u32 %v2138, 7
        %v2140 = vsub.s32 %v2137, %v2139
        %v2141 = vrot.slane %v2127, %v2140
        %v2142 = vcombine.low %v2077, %v2093
        %v2143 = vcombine.high %v2077, %v2093
        %v2145 = vunpack.c.l.s4 1934713408
        %v2146 = vunpack.c.0.s8 %v2145
        %v2147 = vlaneseq
        %v2148 = vshrl.u32 %v2147, 7
        %v2149 = vsub.s32 %v2146, %v2148
        %v2150 = vrot.slane %v2142, %v2149
        %v2152 = vunpack.c.l.s4 1934713408
        %v2153 = vunpack.c.0.s8 %v2152
        %v2154 = vlaneseq
        %v2155 = vshrl.u32 %v2154, 7
        %v2156 = vsub.s32 %v2153, %v2155
        %v2157 = vrot.slane %v2143, %v2156
        %v2158 = vcombine.low %v2102, %v2118
        %v2159 = vcombine.high %v2102, %v2118
        %v2161 = vunpack.c.l.s4 1934713408
        %v2162 = vunpack.c.0.s8 %v2161
        %v2163 = vlaneseq
        %v2164 = vshrl.u32 %v2163, 7
        %v2165 = vsub.s32 %v2162, %v2164
        %v2166 = vrot.slane %v2158, %v2165
        %v2168 = vunpack.c.l.s4 1934713408
        %v2169 = vunpack.c.0.s8 %v2168
        %v2170 = vlaneseq
        %v2171 = vshrl.u32 %v2170, 7
        %v2172 = vsub.s32 %v2169, %v2171
        %v2173 = vrot.slane %v2159, %v2172
        %v2174 = vcombine.low %v2109, %v2125
        %v2175 = vcombine.high %v2109, %v2125
        %v2177 = vunpack.c.l.s4 1934713408
        %v2178 = vunpack.c.0.s8 %v2177
        %v2179 = vlaneseq
        %v2180 = vshrl.u32 %v2179, 7
        %v2181 = vsub.s32 %v2178, %v2180
        %v2182 = vrot.slane %v2174, %v2181
        %v2184 = vunpack.c.l.s4 1934713408
        %v2185 = vunpack.c.0.s8 %v2184
        %v2186 = vlaneseq
        %v2187 = vshrl.u32 %v2186, 7
        %v2188 = vsub.s32 %v2185, %v2187
        %v2189 = vrot.slane %v2175, %v2188
        %v2190 = vcombine.low %v2134, %v2166
        %v2191 = vcombine.high %v2134, %v2166
        %v2192 = vcombine.low %v2141, %v2173
        %v2193 = vcombine.high %v2141, %v2173
        %v2194 = vcombine.low %v2150, %v2182
        %v2195 = vcombine.high %v2150, %v2182
        %v2196 = vcombine.low %v2157, %v2189
        %v2197 = vcombine.high %v2157, %v2189
        %v2198 = vcombine.low %v343, %v351
        %v2199 = vcombine.high %v343, %v351
        %v2201 = vunpack.c.l.s4 1983009808
        %v2202 = vunpack.c.0.s8 %v2201
        %v2203 = vlaneseq
        %v2204 = vshrl.u32 %v2203, 7
        %v2205 = vsub.s32 %v2202, %v2204
        %v2206 = vrot.slane %v2198, %v2205
        %v2208 = vunpack.c.l.s4 1983009808
        %v2209 = vunpack.c.0.s8 %v2208
        %v2210 = vlaneseq
        %v2211 = vshrl.u32 %v2210, 7
        %v2212 = vsub.s32 %v2209, %v2211
        %v2213 = vrot.slane %v2199, %v2212
        %v2214 = vcombine.low %v347, %v355
        %v2215 = vcombine.high %v347, %v355
        %v2217 = vunpack.c.l.s4 1983009808
        %v2218 = vunpack.c.0.s8 %v2217
        %v2219 = vlaneseq
        %v2220 = vshrl.u32 %v2219, 7
        %v2221 = vsub.s32 %v2218, %v2220
        %v2222 = vrot.slane %v2214, %v2221
        %v2224 = vunpack.c.l.s4 1983009808
        %v2225 = vunpack.c.0.s8 %v2224
        %v2226 = vlaneseq
        %v2227 = vshrl.u32 %v2226, 7
        %v2228 = vsub.s32 %v2225, %v2227
        %v2229 = vrot.slane %v2215, %v2228
        %v2230 = vcombine.low %v359, %v367
        %v2231 = vcombine.high %v359, %v367
        %v2233 = vunpack.c.l.s4 1983009808
        %v2234 = vunpack.c.0.s8 %v2233
        %v2235 = vlaneseq
        %v2236 = vshrl.u32 %v2235, 7
        %v2237 = vsub.s32 %v2234, %v2236
        %v2238 = vrot.slane %v2230, %v2237
        %v2240 = vunpack.c.l.s4 1983009808
        %v2241 = vunpack.c.0.s8 %v2240
        %v2242 = vlaneseq
        %v2243 = vshrl.u32 %v2242, 7
        %v2244 = vsub.s32 %v2241, %v2243
        %v2245 = vrot.slane %v2231, %v2244
        %v2246 = vcombine.low %v363, %v371
        %v2247 = vcombine.high %v363, %v371
        %v2249 = vunpack.c.l.s4 1983009808
        %v2250 = vunpack.c.0.s8 %v2249
        %v2251 = vlaneseq
        %v2252 = vshrl.u32 %v2251, 7
        %v2253 = vsub.s32 %v2250, %v2252
        %v2254 = vrot.slane %v2246, %v2253
        %v2256 = vunpack.c.l.s4 1983009808
        %v2257 = vunpack.c.0.s8 %v2256
        %v2258 = vlaneseq
        %v2259 = vshrl.u32 %v2258, 7
        %v2260 = vsub.s32 %v2257, %v2259
        %v2261 = vrot.slane %v2247, %v2260
        %v2262 = vcombine.low %v2206, %v2222
        %v2263 = vcombine.high %v2206, %v2222
        %v2265 = vunpack.c.l.s4 1934713408
        %v2266 = vunpack.c.0.s8 %v2265
        %v2267 = vlaneseq
        %v2268 = vshrl.u32 %v2267, 7
        %v2269 = vsub.s32 %v2266, %v2268
        %v2270 = vrot.slane %v2262, %v2269
        %v2272 = vunpack.c.l.s4 1934713408
        %v2273 = vunpack.c.0.s8 %v2272
        %v2274 = vlaneseq
        %v2275 = vshrl.u32 %v2274, 7
        %v2276 = vsub.s32 %v2273, %v2275
        %v2277 = vrot.slane %v2263, %v2276
        %v2278 = vcombine.low %v2213, %v2229
        %v2279 = vcombine.high %v2213, %v2229
        %v2281 = vunpack.c.l.s4 1934713408
        %v2282 = vunpack.c.0.s8 %v2281
        %v2283 = vlaneseq
        %v2284 = vshrl.u32 %v2283, 7
        %v2285 = vsub.s32 %v2282, %v2284
        %v2286 = vrot.slane %v2278, %v2285
        %v2288 = vunpack.c.l.s4 1934713408
        %v2289 = vunpack.c.0.s8 %v2288
        %v2290 = vlaneseq
        %v2291 = vshrl.u32 %v2290, 7
        %v2292 = vsub.s32 %v2289, %v2291
        %v2293 = vrot.slane %v2279, %v2292
        %v2294 = vcombine.low %v2238, %v2254
        %v2295 = vcombine.high %v2238, %v2254
        %v2297 = vunpack.c.l.s4 1934713408
        %v2298 = vunpack.c.0.s8 %v2297
        %v2299 = vlaneseq
        %v2300 = vshrl.u32 %v2299, 7
        %v2301 = vsub.s32 %v2298, %v2300
        %v2302 = vrot.slane %v2294, %v2301
        %v2304 = vunpack.c.l.s4 1934713408
        %v2305 = vunpack.c.0.s8 %v2304
        %v2306 = vlaneseq
        %v2307 = vshrl.u32 %v2306, 7
        %v2308 = vsub.s32 %v2305, %v2307
        %v2309 = vrot.slane %v2295, %v2308
        %v2310 = vcombine.low %v2245, %v2261
        %v2311 = vcombine.high %v2245, %v2261
        %v2313 = vunpack.c.l.s4 1934713408
        %v2314 = vunpack.c.0.s8 %v2313
        %v2315 = vlaneseq
        %v2316 = vshrl.u32 %v2315, 7
        %v2317 = vsub.s32 %v2314, %v2316
        %v2318 = vrot.slane %v2310, %v2317
        %v2320 = vunpack.c.l.s4 1934713408
        %v2321 = vunpack.c.0.s8 %v2320
        %v2322 = vlaneseq
        %v2323 = vshrl.u32 %v2322, 7
        %v2324 = vsub.s32 %v2321, %v2323
        %v2325 = vrot.slane %v2311, %v2324
        %v2326 = vcombine.low %v2270, %v2302
        %v2327 = vcombine.high %v2270, %v2302
        %v2328 = vcombine.low %v2277, %v2309
        %v2329 = vcombine.high %v2277, %v2309
        %v2330 = vcombine.low %v2286, %v2318
        %v2331 = vcombine.high %v2286, %v2318
        %v2332 = vcombine.low %v2293, %v2325
        %v2333 = vcombine.high %v2293, %v2325
        %v2334 = vcombine.low %v401, %v411
        %v2335 = vcombine.high %v401, %v411
        %v2337 = vunpack.c.l.s4 1983009808
        %v2338 = vunpack.c.0.s8 %v2337
        %v2339 = vlaneseq
        %v2340 = vshrl.u32 %v2339, 7
        %v2341 = vsub.s32 %v2338, %v2340
        %v2342 = vrot.slane %v2334, %v2341
        %v2344 = vunpack.c.l.s4 1983009808
        %v2345 = vunpack.c.0.s8 %v2344
        %v2346 = vlaneseq
        %v2347 = vshrl.u32 %v2346, 7
        %v2348 = vsub.s32 %v2345, %v2347
        %v2349 = vrot.slane %v2335, %v2348
        %v2350 = vcombine.low %v406, %v416
        %v2351 = vcombine.high %v406, %v416
        %v2353 = vunpack.c.l.s4 1983009808
        %v2354 = vunpack.c.0.s8 %v2353
        %v2355 = vlaneseq
        %v2356 = vshrl.u32 %v2355, 7
        %v2357 = vsub.s32 %v2354, %v2356
        %v2358 = vrot.slane %v2350, %v2357
        %v2360 = vunpack.c.l.s4 1983009808
        %v2361 = vunpack.c.0.s8 %v2360
        %v2362 = vlaneseq
        %v2363 = vshrl.u32 %v2362, 7
        %v2364 = vsub.s32 %v2361, %v2363
        %v2365 = vrot.slane %v2351, %v2364
        %v2366 = vcombine.low %v421, %v431
        %v2367 = vcombine.high %v421, %v431
        %v2369 = vunpack.c.l.s4 1983009808
        %v2370 = vunpack.c.0.s8 %v2369
        %v2371 = vlaneseq
        %v2372 = vshrl.u32 %v2371, 7
        %v2373 = vsub.s32 %v2370, %v2372
        %v2374 = vrot.slane %v2366, %v2373
        %v2376 = vunpack.c.l.s4 1983009808
        %v2377 = vunpack.c.0.s8 %v2376
        %v2378 = vlaneseq
        %v2379 = vshrl.u32 %v2378, 7
        %v2380 = vsub.s32 %v2377, %v2379
        %v2381 = vrot.slane %v2367, %v2380
        %v2382 = vcombine.low %v426, %v436
        %v2383 = vcombine.high %v426, %v436
        %v2385 = vunpack.c.l.s4 1983009808
        %v2386 = vunpack.c.0.s8 %v2385
        %v2387 = vlaneseq
        %v2388 = vshrl.u32 %v2387, 7
        %v2389 = vsub.s32 %v2386, %v2388
        %v2390 = vrot.slane %v2382, %v2389
        %v2392 = vunpack.c.l.s4 1983009808
        %v2393 = vunpack.c.0.s8 %v2392
        %v2394 = vlaneseq
        %v2395 = vshrl.u32 %v2394, 7
        %v2396 = vsub.s32 %v2393, %v2395
        %v2397 = vrot.slane %v2383, %v2396
        %v2398 = vcombine.low %v2342, %v2358
        %v2399 = vcombine.high %v2342, %v2358
        %v2401 = vunpack.c.l.s4 1934713408
        %v2402 = vunpack.c.0.s8 %v2401
        %v2403 = vlaneseq
        %v2404 = vshrl.u32 %v2403, 7
        %v2405 = vsub.s32 %v2402, %v2404
        %v2406 = vrot.slane %v2398, %v2405
        %v2408 = vunpack.c.l.s4 1934713408
        %v2409 = vunpack.c.0.s8 %v2408
        %v2410 = vlaneseq
        %v2411 = vshrl.u32 %v2410, 7
        %v2412 = vsub.s32 %v2409, %v2411
        %v2413 = vrot.slane %v2399, %v2412
        %v2414 = vcombine.low %v2349, %v2365
        %v2415 = vcombine.high %v2349, %v2365
        %v2417 = vunpack.c.l.s4 1934713408
        %v2418 = vunpack.c.0.s8 %v2417
        %v2419 = vlaneseq
        %v2420 = vshrl.u32 %v2419, 7
        %v2421 = vsub.s32 %v2418, %v2420
        %v2422 = vrot.slane %v2414, %v2421
        %v2424 = vunpack.c.l.s4 1934713408
        %v2425 = vunpack.c.0.s8 %v2424
        %v2426 = vlaneseq
        %v2427 = vshrl.u32 %v2426, 7
        %v2428 = vsub.s32 %v2425, %v2427
        %v2429 = vrot.slane %v2415, %v2428
        %v2430 = vcombine.low %v2374, %v2390
        %v2431 = vcombine.high %v2374, %v2390
        %v2433 = vunpack.c.l.s4 1934713408
        %v2434 = vunpack.c.0.s8 %v2433
        %v2435 = vlaneseq
        %v2436 = vshrl.u32 %v2435, 7
        %v2437 = vsub.s32 %v2434, %v2436
        %v2438 = vrot.slane %v2430, %v2437
        %v2440 = vunpack.c.l.s4 1934713408
        %v2441 = vunpack.c.0.s8 %v2440
        %v2442 = vlaneseq
        %v2443 = vshrl.u32 %v2442, 7
        %v2444 = vsub.s32 %v2441, %v2443
        %v2445 = vrot.slane %v2431, %v2444
        %v2446 = vcombine.low %v2381, %v2397
        %v2447 = vcombine.high %v2381, %v2397
        %v2449 = vunpack.c.l.s4 1934713408
        %v2450 = vunpack.c.0.s8 %v2449
        %v2451 = vlaneseq
        %v2452 = vshrl.u32 %v2451, 7
        %v2453 = vsub.s32 %v2450, %v2452
        %v2454 = vrot.slane %v2446, %v2453
        %v2456 = vunpack.c.l.s4 1934713408
        %v2457 = vunpack.c.0.s8 %v2456
        %v2458 = vlaneseq
        %v2459 = vshrl.u32 %v2458, 7
        %v2460 = vsub.s32 %v2457, %v2459
        %v2461 = vrot.slane %v2447, %v2460
        %v2462 = vcombine.low %v2406, %v2438
        %v2463 = vcombine.high %v2406, %v2438
        %v2464 = vcombine.low %v2413, %v2445
        %v2465 = vcombine.high %v2413, %v2445
        %v2466 = vcombine.low %v2422, %v2454
        %v2467 = vcombine.high %v2422, %v2454
        %v2468 = vcombine.low %v2429, %v2461
        %v2469 = vcombine.high %v2429, %v2461
        %v2470 = vcombine.low %v456, %v464
        %v2471 = vcombine.high %v456, %v464
        %v2473 = vunpack.c.l.s4 1983009808
        %v2474 = vunpack.c.0.s8 %v2473
        %v2475 = vlaneseq
        %v2476 = vshrl.u32 %v2475, 7
        %v2477 = vsub.s32 %v2474, %v2476
        %v2478 = vrot.slane %v2470, %v2477
        %v2480 = vunpack.c.l.s4 1983009808
        %v2481 = vunpack.c.0.s8 %v2480
        %v2482 = vlaneseq
        %v2483 = vshrl.u32 %v2482, 7
        %v2484 = vsub.s32 %v2481, %v2483
        %v2485 = vrot.slane %v2471, %v2484
        %v2486 = vcombine.low %v460, %v468
        %v2487 = vcombine.high %v460, %v468
        %v2489 = vunpack.c.l.s4 1983009808
        %v2490 = vunpack.c.0.s8 %v2489
        %v2491 = vlaneseq
        %v2492 = vshrl.u32 %v2491, 7
        %v2493 = vsub.s32 %v2490, %v2492
        %v2494 = vrot.slane %v2486, %v2493
        %v2496 = vunpack.c.l.s4 1983009808
        %v2497 = vunpack.c.0.s8 %v2496
        %v2498 = vlaneseq
        %v2499 = vshrl.u32 %v2498, 7
        %v2500 = vsub.s32 %v2497, %v2499
        %v2501 = vrot.slane %v2487, %v2500
        %v2502 = vcombine.low %v472, %v480
        %v2503 = vcombine.high %v472, %v480
        %v2505 = vunpack.c.l.s4 1983009808
        %v2506 = vunpack.c.0.s8 %v2505
        %v2507 = vlaneseq
        %v2508 = vshrl.u32 %v2507, 7
        %v2509 = vsub.s32 %v2506, %v2508
        %v2510 = vrot.slane %v2502, %v2509
        %v2512 = vunpack.c.l.s4 1983009808
        %v2513 = vunpack.c.0.s8 %v2512
        %v2514 = vlaneseq
        %v2515 = vshrl.u32 %v2514, 7
        %v2516 = vsub.s32 %v2513, %v2515
        %v2517 = vrot.slane %v2503, %v2516
        %v2518 = vcombine.low %v476, %v484
        %v2519 = vcombine.high %v476, %v484
        %v2521 = vunpack.c.l.s4 1983009808
        %v2522 = vunpack.c.0.s8 %v2521
        %v2523 = vlaneseq
        %v2524 = vshrl.u32 %v2523, 7
        %v2525 = vsub.s32 %v2522, %v2524
        %v2526 = vrot.slane %v2518, %v2525
        %v2528 = vunpack.c.l.s4 1983009808
        %v2529 = vunpack.c.0.s8 %v2528
        %v2530 = vlaneseq
        %v2531 = vshrl.u32 %v2530, 7
        %v2532 = vsub.s32 %v2529, %v2531
        %v2533 = vrot.slane %v2519, %v2532
        %v2534 = vcombine.low %v2478, %v2494
        %v2535 = vcombine.high %v2478, %v2494
        %v2537 = vunpack.c.l.s4 1934713408
        %v2538 = vunpack.c.0.s8 %v2537
        %v2539 = vlaneseq
        %v2540 = vshrl.u32 %v2539, 7
        %v2541 = vsub.s32 %v2538, %v2540
        %v2542 = vrot.slane %v2534, %v2541
        %v2544 = vunpack.c.l.s4 1934713408
        %v2545 = vunpack.c.0.s8 %v2544
        %v2546 = vlaneseq
        %v2547 = vshrl.u32 %v2546, 7
        %v2548 = vsub.s32 %v2545, %v2547
        %v2549 = vrot.slane %v2535, %v2548
        %v2550 = vcombine.low %v2485, %v2501
        %v2551 = vcombine.high %v2485, %v2501
        %v2553 = vunpack.c.l.s4 1934713408
        %v2554 = vunpack.c.0.s8 %v2553
        %v2555 = vlaneseq
        %v2556 = vshrl.u32 %v2555, 7
        %v2557 = vsub.s32 %v2554, %v2556
        %v2558 = vrot.slane %v2550, %v2557
        %v2560 = vunpack.c.l.s4 1934713408
        %v2561 = vunpack.c.0.s8 %v2560
        %v2562 = vlaneseq
        %v2563 = vshrl.u32 %v2562, 7
        %v2564 = vsub.s32 %v2561, %v2563
        %v2565 = vrot.slane %v2551, %v2564
        %v2566 = vcombine.low %v2510, %v2526
        %v2567 = vcombine.high %v2510, %v2526
        %v2569 = vunpack.c.l.s4 1934713408
        %v2570 = vunpack.c.0.s8 %v2569
        %v2571 = vlaneseq
        %v2572 = vshrl.u32 %v2571, 7
        %v2573 = vsub.s32 %v2570, %v2572
        %v2574 = vrot.slane %v2566, %v2573
        %v2576 = vunpack.c.l.s4 1934713408
        %v2577 = vunpack.c.0.s8 %v2576
        %v2578 = vlaneseq
        %v2579 = vshrl.u32 %v2578, 7
        %v2580 = vsub.s32 %v2577, %v2579
        %v2581 = vrot.slane %v2567, %v2580
        %v2582 = vcombine.low %v2517, %v2533
        %v2583 = vcombine.high %v2517, %v2533
        %v2585 = vunpack.c.l.s4 1934713408
        %v2586 = vunpack.c.0.s8 %v2585
        %v2587 = vlaneseq
        %v2588 = vshrl.u32 %v2587, 7
        %v2589 = vsub.s32 %v2586, %v2588
        %v2590 = vrot.slane %v2582, %v2589
        %v2592 = vunpack.c.l.s4 1934713408
        %v2593 = vunpack.c.0.s8 %v2592
        %v2594 = vlaneseq
        %v2595 = vshrl.u32 %v2594, 7
        %v2596 = vsub.s32 %v2593, %v2595
        %v2597 = vrot.slane %v2583, %v2596
        %v2598 = vcombine.low %v2542, %v2574
        %v2599 = vcombine.high %v2542, %v2574
        %v2600 = vcombine.low %v2549, %v2581
        %v2601 = vcombine.high %v2549, %v2581
        %v2602 = vcombine.low %v2558, %v2590
        %v2603 = vcombine.high %v2558, %v2590
        %v2604 = vcombine.low %v2565, %v2597
        %v2605 = vcombine.high %v2565, %v2597
        %v2606 = vcombine.low %v504, %v512
        %v2607 = vcombine.high %v504, %v512
        %v2609 = vunpack.c.l.s4 1983009808
        %v2610 = vunpack.c.0.s8 %v2609
        %v2611 = vlaneseq
        %v2612 = vshrl.u32 %v2611, 7
        %v2613 = vsub.s32 %v2610, %v2612
        %v2614 = vrot.slane %v2606, %v2613
        %v2616 = vunpack.c.l.s4 1983009808
        %v2617 = vunpack.c.0.s8 %v2616
        %v2618 = vlaneseq
        %v2619 = vshrl.u32 %v2618, 7
        %v2620 = vsub.s32 %v2617, %v2619
        %v2621 = vrot.slane %v2607, %v2620
        %v2622 = vcombine.low %v508, %v516
        %v2623 = vcombine.high %v508, %v516
        %v2625 = vunpack.c.l.s4 1983009808
        %v2626 = vunpack.c.0.s8 %v2625
        %v2627 = vlaneseq
        %v2628 = vshrl.u32 %v2627, 7
        %v2629 = vsub.s32 %v2626, %v2628
        %v2630 = vrot.slane %v2622, %v2629
        %v2632 = vunpack.c.l.s4 1983009808
        %v2633 = vunpack.c.0.s8 %v2632
        %v2634 = vlaneseq
        %v2635 = vshrl.u32 %v2634, 7
        %v2636 = vsub.s32 %v2633, %v2635
        %v2637 = vrot.slane %v2623, %v2636
        %v2638 = vcombine.low %v520, %v528
        %v2639 = vcombine.high %v520, %v528
        %v2641 = vunpack.c.l.s4 1983009808
        %v2642 = vunpack.c.0.s8 %v2641
        %v2643 = vlaneseq
        %v2644 = vshrl.u32 %v2643, 7
        %v2645 = vsub.s32 %v2642, %v2644
        %v2646 = vrot.slane %v2638, %v2645
        %v2648 = vunpack.c.l.s4 1983009808
        %v2649 = vunpack.c.0.s8 %v2648
        %v2650 = vlaneseq
        %v2651 = vshrl.u32 %v2650, 7
        %v2652 = vsub.s32 %v2649, %v2651
        %v2653 = vrot.slane %v2639, %v2652
        %v2654 = vcombine.low %v524, %v532
        %v2655 = vcombine.high %v524, %v532
        %v2657 = vunpack.c.l.s4 1983009808
        %v2658 = vunpack.c.0.s8 %v2657
        %v2659 = vlaneseq
        %v2660 = vshrl.u32 %v2659, 7
        %v2661 = vsub.s32 %v2658, %v2660
        %v2662 = vrot.slane %v2654, %v2661
        %v2664 = vunpack.c.l.s4 1983009808
        %v2665 = vunpack.c.0.s8 %v2664
        %v2666 = vlaneseq
        %v2667 = vshrl.u32 %v2666, 7
        %v2668 = vsub.s32 %v2665, %v2667
        %v2669 = vrot.slane %v2655, %v2668
        %v2670 = vcombine.low %v2614, %v2630
        %v2671 = vcombine.high %v2614, %v2630
        %v2673 = vunpack.c.l.s4 1934713408
        %v2674 = vunpack.c.0.s8 %v2673
        %v2675 = vlaneseq
        %v2676 = vshrl.u32 %v2675, 7
        %v2677 = vsub.s32 %v2674, %v2676
        %v2678 = vrot.slane %v2670, %v2677
        %v2680 = vunpack.c.l.s4 1934713408
        %v2681 = vunpack.c.0.s8 %v2680
        %v2682 = vlaneseq
        %v2683 = vshrl.u32 %v2682, 7
        %v2684 = vsub.s32 %v2681, %v2683
        %v2685 = vrot.slane %v2671, %v2684
        %v2686 = vcombine.low %v2621, %v2637
        %v2687 = vcombine.high %v2621, %v2637
        %v2689 = vunpack.c.l.s4 1934713408
        %v2690 = vunpack.c.0.s8 %v2689
        %v2691 = vlaneseq
        %v2692 = vshrl.u32 %v2691, 7
        %v2693 = vsub.s32 %v2690, %v2692
        %v2694 = vrot.slane %v2686, %v2693
        %v2696 = vunpack.c.l.s4 1934713408
        %v2697 = vunpack.c.0.s8 %v2696
        %v2698 = vlaneseq
        %v2699 = vshrl.u32 %v2698, 7
        %v2700 = vsub.s32 %v2697, %v2699
        %v2701 = vrot.slane %v2687, %v2700
        %v2702 = vcombine.low %v2646, %v2662
        %v2703 = vcombine.high %v2646, %v2662
        %v2705 = vunpack.c.l.s4 1934713408
        %v2706 = vunpack.c.0.s8 %v2705
        %v2707 = vlaneseq
        %v2708 = vshrl.u32 %v2707, 7
        %v2709 = vsub.s32 %v2706, %v2708
        %v2710 = vrot.slane %v2702, %v2709
        %v2712 = vunpack.c.l.s4 1934713408
        %v2713 = vunpack.c.0.s8 %v2712
        %v2714 = vlaneseq
        %v2715 = vshrl.u32 %v2714, 7
        %v2716 = vsub.s32 %v2713, %v2715
        %v2717 = vrot.slane %v2703, %v2716
        %v2718 = vcombine.low %v2653, %v2669
        %v2719 = vcombine.high %v2653, %v2669
        %v2721 = vunpack.c.l.s4 1934713408
        %v2722 = vunpack.c.0.s8 %v2721
        %v2723 = vlaneseq
        %v2724 = vshrl.u32 %v2723, 7
        %v2725 = vsub.s32 %v2722, %v2724
        %v2726 = vrot.slane %v2718, %v2725
        %v2728 = vunpack.c.l.s4 1934713408
        %v2729 = vunpack.c.0.s8 %v2728
        %v2730 = vlaneseq
        %v2731 = vshrl.u32 %v2730, 7
        %v2732 = vsub.s32 %v2729, %v2731
        %v2733 = vrot.slane %v2719, %v2732
        %v2734 = vcombine.low %v2678, %v2710
        %v2735 = vcombine.high %v2678, %v2710
        %v2736 = vcombine.low %v2685, %v2717
        %v2737 = vcombine.high %v2685, %v2717
        %v2738 = vcombine.low %v2694, %v2726
        %v2739 = vcombine.high %v2694, %v2726
        %v2740 = vcombine.low %v2701, %v2733
        %v2741 = vcombine.high %v2701, %v2733
        %v2742 = vcombine.low %v554, %v564
        %v2743 = vcombine.high %v554, %v564
        %v2745 = vunpack.c.l.s4 1983009808
        %v2746 = vunpack.c.0.s8 %v2745
        %v2747 = vlaneseq
        %v2748 = vshrl.u32 %v2747, 7
        %v2749 = vsub.s32 %v2746, %v2748
        %v2750 = vrot.slane %v2742, %v2749
        %v2752 = vunpack.c.l.s4 1983009808
        %v2753 = vunpack.c.0.s8 %v2752
        %v2754 = vlaneseq
        %v2755 = vshrl.u32 %v2754, 7
        %v2756 = vsub.s32 %v2753, %v2755
        %v2757 = vrot.slane %v2743, %v2756
        %v2758 = vcombine.low %v559, %v569
        %v2759 = vcombine.high %v559, %v569
        %v2761 = vunpack.c.l.s4 1983009808
        %v2762 = vunpack.c.0.s8 %v2761
        %v2763 = vlaneseq
        %v2764 = vshrl.u32 %v2763, 7
        %v2765 = vsub.s32 %v2762, %v2764
        %v2766 = vrot.slane %v2758, %v2765
        %v2768 = vunpack.c.l.s4 1983009808
        %v2769 = vunpack.c.0.s8 %v2768
        %v2770 = vlaneseq
        %v2771 = vshrl.u32 %v2770, 7
        %v2772 = vsub.s32 %v2769, %v2771
        %v2773 = vrot.slane %v2759, %v2772
        %v2774 = vcombine.low %v574, %v584
        %v2775 = vcombine.high %v574, %v584
        %v2777 = vunpack.c.l.s4 1983009808
        %v2778 = vunpack.c.0.s8 %v2777
        %v2779 = vlaneseq
        %v2780 = vshrl.u32 %v2779, 7
        %v2781 = vsub.s32 %v2778, %v2780
        %v2782 = vrot.slane %v2774, %v2781
        %v2784 = vunpack.c.l.s4 1983009808
        %v2785 = vunpack.c.0.s8 %v2784
        %v2786 = vlaneseq
        %v2787 = vshrl.u32 %v2786, 7
        %v2788 = vsub.s32 %v2785, %v2787
        %v2789 = vrot.slane %v2775, %v2788
        %v2790 = vcombine.low %v579, %v589
        %v2791 = vcombine.high %v579, %v589
        %v2793 = vunpack.c.l.s4 1983009808
        %v2794 = vunpack.c.0.s8 %v2793
        %v2795 = vlaneseq
        %v2796 = vshrl.u32 %v2795, 7
        %v2797 = vsub.s32 %v2794, %v2796
        %v2798 = vrot.slane %v2790, %v2797
        %v2800 = vunpack.c.l.s4 1983009808
        %v2801 = vunpack.c.0.s8 %v2800
        %v2802 = vlaneseq
        %v2803 = vshrl.u32 %v2802, 7
        %v2804 = vsub.s32 %v2801, %v2803
        %v2805 = vrot.slane %v2791, %v2804
        %v2806 = vcombine.low %v2750, %v2766
        %v2807 = vcombine.high %v2750, %v2766
        %v2809 = vunpack.c.l.s4 1934713408
        %v2810 = vunpack.c.0.s8 %v2809
        %v2811 = vlaneseq
        %v2812 = vshrl.u32 %v2811, 7
        %v2813 = vsub.s32 %v2810, %v2812
        %v2814 = vrot.slane %v2806, %v2813
        %v2816 = vunpack.c.l.s4 1934713408
        %v2817 = vunpack.c.0.s8 %v2816
        %v2818 = vlaneseq
        %v2819 = vshrl.u32 %v2818, 7
        %v2820 = vsub.s32 %v2817, %v2819
        %v2821 = vrot.slane %v2807, %v2820
        %v2822 = vcombine.low %v2757, %v2773
        %v2823 = vcombine.high %v2757, %v2773
        %v2825 = vunpack.c.l.s4 1934713408
        %v2826 = vunpack.c.0.s8 %v2825
        %v2827 = vlaneseq
        %v2828 = vshrl.u32 %v2827, 7
        %v2829 = vsub.s32 %v2826, %v2828
        %v2830 = vrot.slane %v2822, %v2829
        %v2832 = vunpack.c.l.s4 1934713408
        %v2833 = vunpack.c.0.s8 %v2832
        %v2834 = vlaneseq
        %v2835 = vshrl.u32 %v2834, 7
        %v2836 = vsub.s32 %v2833, %v2835
        %v2837 = vrot.slane %v2823, %v2836
        %v2838 = vcombine.low %v2782, %v2798
        %v2839 = vcombine.high %v2782, %v2798
        %v2841 = vunpack.c.l.s4 1934713408
        %v2842 = vunpack.c.0.s8 %v2841
        %v2843 = vlaneseq
        %v2844 = vshrl.u32 %v2843, 7
        %v2845 = vsub.s32 %v2842, %v2844
        %v2846 = vrot.slane %v2838, %v2845
        %v2848 = vunpack.c.l.s4 1934713408
        %v2849 = vunpack.c.0.s8 %v2848
        %v2850 = vlaneseq
        %v2851 = vshrl.u32 %v2850, 7
        %v2852 = vsub.s32 %v2849, %v2851
        %v2853 = vrot.slane %v2839, %v2852
        %v2854 = vcombine.low %v2789, %v2805
        %v2855 = vcombine.high %v2789, %v2805
        %v2857 = vunpack.c.l.s4 1934713408
        %v2858 = vunpack.c.0.s8 %v2857
        %v2859 = vlaneseq
        %v2860 = vshrl.u32 %v2859, 7
        %v2861 = vsub.s32 %v2858, %v2860
        %v2862 = vrot.slane %v2854, %v2861
        %v2864 = vunpack.c.l.s4 1934713408
        %v2865 = vunpack.c.0.s8 %v2864
        %v2866 = vlaneseq
        %v2867 = vshrl.u32 %v2866, 7
        %v2868 = vsub.s32 %v2865, %v2867
        %v2869 = vrot.slane %v2855, %v2868
        %v2870 = vcombine.low %v2814, %v2846
        %v2871 = vcombine.high %v2814, %v2846
        %v2872 = vcombine.low %v2821, %v2853
        %v2873 = vcombine.high %v2821, %v2853
        %v2874 = vcombine.low %v2830, %v2862
        %v2875 = vcombine.high %v2830, %v2862
        %v2876 = vcombine.low %v2837, %v2869
        %v2877 = vcombine.high %v2837, %v2869
        %v2878 = vcombine.low %v609, %v617
        %v2879 = vcombine.high %v609, %v617
        %v2881 = vunpack.c.l.s4 1983009808
        %v2882 = vunpack.c.0.s8 %v2881
        %v2883 = vlaneseq
        %v2884 = vshrl.u32 %v2883, 7
        %v2885 = vsub.s32 %v2882, %v2884
        %v2886 = vrot.slane %v2878, %v2885
        %v2888 = vunpack.c.l.s4 1983009808
        %v2889 = vunpack.c.0.s8 %v2888
        %v2890 = vlaneseq
        %v2891 = vshrl.u32 %v2890, 7
        %v2892 = vsub.s32 %v2889, %v2891
        %v2893 = vrot.slane %v2879, %v2892
        %v2894 = vcombine.low %v613, %v621
        %v2895 = vcombine.high %v613, %v621
        %v2897 = vunpack.c.l.s4 1983009808
        %v2898 = vunpack.c.0.s8 %v2897
        %v2899 = vlaneseq
        %v2900 = vshrl.u32 %v2899, 7
        %v2901 = vsub.s32 %v2898, %v2900
        %v2902 = vrot.slane %v2894, %v2901
        %v2904 = vunpack.c.l.s4 1983009808
        %v2905 = vunpack.c.0.s8 %v2904
        %v2906 = vlaneseq
        %v2907 = vshrl.u32 %v2906, 7
        %v2908 = vsub.s32 %v2905, %v2907
        %v2909 = vrot.slane %v2895, %v2908
        %v2910 = vcombine.low %v625, %v633
        %v2911 = vcombine.high %v625, %v633
        %v2913 = vunpack.c.l.s4 1983009808
        %v2914 = vunpack.c.0.s8 %v2913
        %v2915 = vlaneseq
        %v2916 = vshrl.u32 %v2915, 7
        %v2917 = vsub.s32 %v2914, %v2916
        %v2918 = vrot.slane %v2910, %v2917
        %v2920 = vunpack.c.l.s4 1983009808
        %v2921 = vunpack.c.0.s8 %v2920
        %v2922 = vlaneseq
        %v2923 = vshrl.u32 %v2922, 7
        %v2924 = vsub.s32 %v2921, %v2923
        %v2925 = vrot.slane %v2911, %v2924
        %v2926 = vcombine.low %v629, %v637
        %v2927 = vcombine.high %v629, %v637
        %v2929 = vunpack.c.l.s4 1983009808
        %v2930 = vunpack.c.0.s8 %v2929
        %v2931 = vlaneseq
        %v2932 = vshrl.u32 %v2931, 7
        %v2933 = vsub.s32 %v2930, %v2932
        %v2934 = vrot.slane %v2926, %v2933
        %v2936 = vunpack.c.l.s4 1983009808
        %v2937 = vunpack.c.0.s8 %v2936
        %v2938 = vlaneseq
        %v2939 = vshrl.u32 %v2938, 7
        %v2940 = vsub.s32 %v2937, %v2939
        %v2941 = vrot.slane %v2927, %v2940
        %v2942 = vcombine.low %v2886, %v2902
        %v2943 = vcombine.high %v2886, %v2902
        %v2945 = vunpack.c.l.s4 1934713408
        %v2946 = vunpack.c.0.s8 %v2945
        %v2947 = vlaneseq
        %v2948 = vshrl.u32 %v2947, 7
        %v2949 = vsub.s32 %v2946, %v2948
        %v2950 = vrot.slane %v2942, %v2949
        %v2952 = vunpack.c.l.s4 1934713408
        %v2953 = vunpack.c.0.s8 %v2952
        %v2954 = vlaneseq
        %v2955 = vshrl.u32 %v2954, 7
        %v2956 = vsub.s32 %v2953, %v2955
        %v2957 = vrot.slane %v2943, %v2956
        %v2958 = vcombine.low %v2893, %v2909
        %v2959 = vcombine.high %v2893, %v2909
        %v2961 = vunpack.c.l.s4 1934713408
        %v2962 = vunpack.c.0.s8 %v2961
        %v2963 = vlaneseq
        %v2964 = vshrl.u32 %v2963, 7
        %v2965 = vsub.s32 %v2962, %v2964
        %v2966 = vrot.slane %v2958, %v2965
        %v2968 = vunpack.c.l.s4 1934713408
        %v2969 = vunpack.c.0.s8 %v2968
        %v2970 = vlaneseq
        %v2971 = vshrl.u32 %v2970, 7
        %v2972 = vsub.s32 %v2969, %v2971
        %v2973 = vrot.slane %v2959, %v2972
        %v2974 = vcombine.low %v2918, %v2934
        %v2975 = vcombine.high %v2918, %v2934
        %v2977 = vunpack.c.l.s4 1934713408
        %v2978 = vunpack.c.0.s8 %v2977
        %v2979 = vlaneseq
        %v2980 = vshrl.u32 %v2979, 7
        %v2981 = vsub.s32 %v2978, %v2980
        %v2982 = vrot.slane %v2974, %v2981
        %v2984 = vunpack.c.l.s4 1934713408
        %v2985 = vunpack.c.0.s8 %v2984
        %v2986 = vlaneseq
        %v2987 = vshrl.u32 %v2986, 7
        %v2988 = vsub.s32 %v2985, %v2987
        %v2989 = vrot.slane %v2975, %v2988
        %v2990 = vcombine.low %v2925, %v2941
        %v2991 = vcombine.high %v2925, %v2941
        %v2993 = vunpack.c.l.s4 1934713408
        %v2994 = vunpack.c.0.s8 %v2993
        %v2995 = vlaneseq
        %v2996 = vshrl.u32 %v2995, 7
        %v2997 = vsub.s32 %v2994, %v2996
        %v2998 = vrot.slane %v2990, %v2997
        %v3000 = vunpack.c.l.s4 1934713408
        %v3001 = vunpack.c.0.s8 %v3000
        %v3002 = vlaneseq
        %v3003 = vshrl.u32 %v3002, 7
        %v3004 = vsub.s32 %v3001, %v3003
        %v3005 = vrot.slane %v2991, %v3004
        %v3006 = vcombine.low %v2950, %v2982
        %v3007 = vcombine.high %v2950, %v2982
        %v3008 = vcombine.low %v2957, %v2989
        %v3009 = vcombine.high %v2957, %v2989
        %v3010 = vcombine.low %v2966, %v2998
        %v3011 = vcombine.high %v2966, %v2998
        %v3012 = vcombine.low %v2973, %v3005
        %v3013 = vcombine.high %v2973, %v3005
        %v3014 = vcombine.low %v657, %v665
        %v3015 = vcombine.high %v657, %v665
        %v3017 = vunpack.c.l.s4 1983009808
        %v3018 = vunpack.c.0.s8 %v3017
        %v3019 = vlaneseq
        %v3020 = vshrl.u32 %v3019, 7
        %v3021 = vsub.s32 %v3018, %v3020
        %v3022 = vrot.slane %v3014, %v3021
        %v3024 = vunpack.c.l.s4 1983009808
        %v3025 = vunpack.c.0.s8 %v3024
        %v3026 = vlaneseq
        %v3027 = vshrl.u32 %v3026, 7
        %v3028 = vsub.s32 %v3025, %v3027
        %v3029 = vrot.slane %v3015, %v3028
        %v3030 = vcombine.low %v661, %v669
        %v3031 = vcombine.high %v661, %v669
        %v3033 = vunpack.c.l.s4 1983009808
        %v3034 = vunpack.c.0.s8 %v3033
        %v3035 = vlaneseq
        %v3036 = vshrl.u32 %v3035, 7
        %v3037 = vsub.s32 %v3034, %v3036
        %v3038 = vrot.slane %v3030, %v3037
        %v3040 = vunpack.c.l.s4 1983009808
        %v3041 = vunpack.c.0.s8 %v3040
        %v3042 = vlaneseq
        %v3043 = vshrl.u32 %v3042, 7
        %v3044 = vsub.s32 %v3041, %v3043
        %v3045 = vrot.slane %v3031, %v3044
        %v3046 = vcombine.low %v673, %v681
        %v3047 = vcombine.high %v673, %v681
        %v3049 = vunpack.c.l.s4 1983009808
        %v3050 = vunpack.c.0.s8 %v3049
        %v3051 = vlaneseq
        %v3052 = vshrl.u32 %v3051, 7
        %v3053 = vsub.s32 %v3050, %v3052
        %v3054 = vrot.slane %v3046, %v3053
        %v3056 = vunpack.c.l.s4 1983009808
        %v3057 = vunpack.c.0.s8 %v3056
        %v3058 = vlaneseq
        %v3059 = vshrl.u32 %v3058, 7
        %v3060 = vsub.s32 %v3057, %v3059
        %v3061 = vrot.slane %v3047, %v3060
        %v3062 = vcombine.low %v677, %v685
        %v3063 = vcombine.high %v677, %v685
        %v3065 = vunpack.c.l.s4 1983009808
        %v3066 = vunpack.c.0.s8 %v3065
        %v3067 = vlaneseq
        %v3068 = vshrl.u32 %v3067, 7
        %v3069 = vsub.s32 %v3066, %v3068
        %v3070 = vrot.slane %v3062, %v3069
        %v3072 = vunpack.c.l.s4 1983009808
        %v3073 = vunpack.c.0.s8 %v3072
        %v3074 = vlaneseq
        %v3075 = vshrl.u32 %v3074, 7
        %v3076 = vsub.s32 %v3073, %v3075
        %v3077 = vrot.slane %v3063, %v3076
        %v3078 = vcombine.low %v3022, %v3038
        %v3079 = vcombine.high %v3022, %v3038
        %v3081 = vunpack.c.l.s4 1934713408
        %v3082 = vunpack.c.0.s8 %v3081
        %v3083 = vlaneseq
        %v3084 = vshrl.u32 %v3083, 7
        %v3085 = vsub.s32 %v3082, %v3084
        %v3086 = vrot.slane %v3078, %v3085
        %v3088 = vunpack.c.l.s4 1934713408
        %v3089 = vunpack.c.0.s8 %v3088
        %v3090 = vlaneseq
        %v3091 = vshrl.u32 %v3090, 7
        %v3092 = vsub.s32 %v3089, %v3091
        %v3093 = vrot.slane %v3079, %v3092
        %v3094 = vcombine.low %v3029, %v3045
        %v3095 = vcombine.high %v3029, %v3045
        %v3097 = vunpack.c.l.s4 1934713408
        %v3098 = vunpack.c.0.s8 %v3097
        %v3099 = vlaneseq
        %v3100 = vshrl.u32 %v3099, 7
        %v3101 = vsub.s32 %v3098, %v3100
        %v3102 = vrot.slane %v3094, %v3101
        %v3104 = vunpack.c.l.s4 1934713408
        %v3105 = vunpack.c.0.s8 %v3104
        %v3106 = vlaneseq
        %v3107 = vshrl.u32 %v3106, 7
        %v3108 = vsub.s32 %v3105, %v3107
        %v3109 = vrot.slane %v3095, %v3108
        %v3110 = vcombine.low %v3054, %v3070
        %v3111 = vcombine.high %v3054, %v3070
        %v3113 = vunpack.c.l.s4 1934713408
        %v3114 = vunpack.c.0.s8 %v3113
        %v3115 = vlaneseq
        %v3116 = vshrl.u32 %v3115, 7
        %v3117 = vsub.s32 %v3114, %v3116
        %v3118 = vrot.slane %v3110, %v3117
        %v3120 = vunpack.c.l.s4 1934713408
        %v3121 = vunpack.c.0.s8 %v3120
        %v3122 = vlaneseq
        %v3123 = vshrl.u32 %v3122, 7
        %v3124 = vsub.s32 %v3121, %v3123
        %v3125 = vrot.slane %v3111, %v3124
        %v3126 = vcombine.low %v3061, %v3077
        %v3127 = vcombine.high %v3061, %v3077
        %v3129 = vunpack.c.l.s4 1934713408
        %v3130 = vunpack.c.0.s8 %v3129
        %v3131 = vlaneseq
        %v3132 = vshrl.u32 %v3131, 7
        %v3133 = vsub.s32 %v3130, %v3132
        %v3134 = vrot.slane %v3126, %v3133
        %v3136 = vunpack.c.l.s4 1934713408
        %v3137 = vunpack.c.0.s8 %v3136
        %v3138 = vlaneseq
        %v3139 = vshrl.u32 %v3138, 7
        %v3140 = vsub.s32 %v3137, %v3139
        %v3141 = vrot.slane %v3127, %v3140
        %v3142 = vcombine.low %v3086, %v3118
        %v3143 = vcombine.high %v3086, %v3118
        %v3144 = vcombine.low %v3093, %v3125
        %v3145 = vcombine.high %v3093, %v3125
        %v3146 = vcombine.low %v3102, %v3134
        %v3147 = vcombine.high %v3102, %v3134
        %v3148 = vcombine.low %v3109, %v3141
        %v3149 = vcombine.high %v3109, %v3141
        %3159 = vrot.lane.b32.xlu0 %v831, 16
        %v3160 = vpop.permute.xlu0 %3159
        %3161 = vrot.lane.b32.xlu0 %v967, 16
        %v3162 = vpop.permute.xlu0 %3161
        %3163 = vrot.lane.b32.xlu0 %v1103, 16
        %v3164 = vpop.permute.xlu0 %3163
        %3165 = vrot.lane.b32.xlu0 %v1239, 16
        %v3166 = vpop.permute.xlu0 %3165
        %3167 = vrot.lane.b32.xlu0 %v1375, 16
        %v3168 = vpop.permute.xlu0 %3167
        %3169 = vrot.lane.b32.xlu0 %v1511, 16
        %v3170 = vpop.permute.xlu0 %3169
        %3171 = vrot.lane.b32.xlu0 %v1647, 16
        %v3172 = vpop.permute.xlu0 %3171
        %3173 = vrot.lane.b32.xlu0 %v1783, 16
        %v3174 = vpop.permute.xlu0 %3173
        %3175 = vrot.lane.b32.xlu0 %v1919, 16
        %v3176 = vpop.permute.xlu0 %3175
        %3195 = vrot.lane.b32.xlu0 %v832, 32
        %v3196 = vpop.permute.xlu0 %3195
        %3197 = vrot.lane.b32.xlu0 %v968, 32
        %v3198 = vpop.permute.xlu0 %3197
        %3199 = vrot.lane.b32.xlu0 %v1104, 32
        %v3200 = vpop.permute.xlu0 %3199
        %3201 = vrot.lane.b32.xlu0 %v1240, 32
        %v3202 = vpop.permute.xlu0 %3201
        %3203 = vrot.lane.b32.xlu0 %v1376, 32
        %v3204 = vpop.permute.xlu0 %3203
        %3205 = vrot.lane.b32.xlu0 %v1512, 32
        %v3206 = vpop.permute.xlu0 %3205
        %3207 = vrot.lane.b32.xlu0 %v1648, 32
        %v3208 = vpop.permute.xlu0 %3207
        %3209 = vrot.lane.b32.xlu0 %v1784, 32
        %v3210 = vpop.permute.xlu0 %3209
        %3211 = vrot.lane.b32.xlu0 %v1920, 32
        %v3212 = vpop.permute.xlu0 %3211
        %3231 = vrot.lane.b32.xlu0 %v833, 48
        %v3232 = vpop.permute.xlu0 %3231
        %3233 = vrot.lane.b32.xlu0 %v969, 48
        %v3234 = vpop.permute.xlu0 %3233
        %3235 = vrot.lane.b32.xlu0 %v1105, 48
        %v3236 = vpop.permute.xlu0 %3235
        %3237 = vrot.lane.b32.xlu0 %v1241, 48
        %v3238 = vpop.permute.xlu0 %3237
        %3239 = vrot.lane.b32.xlu0 %v1377, 48
        %v3240 = vpop.permute.xlu0 %3239
        %3241 = vrot.lane.b32.xlu0 %v1513, 48
        %v3242 = vpop.permute.xlu0 %3241
        %3243 = vrot.lane.b32.xlu0 %v1649, 48
        %v3244 = vpop.permute.xlu0 %3243
        %3245 = vrot.lane.b32.xlu0 %v1785, 48
        %v3246 = vpop.permute.xlu0 %3245
        %3247 = vrot.lane.b32.xlu0 %v1921, 48
        %v3248 = vpop.permute.xlu0 %3247
        %3267 = vrot.lane.b32.xlu0 %v834, 64
        %v3268 = vpop.permute.xlu0 %3267
        %3269 = vrot.lane.b32.xlu0 %v970, 64
        %v3270 = vpop.permute.xlu0 %3269
        %3271 = vrot.lane.b32.xlu0 %v1106, 64
        %v3272 = vpop.permute.xlu0 %3271
        %3273 = vrot.lane.b32.xlu0 %v1242, 64
        %v3274 = vpop.permute.xlu0 %3273
        %3275 = vrot.lane.b32.xlu0 %v1378, 64
        %v3276 = vpop.permute.xlu0 %3275
        %3277 = vrot.lane.b32.xlu0 %v1514, 64
        %v3278 = vpop.permute.xlu0 %3277
        %3279 = vrot.lane.b32.xlu0 %v1650, 64
        %v3280 = vpop.permute.xlu0 %3279
        %3281 = vrot.lane.b32.xlu0 %v1786, 64
        %v3282 = vpop.permute.xlu0 %3281
        %3283 = vrot.lane.b32.xlu0 %v1922, 64
        %v3284 = vpop.permute.xlu0 %3283
        %3303 = vrot.lane.b32.xlu0 %v835, 80
        %v3304 = vpop.permute.xlu0 %3303
        %3305 = vrot.lane.b32.xlu0 %v971, 80
        %v3306 = vpop.permute.xlu0 %3305
        %3307 = vrot.lane.b32.xlu0 %v1107, 80
        %v3308 = vpop.permute.xlu0 %3307
        %3309 = vrot.lane.b32.xlu0 %v1243, 80
        %v3310 = vpop.permute.xlu0 %3309
        %3311 = vrot.lane.b32.xlu0 %v1379, 80
        %v3312 = vpop.permute.xlu0 %3311
        %3313 = vrot.lane.b32.xlu0 %v1515, 80
        %v3314 = vpop.permute.xlu0 %3313
        %3315 = vrot.lane.b32.xlu0 %v1651, 80
        %v3316 = vpop.permute.xlu0 %3315
        %3317 = vrot.lane.b32.xlu0 %v1787, 80
        %v3318 = vpop.permute.xlu0 %3317
        %3319 = vrot.lane.b32.xlu0 %v1923, 80
        %v3320 = vpop.permute.xlu0 %3319
        %3339 = vrot.lane.b32.xlu0 %v836, 96
        %v3340 = vpop.permute.xlu0 %3339
        %3341 = vrot.lane.b32.xlu0 %v972, 96
        %v3342 = vpop.permute.xlu0 %3341
        %3343 = vrot.lane.b32.xlu0 %v1108, 96
        %v3344 = vpop.permute.xlu0 %3343
        %3345 = vrot.lane.b32.xlu0 %v1244, 96
        %v3346 = vpop.permute.xlu0 %3345
        %3347 = vrot.lane.b32.xlu0 %v1380, 96
        %v3348 = vpop.permute.xlu0 %3347
        %3349 = vrot.lane.b32.xlu0 %v1516, 96
        %v3350 = vpop.permute.xlu0 %3349
        %3351 = vrot.lane.b32.xlu0 %v1652, 96
        %v3352 = vpop.permute.xlu0 %3351
        %3353 = vrot.lane.b32.xlu0 %v1788, 96
        %v3354 = vpop.permute.xlu0 %3353
        %3355 = vrot.lane.b32.xlu0 %v1924, 96
        %v3356 = vpop.permute.xlu0 %3355
        %3375 = vrot.lane.b32.xlu0 %v837, 112
        %v3376 = vpop.permute.xlu0 %3375
        %3377 = vrot.lane.b32.xlu0 %v973, 112
        %v3378 = vpop.permute.xlu0 %3377
        %3379 = vrot.lane.b32.xlu0 %v1109, 112
        %v3380 = vpop.permute.xlu0 %3379
        %3381 = vrot.lane.b32.xlu0 %v1245, 112
        %v3382 = vpop.permute.xlu0 %3381
        %3383 = vrot.lane.b32.xlu0 %v1381, 112
        %v3384 = vpop.permute.xlu0 %3383
        %3385 = vrot.lane.b32.xlu0 %v1517, 112
        %v3386 = vpop.permute.xlu0 %3385
        %3387 = vrot.lane.b32.xlu0 %v1653, 112
        %v3388 = vpop.permute.xlu0 %3387
        %3389 = vrot.lane.b32.xlu0 %v1789, 112
        %v3390 = vpop.permute.xlu0 %3389
        %3391 = vrot.lane.b32.xlu0 %v1925, 112
        %v3392 = vpop.permute.xlu0 %3391
        %3411 = vrot.lane.b32.xlu0 %v2055, 16
        %v3412 = vpop.permute.xlu0 %3411
        %3413 = vrot.lane.b32.xlu0 %v2191, 16
        %v3414 = vpop.permute.xlu0 %3413
        %3415 = vrot.lane.b32.xlu0 %v2327, 16
        %v3416 = vpop.permute.xlu0 %3415
        %3417 = vrot.lane.b32.xlu0 %v2463, 16
        %v3418 = vpop.permute.xlu0 %3417
        %3419 = vrot.lane.b32.xlu0 %v2599, 16
        %v3420 = vpop.permute.xlu0 %3419
        %3421 = vrot.lane.b32.xlu0 %v2735, 16
        %v3422 = vpop.permute.xlu0 %3421
        %3423 = vrot.lane.b32.xlu0 %v2871, 16
        %v3424 = vpop.permute.xlu0 %3423
        %3425 = vrot.lane.b32.xlu0 %v3007, 16
        %v3426 = vpop.permute.xlu0 %3425
        %3427 = vrot.lane.b32.xlu0 %v3143, 16
        %v3428 = vpop.permute.xlu0 %3427
        %3447 = vrot.lane.b32.xlu0 %v2056, 32
        %v3448 = vpop.permute.xlu0 %3447
        %3449 = vrot.lane.b32.xlu0 %v2192, 32
        %v3450 = vpop.permute.xlu0 %3449
        %3451 = vrot.lane.b32.xlu0 %v2328, 32
        %v3452 = vpop.permute.xlu0 %3451
        %3453 = vrot.lane.b32.xlu0 %v2464, 32
        %v3454 = vpop.permute.xlu0 %3453
        %3455 = vrot.lane.b32.xlu0 %v2600, 32
        %v3456 = vpop.permute.xlu0 %3455
        %3457 = vrot.lane.b32.xlu0 %v2736, 32
        %v3458 = vpop.permute.xlu0 %3457
        %3459 = vrot.lane.b32.xlu0 %v2872, 32
        %v3460 = vpop.permute.xlu0 %3459
        %3461 = vrot.lane.b32.xlu0 %v3008, 32
        %v3462 = vpop.permute.xlu0 %3461
        %3463 = vrot.lane.b32.xlu0 %v3144, 32
        %v3464 = vpop.permute.xlu0 %3463
        %3483 = vrot.lane.b32.xlu0 %v2057, 48
        %v3484 = vpop.permute.xlu0 %3483
        %3485 = vrot.lane.b32.xlu0 %v2193, 48
        %v3486 = vpop.permute.xlu0 %3485
        %3487 = vrot.lane.b32.xlu0 %v2329, 48
        %v3488 = vpop.permute.xlu0 %3487
        %3489 = vrot.lane.b32.xlu0 %v2465, 48
        %v3490 = vpop.permute.xlu0 %3489
        %3491 = vrot.lane.b32.xlu0 %v2601, 48
        %v3492 = vpop.permute.xlu0 %3491
        %3493 = vrot.lane.b32.xlu0 %v2737, 48
        %v3494 = vpop.permute.xlu0 %3493
        %3495 = vrot.lane.b32.xlu0 %v2873, 48
        %v3496 = vpop.permute.xlu0 %3495
        %3497 = vrot.lane.b32.xlu0 %v3009, 48
        %v3498 = vpop.permute.xlu0 %3497
        %3499 = vrot.lane.b32.xlu0 %v3145, 48
        %v3500 = vpop.permute.xlu0 %3499
        %3519 = vrot.lane.b32.xlu0 %v2058, 64
        %v3520 = vpop.permute.xlu0 %3519
        %3521 = vrot.lane.b32.xlu0 %v2194, 64
        %v3522 = vpop.permute.xlu0 %3521
        %3523 = vrot.lane.b32.xlu0 %v2330, 64
        %v3524 = vpop.permute.xlu0 %3523
        %3525 = vrot.lane.b32.xlu0 %v2466, 64
        %v3526 = vpop.permute.xlu0 %3525
        %3527 = vrot.lane.b32.xlu0 %v2602, 64
        %v3528 = vpop.permute.xlu0 %3527
        %3529 = vrot.lane.b32.xlu0 %v2738, 64
        %v3530 = vpop.permute.xlu0 %3529
        %3531 = vrot.lane.b32.xlu0 %v2874, 64
        %v3532 = vpop.permute.xlu0 %3531
        %3533 = vrot.lane.b32.xlu0 %v3010, 64
        %v3534 = vpop.permute.xlu0 %3533
        %3535 = vrot.lane.b32.xlu0 %v3146, 64
        %v3536 = vpop.permute.xlu0 %3535
        %3555 = vrot.lane.b32.xlu0 %v2059, 80
        %v3556 = vpop.permute.xlu0 %3555
        %3557 = vrot.lane.b32.xlu0 %v2195, 80
        %v3558 = vpop.permute.xlu0 %3557
        %3559 = vrot.lane.b32.xlu0 %v2331, 80
        %v3560 = vpop.permute.xlu0 %3559
        %3561 = vrot.lane.b32.xlu0 %v2467, 80
        %v3562 = vpop.permute.xlu0 %3561
        %3563 = vrot.lane.b32.xlu0 %v2603, 80
        %v3564 = vpop.permute.xlu0 %3563
        %3565 = vrot.lane.b32.xlu0 %v2739, 80
        %v3566 = vpop.permute.xlu0 %3565
        %3567 = vrot.lane.b32.xlu0 %v2875, 80
        %v3568 = vpop.permute.xlu0 %3567
        %3569 = vrot.lane.b32.xlu0 %v3011, 80
        %v3570 = vpop.permute.xlu0 %3569
        %3571 = vrot.lane.b32.xlu0 %v3147, 80
        %v3572 = vpop.permute.xlu0 %3571
        %3591 = vrot.lane.b32.xlu0 %v2060, 96
        %v3592 = vpop.permute.xlu0 %3591
        %3593 = vrot.lane.b32.xlu0 %v2196, 96
        %v3594 = vpop.permute.xlu0 %3593
        %3595 = vrot.lane.b32.xlu0 %v2332, 96
        %v3596 = vpop.permute.xlu0 %3595
        %3597 = vrot.lane.b32.xlu0 %v2468, 96
        %v3598 = vpop.permute.xlu0 %3597
        %3599 = vrot.lane.b32.xlu0 %v2604, 96
        %v3600 = vpop.permute.xlu0 %3599
        %3601 = vrot.lane.b32.xlu0 %v2740, 96
        %v3602 = vpop.permute.xlu0 %3601
        %3603 = vrot.lane.b32.xlu0 %v2876, 96
        %v3604 = vpop.permute.xlu0 %3603
        %3605 = vrot.lane.b32.xlu0 %v3012, 96
        %v3606 = vpop.permute.xlu0 %3605
        %3607 = vrot.lane.b32.xlu0 %v3148, 96
        %v3608 = vpop.permute.xlu0 %3607
        %3627 = vrot.lane.b32.xlu0 %v2061, 112
        %v3628 = vpop.permute.xlu0 %3627
        %3629 = vrot.lane.b32.xlu0 %v2197, 112
        %v3630 = vpop.permute.xlu0 %3629
        %3631 = vrot.lane.b32.xlu0 %v2333, 112
        %v3632 = vpop.permute.xlu0 %3631
        %3633 = vrot.lane.b32.xlu0 %v2469, 112
        %v3634 = vpop.permute.xlu0 %3633
        %3635 = vrot.lane.b32.xlu0 %v2605, 112
        %v3636 = vpop.permute.xlu0 %3635
        %3637 = vrot.lane.b32.xlu0 %v2741, 112
        %v3638 = vpop.permute.xlu0 %3637
        %3639 = vrot.lane.b32.xlu0 %v2877, 112
        %v3640 = vpop.permute.xlu0 %3639
        %3641 = vrot.lane.b32.xlu0 %v3013, 112
        %v3642 = vpop.permute.xlu0 %3641
        %3643 = vrot.lane.b32.xlu0 %v3149, 112
        %v3644 = vpop.permute.xlu0 %3643
        %vm3654 = vcmask 130048
        %v3655 = vsel %vm3654, %v830, %v3160
        %v3656 = vsel %vm3654, %v966, %v3162
        %v3657 = vsel %vm3654, %v1102, %v3164
        %v3658 = vsel %vm3654, %v1238, %v3166
        %v3659 = vsel %vm3654, %v1374, %v3168
        %v3660 = vsel %vm3654, %v1510, %v3170
        %v3661 = vsel %vm3654, %v1646, %v3172
        %v3662 = vsel %vm3654, %v1782, %v3174
        %v3663 = vsel %vm3654, %v1918, %v3176
        %vm3664 = vcmask 261120
        %v3665 = vsel %vm3664, %v3655, %v3196
        %v3666 = vsel %vm3664, %v3656, %v3198
        %v3667 = vsel %vm3664, %v3657, %v3200
        %v3668 = vsel %vm3664, %v3658, %v3202
        %v3669 = vsel %vm3664, %v3659, %v3204
        %v3670 = vsel %vm3664, %v3660, %v3206
        %v3671 = vsel %vm3664, %v3661, %v3208
        %v3672 = vsel %vm3664, %v3662, %v3210
        %v3673 = vsel %vm3664, %v3663, %v3212
        %vm3674 = vcmask 392192
        %v3675 = vsel %vm3674, %v3665, %v3232
        %v3676 = vsel %vm3674, %v3666, %v3234
        %v3677 = vsel %vm3674, %v3667, %v3236
        %v3678 = vsel %vm3674, %v3668, %v3238
        %v3679 = vsel %vm3674, %v3669, %v3240
        %v3680 = vsel %vm3674, %v3670, %v3242
        %v3681 = vsel %vm3674, %v3671, %v3244
        %v3682 = vsel %vm3674, %v3672, %v3246
        %v3683 = vsel %vm3674, %v3673, %v3248
        %vm3684 = vcmask 523264
        %v3685 = vsel %vm3684, %v3675, %v3268
        %v3686 = vsel %vm3684, %v3676, %v3270
        %v3687 = vsel %vm3684, %v3677, %v3272
        %v3688 = vsel %vm3684, %v3678, %v3274
        %v3689 = vsel %vm3684, %v3679, %v3276
        %v3690 = vsel %vm3684, %v3680, %v3278
        %v3691 = vsel %vm3684, %v3681, %v3280
        %v3692 = vsel %vm3684, %v3682, %v3282
        %v3693 = vsel %vm3684, %v3683, %v3284
        %vm3694 = vcmask 654336
        %v3695 = vsel %vm3694, %v3685, %v3304
        %v3696 = vsel %vm3694, %v3686, %v3306
        %v3697 = vsel %vm3694, %v3687, %v3308
        %v3698 = vsel %vm3694, %v3688, %v3310
        %v3699 = vsel %vm3694, %v3689, %v3312
        %v3700 = vsel %vm3694, %v3690, %v3314
        %v3701 = vsel %vm3694, %v3691, %v3316
        %v3702 = vsel %vm3694, %v3692, %v3318
        %v3703 = vsel %vm3694, %v3693, %v3320
        %vm3704 = vcmask 785408
        %v3705 = vsel %vm3704, %v3695, %v3340
        %v3706 = vsel %vm3704, %v3696, %v3342
        %v3707 = vsel %vm3704, %v3697, %v3344
        %v3708 = vsel %vm3704, %v3698, %v3346
        %v3709 = vsel %vm3704, %v3699, %v3348
        %v3710 = vsel %vm3704, %v3700, %v3350
        %v3711 = vsel %vm3704, %v3701, %v3352
        %v3712 = vsel %vm3704, %v3702, %v3354
        %v3713 = vsel %vm3704, %v3703, %v3356
        %vm3714 = vcmask 916480
        %v3715 = vsel %vm3714, %v3705, %v3376
        %v3716 = vsel %vm3714, %v3706, %v3378
        %v3717 = vsel %vm3714, %v3707, %v3380
        %v3718 = vsel %vm3714, %v3708, %v3382
        %v3719 = vsel %vm3714, %v3709, %v3384
        %v3720 = vsel %vm3714, %v3710, %v3386
        %v3721 = vsel %vm3714, %v3711, %v3388
        %v3722 = vsel %vm3714, %v3712, %v3390
        %v3723 = vsel %vm3714, %v3713, %v3392
        %v3724 = vsel %vm3654, %v2054, %v3412
        %v3725 = vsel %vm3654, %v2190, %v3414
        %v3726 = vsel %vm3654, %v2326, %v3416
        %v3727 = vsel %vm3654, %v2462, %v3418
        %v3728 = vsel %vm3654, %v2598, %v3420
        %v3729 = vsel %vm3654, %v2734, %v3422
        %v3730 = vsel %vm3654, %v2870, %v3424
        %v3731 = vsel %vm3654, %v3006, %v3426
        %v3732 = vsel %vm3654, %v3142, %v3428
        %v3733 = vsel %vm3664, %v3724, %v3448
        %v3734 = vsel %vm3664, %v3725, %v3450
        %v3735 = vsel %vm3664, %v3726, %v3452
        %v3736 = vsel %vm3664, %v3727, %v3454
        %v3737 = vsel %vm3664, %v3728, %v3456
        %v3738 = vsel %vm3664, %v3729, %v3458
        %v3739 = vsel %vm3664, %v3730, %v3460
        %v3740 = vsel %vm3664, %v3731, %v3462
        %v3741 = vsel %vm3664, %v3732, %v3464
        %v3742 = vsel %vm3674, %v3733, %v3484
        %v3743 = vsel %vm3674, %v3734, %v3486
        %v3744 = vsel %vm3674, %v3735, %v3488
        %v3745 = vsel %vm3674, %v3736, %v3490
        %v3746 = vsel %vm3674, %v3737, %v3492
        %v3747 = vsel %vm3674, %v3738, %v3494
        %v3748 = vsel %vm3674, %v3739, %v3496
        %v3749 = vsel %vm3674, %v3740, %v3498
        %v3750 = vsel %vm3674, %v3741, %v3500
        %v3751 = vsel %vm3684, %v3742, %v3520
        %v3752 = vsel %vm3684, %v3743, %v3522
        %v3753 = vsel %vm3684, %v3744, %v3524
        %v3754 = vsel %vm3684, %v3745, %v3526
        %v3755 = vsel %vm3684, %v3746, %v3528
        %v3756 = vsel %vm3684, %v3747, %v3530
        %v3757 = vsel %vm3684, %v3748, %v3532
        %v3758 = vsel %vm3684, %v3749, %v3534
        %v3759 = vsel %vm3684, %v3750, %v3536
        %v3760 = vsel %vm3694, %v3751, %v3556
        %v3761 = vsel %vm3694, %v3752, %v3558
        %v3762 = vsel %vm3694, %v3753, %v3560
        %v3763 = vsel %vm3694, %v3754, %v3562
        %v3764 = vsel %vm3694, %v3755, %v3564
        %v3765 = vsel %vm3694, %v3756, %v3566
        %v3766 = vsel %vm3694, %v3757, %v3568
        %v3767 = vsel %vm3694, %v3758, %v3570
        %v3768 = vsel %vm3694, %v3759, %v3572
        %v3769 = vsel %vm3704, %v3760, %v3592
        %v3770 = vsel %vm3704, %v3761, %v3594
        %v3771 = vsel %vm3704, %v3762, %v3596
        %v3772 = vsel %vm3704, %v3763, %v3598
        %v3773 = vsel %vm3704, %v3764, %v3600
        %v3774 = vsel %vm3704, %v3765, %v3602
        %v3775 = vsel %vm3704, %v3766, %v3604
        %v3776 = vsel %vm3704, %v3767, %v3606
        %v3777 = vsel %vm3704, %v3768, %v3608
        %v3778 = vsel %vm3714, %v3769, %v3628
        %v3779 = vsel %vm3714, %v3770, %v3630
        %v3780 = vsel %vm3714, %v3771, %v3632
        %v3781 = vsel %vm3714, %v3772, %v3634
        %v3782 = vsel %vm3714, %v3773, %v3636
        %v3783 = vsel %vm3714, %v3774, %v3638
        %v3784 = vsel %vm3714, %v3775, %v3640
        %v3785 = vsel %vm3714, %v3776, %v3642
        %v3786 = vsel %vm3714, %v3777, %v3644
        %v3787 = vld [vmem:[%s1] sm:$0xff]
        %v3788 = vld [vmem:[%s1 + $0x8] sm:$0xff]
        %v3789 = vld [vmem:[%s2] sm:$0xff]
        %v3790 = vld [vmem:[%s2 + $0x8] sm:$0xff]
        %3792 = vset.pattern.permute.xlu0 0
        %3793 = vperm.xlu0 %3792, %v3789
        %v3794 = vpop.permute.xlu0 %3793
        %3797 = vset.pattern.permute.xlu0 0
        %3798 = vperm.xlu0 %3797, %v3790
        %v3799 = vpop.permute.xlu0 %3798
        %vm3801 = vcmask 588800
        %v3803 = vsel %vm3801, %v3787, 0
        %v3806 = vsel %vm3801, %v3788, 0
        %3808 = vmatprep.subr.mxu0 %v3778
        %3809 = vmatpush1.msra.mxu0 %v3715
        %3810 = vmatprep.subr.mxu0 %v3779
        %3811 = vmatpush1.msra.mxu0 %v3716
        %3812 = vmatprep.subr.mxu0 %v3780
        %3813 = vmatpush1.msra.mxu0 %v3717
        %3814 = vmatprep.subr.mxu0 %v3781
        %3815 = vmatpush1.msra.mxu0 %v3718
        %3816 = vmatprep.subr.mxu0 %v3782
        %3817 = vmatpush1.msra.mxu0 %v3719
        %3818 = vmatprep.subr.mxu0 %v3783
        %3819 = vmatpush1.msra.mxu0 %v3720
        %3820 = vmatprep.subr.mxu0 %v3784
        %3821 = vmatpush1.msra.mxu0 %v3721
        %3822 = vmatprep.subr.mxu0 %v3785
        %3823 = vmatpush1.msra.mxu0 %v3722
        %3824 = vmatprep.subr.mxu0 %v3786
        %3825 = vmatpush1.msra.mxu0 %v3723
        %3826 = vmatprep.subr.mxu0 0.0
        %3827 = vmatpush1.msra.mxu0 0.0
        %3828 = vmatprep.subr.mxu0 0.0
        %3829 = vmatpush1.msra.mxu0 0.0
        %3830 = vmatprep.subr.mxu0 0.0
        %3831 = vmatpush1.msra.mxu0 0.0
        %3832 = vmatprep.subr.mxu0 0.0
        %3833 = vmatpush1.msra.mxu0 0.0
        %3834 = vmatprep.subr.mxu0 0.0
        %3835 = vmatpush1.msra.mxu0 0.0
        %3836 = vmatprep.subr.mxu0 0.0
        %3837 = vmatpush1.msra.mxu0 0.0
        %3838 = vmatprep.subr.mxu0 0.0
        %3839 = vmatpush1.msra.mxu0 0.0
        %3840 = vmatprep.subr.mxu0 0.0
        %3841 = vmatpush1.msra.mxu0 0.0
        %3842 = vmatprep.subr.mxu0 0.0
        %3843 = vmatpush1.msra.mxu0 0.0
        %3844 = vmatprep.subr.mxu0 0.0
        %3845 = vmatpush1.msra.mxu0 0.0
        %3846 = vmatprep.subr.mxu0 0.0
        %3847 = vmatpush1.msra.mxu0 0.0
        %3848 = vmatprep.subr.mxu0 0.0
        %3849 = vmatpush1.msra.mxu0 0.0
        %3850 = vmatprep.subr.mxu0 0.0
        %3851 = vmatpush1.msra.mxu0 0.0
        %3852 = vmatprep.subr.mxu0 0.0
        %3853 = vmatpush1.msra.mxu0 0.0
        %3854 = vmatprep.subr.mxu0 0.0
        %3855 = vmatpush1.msra.mxu0 0.0
        %3856 = vmatprep.subr.mxu0 0.0
        %3857 = vmatpush1.msra.mxu0 0.0
        %3858 = vmatprep.subr.mxu0 0.0
        %3859 = vmatpush1.msra.mxu0 0.0
        %3860 = vmatprep.subr.mxu0 0.0
        %3861 = vmatpush1.msra.mxu0 0.0
        %3862 = vmatprep.subr.mxu0 0.0
        %3863 = vmatpush1.msra.mxu0 0.0
        %3864 = vmatprep.subr.mxu0 0.0
        %3865 = vmatpush1.msra.mxu0 0.0
        %3866 = vmatprep.subr.mxu0 0.0
        %3867 = vmatpush1.msra.mxu0 0.0
        %3868 = vmatprep.subr.mxu0 0.0
        %3869 = vmatpush1.msra.mxu0 0.0
        %3870 = vmatprep.subr.mxu0 0.0
        %3871 = vmatpush1.msra.mxu0 0.0
        %3872 = vmatprep.mubr.f32.mxu0 0.0
        %3873 = vmatmul.mubr.f32.gmra.mrb[0].mxu0 %v3803
        %v3874 = vpop.f32.mrb[0].mxu0
        %v3875 = vadd.f32 %v3794, %v3874
        %v3876 = vpop.f32.mrb[0].mxu0
        %v3877 = vadd.f32 %v3794, %v3876
        %3878 = vmatprep.mubr.f32.mxu0 0.0
        %3879 = vmatmul.mubr.f32.gmra.mrb[0].mxu0 %v3806
        %v3880 = vpop.f32.mrb[0].mxu0
        %v3881 = vadd.f32 %v3799, %v3880
        %v3882 = vpop.f32.mrb[0].mxu0
        %v3883 = vadd.f32 %v3799, %v3882
        %3884 = vdwg.mxu0
        %v3885 = vld [vmem:[%s3] sm:$0xff]
        %v3886 = vld [vmem:[%s3 + $0x8] sm:$0xff]
        %v3887 = vld [vmem:[%s4] sm:$0xff]
        %v3888 = vld [vmem:[%s4 + $0x8] sm:$0xff]
        %v3889 = vrot.slane %v3875, 4
        %v3890 = vadd.f32 %v3875, %v3889
        %v3891 = vrot.slane %v3890, 2
        %v3892 = vadd.f32 %v3890, %v3891
        %v3893 = vrot.slane %v3892, 1
        %v3894 = vadd.f32 %v3892, %v3893
        %v3895 = vrot.slane %v3877, 4
        %v3896 = vadd.f32 %v3877, %v3895
        %v3897 = vrot.slane %v3896, 2
        %v3898 = vadd.f32 %v3896, %v3897
        %v3899 = vrot.slane %v3898, 1
        %v3900 = vadd.f32 %v3898, %v3899
        %v3901 = vrcp.pop 8.0
        %v3902 = vmul.f32 %v3894, %v3901
        %v3903 = vmul.f32 %v3900, %v3901
        %v3904 = vsub.f32 %v3875, %v3902
        %v3905 = vsub.f32 %v3877, %v3903
        %v3906 = vmul.f32 %v3904, %v3904
        %v3907 = vmul.f32 %v3905, %v3905
        %v3908 = vrot.slane %v3906, 4
        %v3909 = vadd.f32 %v3906, %v3908
        %v3910 = vrot.slane %v3909, 2
        %v3911 = vadd.f32 %v3909, %v3910
        %v3912 = vrot.slane %v3911, 1
        %v3913 = vadd.f32 %v3911, %v3912
        %v3914 = vrot.slane %v3907, 4
        %v3915 = vadd.f32 %v3907, %v3914
        %v3916 = vrot.slane %v3915, 2
        %v3917 = vadd.f32 %v3915, %v3916
        %v3918 = vrot.slane %v3917, 1
        %v3919 = vadd.f32 %v3917, %v3918
        %v3920 = vmul.f32 %v3913, %v3901
        %v3921 = vmul.f32 %v3919, %v3901
        %v3922 = vadd.f32 %v3920, 1e-05
        %v3923 = vadd.f32 %v3921, 1e-05
        %v3924 = vrsqrt.pop %v3922
        %v3925 = vrsqrt.pop %v3923
        %v3926 = vmul.f32 %v3904, %v3924
        %v3927 = vmul.f32 %v3905, %v3925
        %3929 = vset.pattern.permute.xlu0 0
        %3930 = vperm.xlu0 %3929, %v3885
        %v3931 = vpop.permute.xlu0 %3930
        %v3933 = vmul.f32 %v3926, %v3931
        %v3934 = vmul.f32 %v3927, %v3931
        %3936 = vset.pattern.permute.xlu0 0
        %3937 = vperm.xlu0 %3936, %v3887
        %v3938 = vpop.permute.xlu0 %3937
        %v3940 = vadd.f32 %v3933, %v3938
        %v3941 = vadd.f32 %v3934, %v3938
        %v3942 = vtanh.pop %v3940
        %v3943 = vtanh.pop %v3941
        %v3944 = vrot.slane %v3881, 4
        %v3945 = vadd.f32 %v3881, %v3944
        %v3946 = vrot.slane %v3945, 2
        %v3947 = vadd.f32 %v3945, %v3946
        %v3948 = vrot.slane %v3947, 1
        %v3949 = vadd.f32 %v3947, %v3948
        %v3950 = vrot.slane %v3883, 4
        %v3951 = vadd.f32 %v3883, %v3950
        %v3952 = vrot.slane %v3951, 2
        %v3953 = vadd.f32 %v3951, %v3952
        %v3954 = vrot.slane %v3953, 1
        %v3955 = vadd.f32 %v3953, %v3954
        %v3956 = vmul.f32 %v3949, %v3901
        %v3957 = vmul.f32 %v3955, %v3901
        %v3958 = vsub.f32 %v3881, %v3956
        %v3959 = vsub.f32 %v3883, %v3957
        %v3960 = vmul.f32 %v3958, %v3958
        %v3961 = vmul.f32 %v3959, %v3959
        %v3962 = vrot.slane %v3960, 4
        %v3963 = vadd.f32 %v3960, %v3962
        %v3964 = vrot.slane %v3963, 2
        %v3965 = vadd.f32 %v3963, %v3964
        %v3966 = vrot.slane %v3965, 1
        %v3967 = vadd.f32 %v3965, %v3966
        %v3968 = vrot.slane %v3961, 4
        %v3969 = vadd.f32 %v3961, %v3968
        %v3970 = vrot.slane %v3969, 2
        %v3971 = vadd.f32 %v3969, %v3970
        %v3972 = vrot.slane %v3971, 1
        %v3973 = vadd.f32 %v3971, %v3972
        %v3974 = vmul.f32 %v3967, %v3901
        %v3975 = vmul.f32 %v3973, %v3901
        %v3976 = vadd.f32 %v3974, 1e-05
        %v3977 = vadd.f32 %v3975, 1e-05
        %v3978 = vrsqrt.pop %v3976
        %v3979 = vrsqrt.pop %v3977
        %v3980 = vmul.f32 %v3958, %v3978
        %v3981 = vmul.f32 %v3959, %v3979
        %3983 = vset.pattern.permute.xlu0 0
        %3984 = vperm.xlu0 %3983, %v3886
        %v3985 = vpop.permute.xlu0 %3984
        %v3987 = vmul.f32 %v3980, %v3985
        %v3988 = vmul.f32 %v3981, %v3985
        %3990 = vset.pattern.permute.xlu0 0
        %3991 = vperm.xlu0 %3990, %v3888
        %v3992 = vpop.permute.xlu0 %3991
        %v3994 = vadd.f32 %v3987, %v3992
        %v3995 = vadd.f32 %v3988, %v3992
        %v3996 = vxor.u32 %v3994, 2147483648
        %v3997 = vxor.u32 %v3995, 2147483648
        %v3998 = vmul.f32 %v3996, 1.442695
        %v3999 = vpow.pop %v3998
        %v4000 = vmul.f32 %v3997, 1.442695
        %v4001 = vpow.pop %v4000
        %v4002 = vadd.f32 %v3999, 1.0
        %v4003 = vadd.f32 %v4001, 1.0
        %v4004 = vrcp.pop %v4002
        %v4005 = vmul.f32 1.0, %v4004
        %v4006 = vrcp.pop %v4003
        %v4007 = vmul.f32 1.0, %v4006
        %v4008 = vmul.f32 %v4005, %v3719
        %v4009 = vmul.f32 %v4007, %v3782
        %v4010 = vsub.f32 1.0, %v4005
        %v4011 = vsub.f32 1.0, %v4007
        %v4012 = vmul.f32 %v4010, %v3942
        %v4013 = vmul.f32 %v4011, %v3943
        %v4014 = vadd.f32 %v4008, %v4012
        %v4015 = vadd.f32 %v4009, %v4013
        %4016 = vst [vmem:[%s241] sm:$0xff] %v4014
        %4017 = vst [vmem:[%s241 + $0x8] sm:$0xff] %v4015
        %s4018 = sand.u32 %s153, 1
        %s4019 = scalar_lea.sflag [#allocation3], %s4018
        %s4020 = sand.u32 %s153, 1
        %s4021 = smul.addr %s4020, 16
        %s4022 = scalar_lea.vmem [#allocation2], %s4021
        // Predicated region
        $region41: #{tpu_custom_call.1} parent=39 // pred_check
          %p4023 = pneg %p163
        $region42: #{tpu_custom_call.1} parent=39 // pred_check_branch
          %4025 = sbr.rel (%p4023) target = $region44
        $region43: #{tpu_custom_call.1} parent=39 // pred_region
          %s4026 = smul.u32 2, %s24
          %s4028 = ssub.s32 256, 256
          %4029 = vsyncadd %s4019, %s4028
          %s4030 = smul.addr %s23, 2
          %s4031 = sadd.s32 %s4026, %s4030
          %s4032 = smul.addr %s4031, 128
          %s4033 = scalar_lea.hbm %s5, %s4032
          %s4035 = sshll.u32 %s4022, 4
          %s4036 = int_to_ptr.vmem [resolvable:$true] %s4035
          %4038 = dma.vmem_to_hbm [thread:$0]  %s4036, 256, %s4033, %s4019
        $region44: #{tpu_custom_call.1} parent=39 // pred_fallthru
          _
      $region40: #{tpu_custom_call.1} parent=5 // pred_fallthru
        _
      %p4039 = scmp.le.s32.totalorder 2, %s14
      // Predicated region
      $region45: #{tpu_custom_call.1} parent=5 // pred_check
        %p4040 = pneg %p4039
      $region46: #{tpu_custom_call.1} parent=5 // pred_check_branch
        %4042 = sbr.rel (%p4040) target = $region48
      $region47: #{tpu_custom_call.1} parent=5 // pred_region
        %s4043 = ssub.s32 %s14, 2
        // Predicated region
        $region49: #{tpu_custom_call.1} parent=47 // pred_check
          %p4044 = pneg %p169
        $region50: #{tpu_custom_call.1} parent=47 // pred_check_branch
          %4046 = sbr.rel (%p4044) target = $region52
        $region51: #{tpu_custom_call.1} parent=47 // pred_region
          %s4047 = sand.u32 %s154, 1
          %s4048 = scalar_lea.sflag [#allocation3], %s4047
          %s4049 = sand.u32 %s154, 1
          %s4050 = smul.addr %s4049, 16
          %s4051 = scalar_lea.vmem [#allocation2], %s4050
          %4052 = dma.done %s4048, 256
        $region52: #{tpu_custom_call.1} parent=47 // pred_fallthru
          _
      $region48: #{tpu_custom_call.1} parent=5 // pred_fallthru
        _
    $region6: #{tpu_custom_call.1} parent=1 // loop_footer
      %s18 = sadd.s32 1, %s14
    $region7: #{tpu_custom_call.1} parent=1 // loop_footer_branch
      %13 = sbr.rel target = $region3
    $region8: #{tpu_custom_call.1} parent=1 // loop_exit
      _
    %4053 = vsyncpa [#allocation3], 1
    %s4054 = scalar_lea.sflag [#allocation3], 1
    %4055 = vsyncpa %s4054, 1

</llo_original>
